<compile_context>
chip_gen: v5e
topology: v5e:2x2
jax: 0.10.0
libtpu: 0.0.40
codegen_flags: <defaults>
</compile_context>

<pallas_src>
import functools

import jax
import jax.numpy as jnp
from jax.experimental import pallas as pl
from jax.experimental.pallas import tpu as pltpu


# --------------------------------------------------------------------------
# Kernels
# --------------------------------------------------------------------------
def _gated_mlp_single_kernel(x_ref, wg_ref, wu_ref, bg_ref, bu_ref,
                             wd_ref, bd_ref, o_ref):
    # ti == I (nj == 1): no reduction over the intermediate axis, write output
    # directly, no accumulator scratch needed.
    x = x_ref[...]
    gate = jnp.dot(x, wg_ref[...], preferred_element_type=jnp.float32) + bg_ref[...]
    up = jnp.dot(x, wu_ref[...], preferred_element_type=jnp.float32) + bu_ref[...]
    h = (gate * jax.nn.sigmoid(gate)) * up                  # SiluAndMul, f32
    out = jnp.dot(h.astype(wd_ref.dtype), wd_ref[...],
                  preferred_element_type=jnp.float32) + bd_ref[...]
    o_ref[...] = out.astype(o_ref.dtype)


def _gated_mlp_acc_kernel(x_ref, wg_ref, wu_ref, bg_ref, bu_ref,
                          wd_ref, bd_ref, o_ref, acc_ref):
    # x_ref:  (tm, H)  bf16 token tile
    # wg_ref: (H, ti)  bf16 gate weight slice      (view into (H, 2I) array)
    # wu_ref: (H, ti)  bf16 up weight slice        (view into (H, 2I) array)
    # bg_ref: (1, ti)  f32 gate bias slice
    # bu_ref: (1, ti)  f32 up bias slice
    # wd_ref: (ti, H)  bf16 down_proj weight slice
    # bd_ref: (1, H)   f32 down_proj bias
    # o_ref:  (tm, H)  output tile (written on last ti step)
    # acc_ref:(tm, H)  f32 accumulator scratch
    j = pl.program_id(1)

    @pl.when(j == 0)
    def _init():
        acc_ref[...] = jnp.zeros_like(acc_ref)

    x = x_ref[...]
    gate = jnp.dot(x, wg_ref[...], preferred_element_type=jnp.float32) + bg_ref[...]
    up = jnp.dot(x, wu_ref[...], preferred_element_type=jnp.float32) + bu_ref[...]
    h = (gate * jax.nn.sigmoid(gate)) * up                  # SiluAndMul, f32
    acc_ref[...] += jnp.dot(h.astype(wd_ref.dtype), wd_ref[...],
                            preferred_element_type=jnp.float32)

    @pl.when(j == pl.num_programs(1) - 1)
    def _finalize():
        o_ref[...] = (acc_ref[...] + bd_ref[...]).astype(o_ref.dtype)


# --------------------------------------------------------------------------
# Tile / VMEM selection (generation-aware)
# --------------------------------------------------------------------------
def _round_up(v, m):
    return ((v + m - 1) // m) * m


def _vmem_capacity_bytes():
    try:
        cap = getattr(pltpu.get_tpu_info(), "vmem_capacity_bytes", None)
        if cap:
            return int(cap)
    except Exception:
        pass
    return 64 << 20  # conservative fallback (v7x per-TensorCore size)


def _vmem_estimate(tm, ti, H):
    x_b = 2 * tm * H * 2              # double-buffered bf16 x tiles
    w_b = 2 * 3 * H * ti * 2          # wg + wu + wd slices, double-buffered, bf16
    b_b = 2 * (2 * ti + H) * 4        # bias slices, f32
    out_b = 2 * tm * H * 2            # double-buffered output tiles
    acc_b = tm * H * 4                # f32 accumulator scratch
    tmp_b = 3 * tm * ti * 4           # gate / up / h f32 temporaries
    return x_b + w_b + b_b + out_b + acc_b + tmp_b


def _vmem_limit_bytes(tm, ti, H, cap):
    headroom = max(8 << 20, cap // 8)          # leave compiler scratch room
    limit = int(_vmem_estimate(tm, ti, H) * 1.3) + (4 << 20)
    return max(1 << 20, min(limit, cap - headroom))


def _select_tiles(T, H, I, tm, ti):
    cap = _vmem_capacity_bytes()
    small_vmem = cap <= (80 << 20)             # v7x-like: 64 MiB per TensorCore
    num_cores = 2 if small_vmem else 1         # v7x: shard token axis over 2 TCs
    budget = cap - max(8 << 20, cap // 8)

    if tm is None:
        # Weight re-streaming makes arithmetic intensity ~ tm FLOPs/byte;
        # v6e needs ~640, v7x ~320 to be MXU-bound.
        tm = 512 if small_vmem else 1024
    # Don't exceed the token count; keep >= num_cores token tiles for megacore.
    tm = min(tm, max(16, _round_up(pl.cdiv(T, num_cores), 16)))
    tm = max(16, _round_up(tm, 16))
    assert tm % 16 == 0

    if ti is None:
        # Largest lane-aligned divisor of I that fits the VMEM budget.  ti == I
        # keeps weight block indices constant across token tiles (resident).
        candidates = [t for t in range(I, 127, -128) if I % t == 0]
        if not candidates:
            candidates = [I]
        ti = candidates[-1]                    # smallest as fallback
        for t in candidates:                   # descending: first fit wins
            if _vmem_estimate(tm, t, H) <= budget:
                ti = t
                break
    ti = min(ti, I)
    assert I % ti == 0 and ti % 128 == 0, "ti must be a lane-aligned divisor of I"
    return tm, ti


# --------------------------------------------------------------------------
# Wrapper
# --------------------------------------------------------------------------
@functools.partial(jax.jit, static_argnames=("tm", "ti"))
def _gated_mlp_call(x, w_gate_up, b_gate_up, w_down, b_down, *, tm, ti):
    T, H = x.shape
    two_I = w_gate_up.shape[1]
    I = two_I // 2
    nj = I // ti

    compute_dtype = jnp.bfloat16
    out_dtype = x.dtype

    # Pad the token axis to a multiple of tm (padded rows sliced off at the end).
    T_pad = pl.cdiv(T, tm) * tm
    x_p = x.astype(compute_dtype)
    if T_pad != T:
        x_p = jnp.pad(x_p, ((0, T_pad - T), (0, 0)))

    # Weights stay in their original layout (no per-call repack).
    wgu = w_gate_up.astype(compute_dtype)                 # (H, 2I)
    bgu = b_gate_up.reshape(1, two_I).astype(jnp.float32)  # (1, 2I)
    wd = w_down.astype(compute_dtype)                     # (I, H)
    bd = b_down.reshape(1, H).astype(jnp.float32)         # (1, H)

    grid = (T_pad // tm, nj)

    in_specs = [
        pl.BlockSpec((tm, H), lambda i, j: (i, 0)),         # x tile
        pl.BlockSpec((H, ti), lambda i, j: (0, j)),         # gate weight slice
        pl.BlockSpec((H, ti), lambda i, j: (0, nj + j)),    # up weight slice
        pl.BlockSpec((1, ti), lambda i, j: (0, j)),         # gate bias slice
        pl.BlockSpec((1, ti), lambda i, j: (0, nj + j)),    # up bias slice
        pl.BlockSpec((ti, H), lambda i, j: (j, 0)),         # down weight slice
        pl.BlockSpec((1, H), lambda i, j: (0, 0)),          # down bias
    ]
    out_spec = pl.BlockSpec((tm, H), lambda i, j: (i, 0))   # lane-dense output

    if nj == 1:
        kernel = _gated_mlp_single_kernel
        scratch = []
    else:
        kernel = _gated_mlp_acc_kernel
        scratch = [pltpu.VMEM((tm, H), jnp.float32)]

    cap = _vmem_capacity_bytes()
    out = pl.pallas_call(
        kernel,
        out_shape=jax.ShapeDtypeStruct((T_pad, H), out_dtype),
        grid_spec=pltpu.PrefetchScalarGridSpec(
            num_scalar_prefetch=0,
            grid=grid,
            in_specs=in_specs,
            out_specs=out_spec,
            scratch_shapes=scratch,
        ),
        compiler_params=pltpu.CompilerParams(
            dimension_semantics=("parallel", "arbitrary"),
            vmem_limit_bytes=_vmem_limit_bytes(tm, ti, H, cap),
        ),
    )(x_p, wgu, wgu, bgu, bgu, wd, bd)

    if T_pad != T:
        out = out[:T]
    return out


def gated_mlp(x, w_gate_up, b_gate_up, w_down, b_down, *, tm=None, ti=None):
    """Fused gated-MLP forward (silu-and-mul).

    x:          (T, H)
    w_gate_up:  (H, 2*I)   columns [0:I] = gate, [I:2I] = up
    b_gate_up:  (2*I,)
    w_down:     (I, H)
    b_down:     (H,)
    """
    T, H = x.shape
    two_I = w_gate_up.shape[1]
    assert two_I % 2 == 0
    I = two_I // 2
    assert w_down.shape == (I, H)
    assert b_gate_up.shape == (two_I,) and b_down.shape == (H,)
    assert H % 128 == 0 and I % 128 == 0, "hidden/intermediate must be lane-aligned"

    tm, ti = _select_tiles(T, H, I, tm, ti)
    return _gated_mlp_call(x, w_gate_up, b_gate_up, w_down, b_down, tm=tm, ti=ti)


# --------------------------------------------------------------------------
# Reference & test
# --------------------------------------------------------------------------
def _reference(x, w_gate_up, b_gate_up, w_down, b_down):
    x = x.astype(jnp.float32)
    gate_up = x @ w_gate_up.astype(jnp.float32) + b_gate_up.astype(jnp.float32)
    I = gate_up.shape[-1] // 2
    gate, up = gate_up[:, :I], gate_up[:, I:]
    h = jax.nn.silu(gate) * up
    return h @ w_down.astype(jnp.float32) + b_down.astype(jnp.float32)


if __name__ == "__main__":
    # Small shapes consistent with the module's forward (tokens x hidden).
    T = 256          # number of tokens (flattened batch*seq)
    H = 256          # hidden_size
    I = 512          # intermediate_size
    dtype = jnp.bfloat16

    key = jax.random.PRNGKey(0)
    kx, kgu, kbgu, kd, kbd = jax.random.split(key, 5)

    x = jax.random.normal(kx, (T, H)).astype(dtype)

    # gate_up_proj: MergedColumnParallelLinear(H, [I, I], bias=True)
    # PyTorch weight is [2I, H]; stored transposed as [H, 2I].
    w_gate_up = (0.02 * jax.random.normal(kgu, (H, 2 * I))).astype(dtype)
    b_gate_up = (0.02 * jax.random.normal(kbgu, (2 * I,))).astype(jnp.float32)

    # down_proj: RowParallelLinear(I, H, bias=True); stored as [I, H].
    w_down = (0.02 * jax.random.normal(kd, (I, H))).astype(dtype)
    b_down = (0.02 * jax.random.normal(kbd, (H,))).astype(jnp.float32)

    # Auto tile selection (generation-aware); explicit tm/ti also exercised.
    out = gated_mlp(x, w_gate_up, b_gate_up, w_down, b_down)
    out = jax.block_until_ready(out)

    out2 = gated_mlp(x, w_gate_up, b_gate_up, w_down, b_down, tm=128, ti=256)
    out2 = jax.block_until_ready(out2)

    ref = _reference(x, w_gate_up, b_gate_up, w_down, b_down)
    assert out.shape == (T, H) and out2.shape == (T, H)
    for o in (out, out2):
        err = jnp.max(jnp.abs(o.astype(jnp.float32) - ref))
        assert jnp.allclose(o.astype(jnp.float32), ref, atol=1e-2, rtol=1e-2), (
            f"mismatch vs reference, max abs err = {err}")

    print("KERNEL_OK")
</pallas_src>

<mosaic_0001>
module attributes {stable_mosaic.version = 11 : i64} {
  func.func @_gated_mlp_single_kernel(%arg0: i32, %arg1: i32, %arg2: memref<128x256xbf16, #tpu.memory_space<vmem>>, %arg3: memref<256x512xbf16, #tpu.memory_space<vmem>>, %arg4: memref<256x512xbf16, #tpu.memory_space<vmem>>, %arg5: memref<1x512xf32, #tpu.memory_space<vmem>>, %arg6: memref<1x512xf32, #tpu.memory_space<vmem>>, %arg7: memref<512x256xbf16, #tpu.memory_space<vmem>>, %arg8: memref<1x256xf32, #tpu.memory_space<vmem>>, %arg9: memref<128x256xbf16, #tpu.memory_space<vmem>>) attributes {dimension_semantics = [#tpu.dimension_semantics<parallel>, #tpu.dimension_semantics<arbitrary>], iteration_bounds = array<i64: 2, 1>, scalar_prefetch = 0 : i64, scratch_operands = 0 : i64, tpu.core_type = #tpu.core_type<tc>, window_params = [{transform_indices = @transform_0, window_bounds = array<i64: 128, 256>}, {transform_indices = @transform_1, window_bounds = array<i64: 256, 512>}, {transform_indices = @transform_2, window_bounds = array<i64: 256, 512>}, {transform_indices = @transform_3, window_bounds = array<i64: 1, 512>}, {transform_indices = @transform_4, window_bounds = array<i64: 1, 512>}, {transform_indices = @transform_5, window_bounds = array<i64: 512, 256>}, {pipeline_mode = #tpu.pipeline_mode<synchronous>, transform_indices = @transform_6, window_bounds = array<i64: 1, 256>}, {transform_indices = @transform_7, window_bounds = array<i64: 128, 256>}]} {
    %c0 = arith.constant 0 : index
    %c0_0 = arith.constant 0 : index
    %0 = vector.load %arg2[%c0, %c0_0] : memref<128x256xbf16, #tpu.memory_space<vmem>>, vector<128x256xbf16>
    %c0_1 = arith.constant 0 : index
    %c0_2 = arith.constant 0 : index
    %1 = vector.load %arg3[%c0_1, %c0_2] : memref<256x512xbf16, #tpu.memory_space<vmem>>, vector<256x512xbf16>
    %cst = arith.constant dense<0.000000e+00> : vector<128x512xf32>
    %2 = tpu.matmul %0, %1, %cst {dimension_numbers = #tpu.dot_dimension_numbers<[1], [0], [0], [1], [0, 0, 1, 1], [], []>} : vector<128x256xbf16>, vector<256x512xbf16>, vector<128x512xf32> -> vector<128x512xf32>
    %c0_3 = arith.constant 0 : index
    %c0_4 = arith.constant 0 : index
    %3 = vector.load %arg5[%c0_3, %c0_4] : memref<1x512xf32, #tpu.memory_space<vmem>>, vector<1x512xf32>
    %4 = vector.broadcast %3 : vector<1x512xf32> to vector<128x512xf32>
    %5 = arith.addf %2, %4 : vector<128x512xf32>
    %c0_5 = arith.constant 0 : index
    %c0_6 = arith.constant 0 : index
    %6 = vector.load %arg4[%c0_5, %c0_6] : memref<256x512xbf16, #tpu.memory_space<vmem>>, vector<256x512xbf16>
    %cst_7 = arith.constant dense<0.000000e+00> : vector<128x512xf32>
    %7 = tpu.matmul %0, %6, %cst_7 {dimension_numbers = #tpu.dot_dimension_numbers<[1], [0], [0], [1], [0, 0, 1, 1], [], []>} : vector<128x256xbf16>, vector<256x512xbf16>, vector<128x512xf32> -> vector<128x512xf32>
    %c0_8 = arith.constant 0 : index
    %c0_9 = arith.constant 0 : index
    %8 = vector.load %arg6[%c0_8, %c0_9] : memref<1x512xf32, #tpu.memory_space<vmem>>, vector<1x512xf32>
    %9 = vector.broadcast %8 : vector<1x512xf32> to vector<128x512xf32>
    %10 = arith.addf %7, %9 : vector<128x512xf32>
    %11 = arith.negf %5 : vector<128x512xf32>
    %12 = math.exp %11 : vector<128x512xf32>
    %cst_10 = arith.constant 1.000000e+00 : f32
    %13 = vector.broadcast %cst_10 : f32 to vector<128x512xf32>
    %14 = arith.addf %13, %12 : vector<128x512xf32>
    %15 = arith.divf %13, %14 : vector<128x512xf32>
    %16 = arith.mulf %5, %15 : vector<128x512xf32>
    %17 = arith.mulf %16, %10 : vector<128x512xf32>
    %18 = arith.truncf %17 : vector<128x512xf32> to vector<128x512xbf16>
    %c0_11 = arith.constant 0 : index
    %c0_12 = arith.constant 0 : index
    %19 = vector.load %arg7[%c0_11, %c0_12] : memref<512x256xbf16, #tpu.memory_space<vmem>>, vector<512x256xbf16>
    %cst_13 = arith.constant dense<0.000000e+00> : vector<128x256xf32>
    %20 = tpu.matmul %18, %19, %cst_13 {dimension_numbers = #tpu.dot_dimension_numbers<[1], [0], [0], [1], [0, 0, 1, 1], [], []>} : vector<128x512xbf16>, vector<512x256xbf16>, vector<128x256xf32> -> vector<128x256xf32>
    %c0_14 = arith.constant 0 : index
    %c0_15 = arith.constant 0 : index
    %21 = vector.load %arg8[%c0_14, %c0_15] : memref<1x256xf32, #tpu.memory_space<vmem>>, vector<1x256xf32>
    %22 = vector.broadcast %21 : vector<1x256xf32> to vector<128x256xf32>
    %23 = arith.addf %20, %22 : vector<128x256xf32>
    %24 = arith.truncf %23 : vector<128x256xf32> to vector<128x256xbf16>
    %c0_16 = arith.constant 0 : index
    %c0_17 = arith.constant 0 : index
    %25 = vector.load %arg9[%c0_16, %c0_17] : memref<128x256xbf16, #tpu.memory_space<vmem>>, vector<128x256xbf16>
    tpu.vector_store %arg9[%c0_16, %c0_17], %24 {strides = array<i32>} : memref<128x256xbf16, #tpu.memory_space<vmem>>, vector<128x256xbf16>,
    return
  }
  func.func @transform_0(%arg0: i32, %arg1: i32) -> (i32, i32) {
    %c0_i32 = arith.constant 0 : i32
    %c0_i32_0 = arith.constant 0 : i32
    return %arg0, %c0_i32 : i32, i32
  }
  func.func @transform_1(%arg0: i32, %arg1: i32) -> (i32, i32) {
    %c0_i32 = arith.constant 0 : i32
    %c0_i32_0 = arith.constant 0 : i32
    return %c0_i32, %arg1 : i32, i32
  }
  func.func @transform_2(%arg0: i32, %arg1: i32) -> (i32, i32) {
    %c1_i32 = arith.constant 1 : i32
    %0 = arith.addi %c1_i32, %arg1 : i32
    %c0_i32 = arith.constant 0 : i32
    %c0_i32_0 = arith.constant 0 : i32
    return %c0_i32, %0 : i32, i32
  }
  func.func @transform_3(%arg0: i32, %arg1: i32) -> (i32, i32) {
    %c0_i32 = arith.constant 0 : i32
    %c0_i32_0 = arith.constant 0 : i32
    return %c0_i32, %arg1 : i32, i32
  }
  func.func @transform_4(%arg0: i32, %arg1: i32) -> (i32, i32) {
    %c1_i32 = arith.constant 1 : i32
    %0 = arith.addi %c1_i32, %arg1 : i32
    %c0_i32 = arith.constant 0 : i32
    %c0_i32_0 = arith.constant 0 : i32
    return %c0_i32, %0 : i32, i32
  }
  func.func @transform_5(%arg0: i32, %arg1: i32) -> (i32, i32) {
    %c0_i32 = arith.constant 0 : i32
    %c0_i32_0 = arith.constant 0 : i32
    return %arg1, %c0_i32 : i32, i32
  }
  func.func @transform_6(%arg0: i32, %arg1: i32) -> (i32, i32) {
    %c0_i32 = arith.constant 0 : i32
    %c0_i32_0 = arith.constant 0 : i32
    %c0_i32_1 = arith.constant 0 : i32
    return %c0_i32, %c0_i32_0 : i32, i32
  }
  func.func @transform_7(%arg0: i32, %arg1: i32) -> (i32, i32) {
    %c0_i32 = arith.constant 0 : i32
    %c0_i32_0 = arith.constant 0 : i32
    return %arg0, %c0_i32 : i32, i32
  }
}

</mosaic_0001>

<llo_original>
// kernel: _gated_mlp_call.1
$region0: #{_gated_mlp_call.1}
  #allocation0 [shape = 'u32[]', space=smem, size = 0x4, offset = 0x4, fixed_abs, tag = 'smem constant byte address 0x4 - core index']
  #allocation1 [shape = 'u32[72,128]{1,0:T(1,128)}', space=vmem, size = 0x9000, scoped, tag = 'internal scratch']
  %s0 = inlined_call_operand.hbm [shape: bf16[256,256], index: 0, kind: input, shape index: {}]
  %s1 = inlined_call_operand.hbm [shape: bf16[256,1024], index: 1, kind: input, shape index: {}, may-alias: {1,2}]
  %s2 = inlined_call_operand.hbm [shape: bf16[256,1024], index: 2, kind: input, shape index: {}, may-alias: {1,2}]
  %s3 = inlined_call_operand.hbm [shape: f32[1,1024], index: 3, kind: input, shape index: {}, may-alias: {3,4}]
  %s4 = inlined_call_operand.hbm [shape: f32[1,1024], index: 4, kind: input, shape index: {}, may-alias: {3,4}]
  %s5 = inlined_call_operand.hbm [shape: bf16[512,256], index: 5, kind: input, shape index: {}]
  %s6 = inlined_call_operand.vmem [shape: f32[1,256], index: 6, kind: input, shape index: {}]
  %s7 = inlined_call_operand.hbm [shape: bf16[256,256], index: 7, kind: output, shape index: {}]
  %s8 = sld [smem:[#allocation0]]
  $region85: #{_gated_mlp_call.1} parent=0
    _
  %s10 = ssub.s32 1, %s8
  %s11 = scalar_select 0, %s10, %s8
  $region1: #{_gated_mlp_call.1} parent=0
    #allocation2 [shape = 'u8[131072]{0}', space=vmem, size = 0x20000, scoped, tag = 'input window, operand 0']
    #allocation3 [shape = 's32[2]{0}', space=sflag, size = 0x8, scoped, tag = 'scoped memory for _gated_mlp_call.1']
    #allocation4 [shape = 's32[2]{0}', space=sflag, size = 0x8, scoped, tag = 'scoped memory for _gated_mlp_call.1']
    #allocation5 [shape = 'u8[262144]{0}', space=vmem, size = 0x40000, scoped, tag = 'input window, operand 1, single buffered']
    #allocation6 [shape = 's32[1]{0}', space=sflag, size = 0x4, scoped, tag = 'scoped memory for _gated_mlp_call.1']
    #allocation7 [shape = 'u8[262144]{0}', space=vmem, size = 0x40000, scoped, tag = 'input window, operand 2, single buffered']
    #allocation8 [shape = 'u8[2048]{0}', space=vmem, size = 0x800, scoped, tag = 'input window, operand 3, single buffered']
    #allocation9 [shape = 's32[1]{0}', space=sflag, size = 0x4, scoped, tag = 'scoped memory for _gated_mlp_call.1']
    #allocation10 [shape = 'u8[2048]{0}', space=vmem, size = 0x800, scoped, tag = 'input window, operand 4, single buffered']
    #allocation11 [shape = 'u8[262144]{0}', space=vmem, size = 0x40000, scoped, tag = 'input window, operand 5, single buffered']
    #allocation12 [shape = 's32[1]{0}', space=sflag, size = 0x4, scoped, tag = 'scoped memory for _gated_mlp_call.1']
    #allocation13 [shape = 'u8[131072]{0}', space=vmem, size = 0x20000, scoped, tag = 'output window, operand 0']
    %12 = vsyncpa [#allocation3], 0
    %s13 = scalar_lea.sflag [#allocation3], 1
    %14 = vsyncpa %s13, 0
    %15 = vsyncpa [#allocation6], 0
    %16 = vsyncpa [#allocation9], 0
    %17 = vsyncpa [#allocation12], 0
    %18 = vsyncpa [#allocation4], 0
    %s19 = scalar_lea.sflag [#allocation4], 1
    %20 = vsyncpa %s19, 0
    loop: start=0, step=1, limit=4
    $region2: #{_gated_mlp_call.1} parent=1 // loop_pre_header
      _
    $region3: #{_gated_mlp_call.1} parent=1 // loop_header
      %s22 = sphi 0, %s26
      %p23 = scmp.ge.s32.totalorder %s22, 4
      %s29 = sphi 0, %s41
      %s30 = sphi 0, %s37
      %s31 = sphi 0, %s29
      %s32 = sphi 0, %s30
      %s33 = sphi 0, %s31
      %s34 = sphi 0, %s32
      %s44 = sphi 0, %s46
      %s47 = sphi 0, %s44
      %s48 = sphi 0, %s47
      %s64 = sphi 0, %s48
      %s70 = sphi 0, %s72
      %s73 = sphi 0, %s70
      %s74 = sphi 0, %s73
      %s90 = sphi 0, %s74
      %s98 = sphi 0, %s100
      %s101 = sphi 0, %s98
      %s102 = sphi 0, %s101
      %s118 = sphi 0, %s102
      %s124 = sphi 0, %s126
      %s127 = sphi 0, %s124
      %s128 = sphi 0, %s127
      %s144 = sphi 0, %s128
      %s152 = sphi 0, %s154
      %s155 = sphi 0, %s152
      %s156 = sphi 0, %s155
      %s172 = sphi 0, %s156
      %s178 = sphi 0, %s180
      %s181 = sphi 0, %s178
      %s182 = sphi 0, %s181
      %s198 = sphi 0, %s182
      %s202 = sphi 0, %s202
      %s204 = sphi 0, %s202
      %s205 = sphi 0, %s204
      %s219 = sphi 0, %s205
      %s225 = sphi 0, %s227
      %s228 = sphi 0, %s225
      %s229 = sphi 0, %s228
      %s245 = sphi 0, %s229
    $region4: #{_gated_mlp_call.1} parent=1 // loop_header_branch
      %25 = sbr.rel (%p23) target = $region8
    $region5: #{_gated_mlp_call.1} parent=1 // loop_body
      %s27 = ssub.s32 %s22, 1
      %s28 = ssub.s32 %s22, 2
      %s35 = sadd.s32 1, %s30
      %p36 = scmp.ge.s32.totalorder %s35, 1
      %s37 = scalar_select %p36, 0, %s35
      %s38 = sadd.s32 1, %s29
      %s39 = scalar_select %p36, %s38, %s29
      %p40 = scmp.ge.s32.totalorder %s39, 2
      %s41 = scalar_select %p40, 0, %s39
      %s42 = ssub.s32 %s29, %s41
      %p43 = scmp.eq.s32.totalorder %s42, 0
      %s45 = sadd.s32 %s44, 1
      %s46 = scalar_select %p43, %s44, %s45
      %p49 = pneg %p43
      %p50 = scmp.eq.s32.totalorder %s22, 1
      %p51 = por %p49, %p50
      %p52 = scmp.ne.s32.totalorder %s44, %s47
      %p53 = scmp.eq.s32.totalorder %s22, 0
      %p54 = por %p52, %p53
      %p55 = scmp.ne.s32.totalorder %s44, %s47
      %p56 = scmp.eq.s32.totalorder %s27, 1
      %p57 = por %p55, %p56
      %p58 = scmp.ne.s32.totalorder %s47, %s48
      %p59 = scmp.eq.s32.totalorder %s27, 0
      %p60 = por %p58, %p59
      %p61 = scmp.ne.s32.totalorder %s47, %s48
      %p62 = scmp.eq.s32.totalorder %s28, 1
      %p63 = por %p61, %p62
      %p65 = scmp.ne.s32.totalorder %s48, %s64
      %p66 = scmp.eq.s32.totalorder %s28, 0
      %p67 = por %p65, %p66
      %s68 = ssub.s32 %s30, %s37
      %p69 = scmp.eq.s32.totalorder %s68, 0
      %s71 = sadd.s32 %s70, 1
      %s72 = scalar_select %p69, %s70, %s71
      %p75 = pneg %p69
      %p76 = scmp.eq.s32.totalorder %s22, 1
      %p77 = por %p75, %p76
      %p78 = scmp.ne.s32.totalorder %s70, %s73
      %p79 = scmp.eq.s32.totalorder %s22, 0
      %p80 = por %p78, %p79
      %p81 = scmp.ne.s32.totalorder %s70, %s73
      %p82 = scmp.eq.s32.totalorder %s27, 1
      %p83 = por %p81, %p82
      %p84 = scmp.ne.s32.totalorder %s73, %s74
      %p85 = scmp.eq.s32.totalorder %s27, 0
      %p86 = por %p84, %p85
      %p87 = scmp.ne.s32.totalorder %s73, %s74
      %p88 = scmp.eq.s32.totalorder %s28, 1
      %p89 = por %p87, %p88
      %p91 = scmp.ne.s32.totalorder %s74, %s90
      %p92 = scmp.eq.s32.totalorder %s28, 0
      %p93 = por %p91, %p92
      %s94 = sadd.s32 %s30, 1
      %s95 = sadd.s32 %s37, 1
      %s96 = ssub.s32 %s94, %s95
      %p97 = scmp.eq.s32.totalorder %s96, 0
      %s99 = sadd.s32 %s98, 1
      %s100 = scalar_select %p97, %s98, %s99
      %p103 = pneg %p97
      %p104 = scmp.eq.s32.totalorder %s22, 1
      %p105 = por %p103, %p104
      %p106 = scmp.ne.s32.totalorder %s98, %s101
      %p107 = scmp.eq.s32.totalorder %s22, 0
      %p108 = por %p106, %p107
      %p109 = scmp.ne.s32.totalorder %s98, %s101
      %p110 = scmp.eq.s32.totalorder %s27, 1
      %p111 = por %p109, %p110
      %p112 = scmp.ne.s32.totalorder %s101, %s102
      %p113 = scmp.eq.s32.totalorder %s27, 0
      %p114 = por %p112, %p113
      %p115 = scmp.ne.s32.totalorder %s101, %s102
      %p116 = scmp.eq.s32.totalorder %s28, 1
      %p117 = por %p115, %p116
      %p119 = scmp.ne.s32.totalorder %s102, %s118
      %p120 = scmp.eq.s32.totalorder %s28, 0
      %p121 = por %p119, %p120
      %s122 = ssub.s32 %s30, %s37
      %p123 = scmp.eq.s32.totalorder %s122, 0
      %s125 = sadd.s32 %s124, 1
      %s126 = scalar_select %p123, %s124, %s125
      %p129 = pneg %p123
      %p130 = scmp.eq.s32.totalorder %s22, 1
      %p131 = por %p129, %p130
      %p132 = scmp.ne.s32.totalorder %s124, %s127
      %p133 = scmp.eq.s32.totalorder %s22, 0
      %p134 = por %p132, %p133
      %p135 = scmp.ne.s32.totalorder %s124, %s127
      %p136 = scmp.eq.s32.totalorder %s27, 1
      %p137 = por %p135, %p136
      %p138 = scmp.ne.s32.totalorder %s127, %s128
      %p139 = scmp.eq.s32.totalorder %s27, 0
      %p140 = por %p138, %p139
      %p141 = scmp.ne.s32.totalorder %s127, %s128
      %p142 = scmp.eq.s32.totalorder %s28, 1
      %p143 = por %p141, %p142
      %p145 = scmp.ne.s32.totalorder %s128, %s144
      %p146 = scmp.eq.s32.totalorder %s28, 0
      %p147 = por %p145, %p146
      %s148 = sadd.s32 %s30, 1
      %s149 = sadd.s32 %s37, 1
      %s150 = ssub.s32 %s148, %s149
      %p151 = scmp.eq.s32.totalorder %s150, 0
      %s153 = sadd.s32 %s152, 1
      %s154 = scalar_select %p151, %s152, %s153
      %p157 = pneg %p151
      %p158 = scmp.eq.s32.totalorder %s22, 1
      %p159 = por %p157, %p158
      %p160 = scmp.ne.s32.totalorder %s152, %s155
      %p161 = scmp.eq.s32.totalorder %s22, 0
      %p162 = por %p160, %p161
      %p163 = scmp.ne.s32.totalorder %s152, %s155
      %p164 = scmp.eq.s32.totalorder %s27, 1
      %p165 = por %p163, %p164
      %p166 = scmp.ne.s32.totalorder %s155, %s156
      %p167 = scmp.eq.s32.totalorder %s27, 0
      %p168 = por %p166, %p167
      %p169 = scmp.ne.s32.totalorder %s155, %s156
      %p170 = scmp.eq.s32.totalorder %s28, 1
      %p171 = por %p169, %p170
      %p173 = scmp.ne.s32.totalorder %s156, %s172
      %p174 = scmp.eq.s32.totalorder %s28, 0
      %p175 = por %p173, %p174
      %s176 = ssub.s32 %s30, %s37
      %p177 = scmp.eq.s32.totalorder %s176, 0
      %s179 = sadd.s32 %s178, 1
      %s180 = scalar_select %p177, %s178, %s179
      %p183 = pneg %p177
      %p184 = scmp.eq.s32.totalorder %s22, 1
      %p185 = por %p183, %p184
      %p186 = scmp.ne.s32.totalorder %s178, %s181
      %p187 = scmp.eq.s32.totalorder %s22, 0
      %p188 = por %p186, %p187
      %p189 = scmp.ne.s32.totalorder %s178, %s181
      %p190 = scmp.eq.s32.totalorder %s27, 1
      %p191 = por %p189, %p190
      %p192 = scmp.ne.s32.totalorder %s181, %s182
      %p193 = scmp.eq.s32.totalorder %s27, 0
      %p194 = por %p192, %p193
      %p195 = scmp.ne.s32.totalorder %s181, %s182
      %p196 = scmp.eq.s32.totalorder %s28, 1
      %p197 = por %p195, %p196
      %p199 = scmp.ne.s32.totalorder %s182, %s198
      %p200 = scmp.eq.s32.totalorder %s28, 0
      %p201 = por %p199, %p200
      %s203 = sadd.s32 %s202, 1
      %p206 = scmp.eq.s32.totalorder %s22, 1
      %p207 = scmp.ne.s32.totalorder %s202, %s204
      %p208 = scmp.eq.s32.totalorder %s22, 0
      %p209 = por %p207, %p208
      %p210 = scmp.ne.s32.totalorder %s202, %s204
      %p211 = scmp.eq.s32.totalorder %s27, 1
      %p212 = por %p210, %p211
      %p213 = scmp.ne.s32.totalorder %s204, %s205
      %p214 = scmp.eq.s32.totalorder %s27, 0
      %p215 = por %p213, %p214
      %p216 = scmp.ne.s32.totalorder %s204, %s205
      %p217 = scmp.eq.s32.totalorder %s28, 1
      %p218 = por %p216, %p217
      %p220 = scmp.ne.s32.totalorder %s205, %s219
      %p221 = scmp.eq.s32.totalorder %s28, 0
      %p222 = por %p220, %p221
      %s223 = ssub.s32 %s29, %s41
      %p224 = scmp.eq.s32.totalorder %s223, 0
      %s226 = sadd.s32 %s225, 1
      %s227 = scalar_select %p224, %s225, %s226
      %p230 = pneg %p224
      %p231 = scmp.eq.s32.totalorder %s22, 1
      %p232 = por %p230, %p231
      %p233 = scmp.ne.s32.totalorder %s225, %s228
      %p234 = scmp.eq.s32.totalorder %s22, 0
      %p235 = por %p233, %p234
      %p236 = scmp.ne.s32.totalorder %s225, %s228
      %p237 = scmp.eq.s32.totalorder %s27, 1
      %p238 = por %p236, %p237
      %p239 = scmp.ne.s32.totalorder %s228, %s229
      %p240 = scmp.eq.s32.totalorder %s27, 0
      %p241 = por %p239, %p240
      %p242 = scmp.ne.s32.totalorder %s228, %s229
      %p243 = scmp.eq.s32.totalorder %s28, 1
      %p244 = por %p242, %p243
      %p246 = scmp.ne.s32.totalorder %s229, %s245
      %p247 = scmp.eq.s32.totalorder %s28, 0
      %p248 = por %p246, %p247
      %p249 = scmp.le.s32.totalorder 1, %s22
      %p250 = scmp.lt.s32.totalorder %s22, 3
      %p251 = pnand %p249, %p250
      %p252 = pneg %p251
      // Predicated region
      $region9: #{_gated_mlp_call.1} parent=5 // pred_check
        _
      $region10: #{_gated_mlp_call.1} parent=5 // pred_check_branch
        %254 = sbr.rel (%p251) target = $region12
      $region11: #{_gated_mlp_call.1} parent=5 // pred_region
        %s255 = ssub.s32 %s22, 1
        // Predicated region
        $region13: #{_gated_mlp_call.1} parent=11 // pred_check
          %p256 = pneg %p86
        $region14: #{_gated_mlp_call.1} parent=11 // pred_check_branch
          %258 = sbr.rel (%p256) target = $region16
        $region15: #{_gated_mlp_call.1} parent=11 // pred_region
          %s259 = smul.u32 4, %s32
          %261 = vsyncadd [#allocation6], 0
          %s262 = smul.addr %s259, 4
          %s263 = scalar_lea.hbm %s1, %s262
          %s264 = sshll.u32 %s263, 4
          %s265 = int_to_ptr.hbm [resolvable:$true] %s264
          %s266 = sshll.u32 [#allocation5], 4
          %s267 = int_to_ptr.vmem [resolvable:$true] %s266
          %272 = dma.hbm_to_vmem [thread:$0]  %s265, 8192, %s267, [#allocation6], 512, 256, 16
        $region16: #{_gated_mlp_call.1} parent=11 // pred_fallthru
          _
        // Predicated region
        $region17: #{_gated_mlp_call.1} parent=11 // pred_check
          %p273 = pneg %p114
        $region18: #{_gated_mlp_call.1} parent=11 // pred_check_branch
          %275 = sbr.rel (%p273) target = $region20
        $region19: #{_gated_mlp_call.1} parent=11 // pred_region
          %s276 = sadd.s32 %s32, 1
          %s277 = smul.u32 4, %s276
          %279 = vsyncadd [#allocation6], 0
          %s280 = smul.addr %s277, 4
          %s281 = scalar_lea.hbm %s2, %s280
          %s282 = sshll.u32 %s281, 4
          %s283 = int_to_ptr.hbm [resolvable:$true] %s282
          %s284 = sshll.u32 [#allocation7], 4
          %s285 = int_to_ptr.vmem [resolvable:$true] %s284
          %290 = dma.hbm_to_vmem [thread:$0]  %s283, 8192, %s285, [#allocation6], 512, 256, 16
        $region20: #{_gated_mlp_call.1} parent=11 // pred_fallthru
          _
        // Predicated region
        $region21: #{_gated_mlp_call.1} parent=11 // pred_check
          %p291 = pneg %p140
        $region22: #{_gated_mlp_call.1} parent=11 // pred_check_branch
          %293 = sbr.rel (%p291) target = $region24
        $region23: #{_gated_mlp_call.1} parent=11 // pred_region
          %s294 = smul.u32 4, %s32
          %296 = vsyncadd [#allocation9], 0
          %s297 = scalar_lea.hbm %s3, %s294
          %s299 = sshll.u32 %s297, 4
          %s300 = int_to_ptr.hbm [resolvable:$true] %s299
          %s301 = sshll.u32 [#allocation8], 4
          %s302 = int_to_ptr.vmem [resolvable:$true] %s301
          %304 = dma.hbm_to_vmem [thread:$0]  %s300, 64, %s302, [#allocation9]
        $region24: #{_gated_mlp_call.1} parent=11 // pred_fallthru
          _
        // Predicated region
        $region25: #{_gated_mlp_call.1} parent=11 // pred_check
          %p305 = pneg %p168
        $region26: #{_gated_mlp_call.1} parent=11 // pred_check_branch
          %307 = sbr.rel (%p305) target = $region28
        $region27: #{_gated_mlp_call.1} parent=11 // pred_region
          %s308 = sadd.s32 %s32, 1
          %s309 = smul.u32 4, %s308
          %311 = vsyncadd [#allocation9], 0
          %s312 = scalar_lea.hbm %s4, %s309
          %s314 = sshll.u32 %s312, 4
          %s315 = int_to_ptr.hbm [resolvable:$true] %s314
          %s316 = sshll.u32 [#allocation10], 4
          %s317 = int_to_ptr.vmem [resolvable:$true] %s316
          %319 = dma.hbm_to_vmem [thread:$0]  %s315, 64, %s317, [#allocation9]
        $region28: #{_gated_mlp_call.1} parent=11 // pred_fallthru
          _
        // Predicated region
        $region29: #{_gated_mlp_call.1} parent=11 // pred_check
          %p320 = pneg %p194
        $region30: #{_gated_mlp_call.1} parent=11 // pred_check_branch
          %322 = sbr.rel (%p320) target = $region32
        $region31: #{_gated_mlp_call.1} parent=11 // pred_region
          %s323 = smul.u32 64, %s32
          %325 = vsyncadd [#allocation12], 0
          %s326 = smul.addr %s323, 2
          %s327 = smul.addr %s326, 4
          %s328 = scalar_lea.hbm %s5, %s327
          %s329 = sshll.u32 %s328, 4
          %s330 = int_to_ptr.hbm [resolvable:$true] %s329
          %s331 = sshll.u32 [#allocation11], 4
          %s332 = int_to_ptr.vmem [resolvable:$true] %s331
          %337 = dma.hbm_to_vmem [thread:$0]  %s330, 8192, %s332, [#allocation12], 128, 128, 8
        $region32: #{_gated_mlp_call.1} parent=11 // pred_fallthru
          _
        // Predicated region
        $region33: #{_gated_mlp_call.1} parent=11 // pred_check
          %p338 = pneg %p215
        $region34: #{_gated_mlp_call.1} parent=11 // pred_check_branch
          %340 = sbr.rel (%p338) target = $region36
        $region35: #{_gated_mlp_call.1} parent=11 // pred_region
          _
        $region36: #{_gated_mlp_call.1} parent=11 // pred_fallthru
          _
      $region12: #{_gated_mlp_call.1} parent=5 // pred_fallthru
        _
      %p341 = scmp.lt.s32.totalorder %s22, 2
      // Predicated region
      $region37: #{_gated_mlp_call.1} parent=5 // pred_check
        %p342 = pneg %p341
      $region38: #{_gated_mlp_call.1} parent=5 // pred_check_branch
        %344 = sbr.rel (%p342) target = $region40
      $region39: #{_gated_mlp_call.1} parent=5 // pred_region
        // Predicated region
        $region41: #{_gated_mlp_call.1} parent=39 // pred_check
          %p345 = pneg %p54
        $region42: #{_gated_mlp_call.1} parent=39 // pred_check_branch
          %347 = sbr.rel (%p345) target = $region44
        $region43: #{_gated_mlp_call.1} parent=39 // pred_region
          %s348 = sand.u32 %s44, 1
          %s349 = scalar_lea.sflag [#allocation3], %s348
          %s350 = sand.u32 %s44, 1
          %s351 = smul.addr %s350, 128
          %s352 = scalar_lea.vmem [#allocation2], %s351
          %s353 = smul.u32 16, %s29
          %355 = vsyncadd %s349, 0
          %s356 = smul.addr %s353, 2
          %s357 = smul.addr %s356, 4
          %s358 = scalar_lea.hbm %s0, %s357
          %s359 = sshll.u32 %s358, 4
          %s360 = int_to_ptr.hbm [resolvable:$true] %s359
          %s361 = sshll.u32 %s352, 4
          %s362 = int_to_ptr.vmem [resolvable:$true] %s361
          %367 = dma.hbm_to_vmem [thread:$0]  %s360, 2048, %s362, %s349, 128, 128, 8
        $region44: #{_gated_mlp_call.1} parent=39 // pred_fallthru
          _
      $region40: #{_gated_mlp_call.1} parent=5 // pred_fallthru
        _
      %p368 = scmp.le.s32.totalorder 1, %s22
      %p369 = scmp.lt.s32.totalorder %s22, 3
      %p370 = pnand %p368, %p369
      %p371 = pneg %p370
      // Predicated region
      $region45: #{_gated_mlp_call.1} parent=5 // pred_check
        _
      $region46: #{_gated_mlp_call.1} parent=5 // pred_check_branch
        %373 = sbr.rel (%p370) target = $region48
      $region47: #{_gated_mlp_call.1} parent=5 // pred_region
        %s374 = ssub.s32 %s22, 1
        %s375 = sand.u32 %s47, 1
        %s376 = scalar_lea.sflag [#allocation3], %s375
        %s377 = sand.u32 %s47, 1
        %s378 = smul.addr %s377, 128
        %s379 = scalar_lea.vmem [#allocation2], %s378
        // Predicated region
        $region49: #{_gated_mlp_call.1} parent=47 // pred_check
          %p380 = pneg %p60
        $region50: #{_gated_mlp_call.1} parent=47 // pred_check_branch
          %382 = sbr.rel (%p380) target = $region52
        $region51: #{_gated_mlp_call.1} parent=47 // pred_region
          %384 = dma.done %s376, 2048
        $region52: #{_gated_mlp_call.1} parent=47 // pred_fallthru
          _
        // Predicated region
        $region53: #{_gated_mlp_call.1} parent=47 // pred_check
          %p385 = pneg %p86
        $region54: #{_gated_mlp_call.1} parent=47 // pred_check_branch
          %387 = sbr.rel (%p385) target = $region56
        $region55: #{_gated_mlp_call.1} parent=47 // pred_region
          %389 = dma.done [#allocation6], 8192
        $region56: #{_gated_mlp_call.1} parent=47 // pred_fallthru
          _
        // Predicated region
        $region57: #{_gated_mlp_call.1} parent=47 // pred_check
          %p390 = pneg %p114
        $region58: #{_gated_mlp_call.1} parent=47 // pred_check_branch
          %392 = sbr.rel (%p390) target = $region60
        $region59: #{_gated_mlp_call.1} parent=47 // pred_region
          %394 = dma.done [#allocation6], 8192
        $region60: #{_gated_mlp_call.1} parent=47 // pred_fallthru
          _
        // Predicated region
        $region61: #{_gated_mlp_call.1} parent=47 // pred_check
          %p395 = pneg %p140
        $region62: #{_gated_mlp_call.1} parent=47 // pred_check_branch
          %397 = sbr.rel (%p395) target = $region64
        $region63: #{_gated_mlp_call.1} parent=47 // pred_region
          %399 = dma.done [#allocation9], 64
        $region64: #{_gated_mlp_call.1} parent=47 // pred_fallthru
          _
        // Predicated region
        $region65: #{_gated_mlp_call.1} parent=47 // pred_check
          %p400 = pneg %p168
        $region66: #{_gated_mlp_call.1} parent=47 // pred_check_branch
          %402 = sbr.rel (%p400) target = $region68
        $region67: #{_gated_mlp_call.1} parent=47 // pred_region
          %404 = dma.done [#allocation9], 64
        $region68: #{_gated_mlp_call.1} parent=47 // pred_fallthru
          _
        // Predicated region
        $region69: #{_gated_mlp_call.1} parent=47 // pred_check
          %p405 = pneg %p194
        $region70: #{_gated_mlp_call.1} parent=47 // pred_check_branch
          %407 = sbr.rel (%p405) target = $region72
        $region71: #{_gated_mlp_call.1} parent=47 // pred_region
          %409 = dma.done [#allocation12], 8192
        $region72: #{_gated_mlp_call.1} parent=47 // pred_fallthru
          _
        %s410 = sand.u32 %s47, 1
        %s411 = scalar_lea.sflag [#allocation3], %s410
        %s412 = sand.u32 %s47, 1
        %s413 = smul.addr %s412, 128
        %s414 = scalar_lea.vmem [#allocation2], %s413
        %p415 = pneg %p60
        %p416 = pneg %p57
        %p417 = pneg %p86
        %p418 = pneg %p83
        %p419 = pneg %p114
        %p420 = pneg %p111
        %p421 = pneg %p140
        %p422 = pneg %p137
        %p423 = pneg %p168
        %p424 = pneg %p165
        %p425 = pneg %p194
        %p426 = pneg %p191
        %p427 = pneg %p215
        %p428 = pneg %p212
        %p429 = pneg %p241
        %p430 = pneg %p238
        %s431 = sand.u32 %s228, 1
        %s432 = scalar_lea.sflag [#allocation4], %s431
        %s433 = sand.u32 %s228, 1
        %s434 = smul.addr %s433, 128
        %s435 = scalar_lea.vmem [#allocation13], %s434
        %s436 = smul.u32 16, %s31
        %s437 = smul.u32 4, %s32
        %s438 = sadd.s32 %s32, 1
        %s439 = smul.u32 4, %s438
        %s440 = smul.u32 4, %s32
        %s441 = sadd.s32 %s32, 1
        %s442 = smul.u32 4, %s441
        %s443 = smul.u32 64, %s32
        %s444 = smul.u32 16, %s31
        %v445 = vld [vmem:[%s379] sm:$0xff]
        %v446 = vld [vmem:[%s379 + $0x8] sm:$0xff]
        %v447 = vld [vmem:[%s379 + $0x10] sm:$0xff]
        %v448 = vld [vmem:[%s379 + $0x18] sm:$0xff]
        %v449 = vld [vmem:[%s379 + $0x20] sm:$0xff]
        %v450 = vld [vmem:[%s379 + $0x28] sm:$0xff]
        %v451 = vld [vmem:[%s379 + $0x30] sm:$0xff]
        %v452 = vld [vmem:[%s379 + $0x38] sm:$0xff]
        %v453 = vld [vmem:[%s379 + $0x40] sm:$0xff]
        %v454 = vld [vmem:[%s379 + $0x48] sm:$0xff]
        %v455 = vld [vmem:[%s379 + $0x50] sm:$0xff]
        %v456 = vld [vmem:[%s379 + $0x58] sm:$0xff]
        %v457 = vld [vmem:[%s379 + $0x60] sm:$0xff]
        %v458 = vld [vmem:[%s379 + $0x68] sm:$0xff]
        %v459 = vld [vmem:[%s379 + $0x70] sm:$0xff]
        %v460 = vld [vmem:[%s379 + $0x78] sm:$0xff]
        %v461 = vld [vmem:[#allocation5] sm:$0xff]
        %v462 = vld [vmem:[#allocation5 + $0x8] sm:$0xff]
        %v463 = vld [vmem:[#allocation5 + $0x10] sm:$0xff]
        %v464 = vld [vmem:[#allocation5 + $0x18] sm:$0xff]
        %v465 = vld [vmem:[#allocation5 + $0x20] sm:$0xff]
        %v466 = vld [vmem:[#allocation5 + $0x28] sm:$0xff]
        %v467 = vld [vmem:[#allocation5 + $0x30] sm:$0xff]
        %v468 = vld [vmem:[#allocation5 + $0x38] sm:$0xff]
        %v469 = vld [vmem:[#allocation5 + $0x40] sm:$0xff]
        %v470 = vld [vmem:[#allocation5 + $0x48] sm:$0xff]
        %v471 = vld [vmem:[#allocation5 + $0x50] sm:$0xff]
        %v472 = vld [vmem:[#allocation5 + $0x58] sm:$0xff]
        %v473 = vld [vmem:[#allocation5 + $0x60] sm:$0xff]
        %v474 = vld [vmem:[#allocation5 + $0x68] sm:$0xff]
        %v475 = vld [vmem:[#allocation5 + $0x70] sm:$0xff]
        %v476 = vld [vmem:[#allocation5 + $0x78] sm:$0xff]
        %v477 = vld [vmem:[#allocation5 + $0x80] sm:$0xff]
        %v478 = vld [vmem:[#allocation5 + $0x88] sm:$0xff]
        %v479 = vld [vmem:[#allocation5 + $0x90] sm:$0xff]
        %v480 = vld [vmem:[#allocation5 + $0x98] sm:$0xff]
        %v481 = vld [vmem:[#allocation5 + $0xa0] sm:$0xff]
        %v482 = vld [vmem:[#allocation5 + $0xa8] sm:$0xff]
        %v483 = vld [vmem:[#allocation5 + $0xb0] sm:$0xff]
        %v484 = vld [vmem:[#allocation5 + $0xb8] sm:$0xff]
        %v485 = vld [vmem:[#allocation5 + $0xc0] sm:$0xff]
        %v486 = vld [vmem:[#allocation5 + $0xc8] sm:$0xff]
        %v487 = vld [vmem:[#allocation5 + $0xd0] sm:$0xff]
        %v488 = vld [vmem:[#allocation5 + $0xd8] sm:$0xff]
        %v489 = vld [vmem:[#allocation5 + $0xe0] sm:$0xff]
        %v490 = vld [vmem:[#allocation5 + $0xe8] sm:$0xff]
        %v491 = vld [vmem:[#allocation5 + $0xf0] sm:$0xff]
        %v492 = vld [vmem:[#allocation5 + $0xf8] sm:$0xff]
        %v493 = vld [vmem:[#allocation5 + $0x100] sm:$0xff]
        %v494 = vld [vmem:[#allocation5 + $0x108] sm:$0xff]
        %v495 = vld [vmem:[#allocation5 + $0x110] sm:$0xff]
        %v496 = vld [vmem:[#allocation5 + $0x118] sm:$0xff]
        %v497 = vld [vmem:[#allocation5 + $0x120] sm:$0xff]
        %v498 = vld [vmem:[#allocation5 + $0x128] sm:$0xff]
        %v499 = vld [vmem:[#allocation5 + $0x130] sm:$0xff]
        %v500 = vld [vmem:[#allocation5 + $0x138] sm:$0xff]
        %v501 = vld [vmem:[#allocation5 + $0x140] sm:$0xff]
        %v502 = vld [vmem:[#allocation5 + $0x148] sm:$0xff]
        %v503 = vld [vmem:[#allocation5 + $0x150] sm:$0xff]
        %v504 = vld [vmem:[#allocation5 + $0x158] sm:$0xff]
        %v505 = vld [vmem:[#allocation5 + $0x160] sm:$0xff]
        %v506 = vld [vmem:[#allocation5 + $0x168] sm:$0xff]
        %v507 = vld [vmem:[#allocation5 + $0x170] sm:$0xff]
        %v508 = vld [vmem:[#allocation5 + $0x178] sm:$0xff]
        %v509 = vld [vmem:[#allocation5 + $0x180] sm:$0xff]
        %v510 = vld [vmem:[#allocation5 + $0x188] sm:$0xff]
        %v511 = vld [vmem:[#allocation5 + $0x190] sm:$0xff]
        %v512 = vld [vmem:[#allocation5 + $0x198] sm:$0xff]
        %v513 = vld [vmem:[#allocation5 + $0x1a0] sm:$0xff]
        %v514 = vld [vmem:[#allocation5 + $0x1a8] sm:$0xff]
        %v515 = vld [vmem:[#allocation5 + $0x1b0] sm:$0xff]
        %v516 = vld [vmem:[#allocation5 + $0x1b8] sm:$0xff]
        %v517 = vld [vmem:[#allocation5 + $0x1c0] sm:$0xff]
        %v518 = vld [vmem:[#allocation5 + $0x1c8] sm:$0xff]
        %v519 = vld [vmem:[#allocation5 + $0x1d0] sm:$0xff]
        %v520 = vld [vmem:[#allocation5 + $0x1d8] sm:$0xff]
        %v521 = vld [vmem:[#allocation5 + $0x1e0] sm:$0xff]
        %v522 = vld [vmem:[#allocation5 + $0x1e8] sm:$0xff]
        %v523 = vld [vmem:[#allocation5 + $0x1f0] sm:$0xff]
        %v524 = vld [vmem:[#allocation5 + $0x1f8] sm:$0xff]
        %v525 = vld [vmem:[#allocation8] sm:$0xf]
        %v527 = vperm.slane %v525, 0
        %v528 = vperm.slane %v525, 1
        %v529 = vperm.slane %v525, 2
        %v530 = vperm.slane %v525, 3
        %v551 = vunpack.c.l.b16 %v445
        %v552 = vunpack.c.h.b16 %v445
        %v553 = vunpack.c.l.b16 %v446
        %v554 = vunpack.c.h.b16 %v446
        %v555 = vunpack.c.l.b16 %v447
        %v556 = vunpack.c.h.b16 %v447
        %v557 = vunpack.c.l.b16 %v448
        %v558 = vunpack.c.h.b16 %v448
        %v559 = vunpack.c.l.b16 %v449
        %v560 = vunpack.c.h.b16 %v449
        %v561 = vunpack.c.l.b16 %v450
        %v562 = vunpack.c.h.b16 %v450
        %v563 = vunpack.c.l.b16 %v451
        %v564 = vunpack.c.h.b16 %v451
        %v565 = vunpack.c.l.b16 %v452
        %v566 = vunpack.c.h.b16 %v452
        %v567 = vunpack.c.l.b16 %v453
        %v568 = vunpack.c.h.b16 %v453
        %v569 = vunpack.c.l.b16 %v454
        %v570 = vunpack.c.h.b16 %v454
        %v571 = vunpack.c.l.b16 %v455
        %v572 = vunpack.c.h.b16 %v455
        %v573 = vunpack.c.l.b16 %v456
        %v574 = vunpack.c.h.b16 %v456
        %v575 = vunpack.c.l.b16 %v457
        %v576 = vunpack.c.h.b16 %v457
        %v577 = vunpack.c.l.b16 %v458
        %v578 = vunpack.c.h.b16 %v458
        %v579 = vunpack.c.l.b16 %v459
        %v580 = vunpack.c.h.b16 %v459
        %v581 = vunpack.c.l.b16 %v460
        %v582 = vunpack.c.h.b16 %v460
        %v583 = vpack.c.b16 %v553, %v551
        %v584 = vpack.c.b16 %v554, %v552
        %v585 = vpack.c.b16 %v557, %v555
        %v586 = vpack.c.b16 %v558, %v556
        %v587 = vpack.c.b16 %v561, %v559
        %v588 = vpack.c.b16 %v562, %v560
        %v589 = vpack.c.b16 %v565, %v563
        %v590 = vpack.c.b16 %v566, %v564
        %v591 = vpack.c.b16 %v569, %v567
        %v592 = vpack.c.b16 %v570, %v568
        %v593 = vpack.c.b16 %v573, %v571
        %v594 = vpack.c.b16 %v574, %v572
        %v595 = vpack.c.b16 %v577, %v575
        %v596 = vpack.c.b16 %v578, %v576
        %v597 = vpack.c.b16 %v581, %v579
        %v598 = vpack.c.b16 %v582, %v580
        %v679 = vunpack.c.l.b16 %v461
        %v680 = vunpack.c.h.b16 %v461
        %v681 = vunpack.c.l.b16 %v462
        %v682 = vunpack.c.h.b16 %v462
        %v683 = vunpack.c.l.b16 %v463
        %v684 = vunpack.c.h.b16 %v463
        %v685 = vunpack.c.l.b16 %v464
        %v686 = vunpack.c.h.b16 %v464
        %v687 = vunpack.c.l.b16 %v465
        %v688 = vunpack.c.h.b16 %v465
        %v689 = vunpack.c.l.b16 %v466
        %v690 = vunpack.c.h.b16 %v466
        %v691 = vunpack.c.l.b16 %v467
        %v692 = vunpack.c.h.b16 %v467
        %v693 = vunpack.c.l.b16 %v468
        %v694 = vunpack.c.h.b16 %v468
        %v695 = vunpack.c.l.b16 %v469
        %v696 = vunpack.c.h.b16 %v469
        %v697 = vunpack.c.l.b16 %v470
        %v698 = vunpack.c.h.b16 %v470
        %v699 = vunpack.c.l.b16 %v471
        %v700 = vunpack.c.h.b16 %v471
        %v701 = vunpack.c.l.b16 %v472
        %v702 = vunpack.c.h.b16 %v472
        %v703 = vunpack.c.l.b16 %v473
        %v704 = vunpack.c.h.b16 %v473
        %v705 = vunpack.c.l.b16 %v474
        %v706 = vunpack.c.h.b16 %v474
        %v707 = vunpack.c.l.b16 %v475
        %v708 = vunpack.c.h.b16 %v475
        %v709 = vunpack.c.l.b16 %v476
        %v710 = vunpack.c.h.b16 %v476
        %v711 = vunpack.c.l.b16 %v477
        %v712 = vunpack.c.h.b16 %v477
        %v713 = vunpack.c.l.b16 %v478
        %v714 = vunpack.c.h.b16 %v478
        %v715 = vunpack.c.l.b16 %v479
        %v716 = vunpack.c.h.b16 %v479
        %v717 = vunpack.c.l.b16 %v480
        %v718 = vunpack.c.h.b16 %v480
        %v719 = vunpack.c.l.b16 %v481
        %v720 = vunpack.c.h.b16 %v481
        %v721 = vunpack.c.l.b16 %v482
        %v722 = vunpack.c.h.b16 %v482
        %v723 = vunpack.c.l.b16 %v483
        %v724 = vunpack.c.h.b16 %v483
        %v725 = vunpack.c.l.b16 %v484
        %v726 = vunpack.c.h.b16 %v484
        %v727 = vunpack.c.l.b16 %v485
        %v728 = vunpack.c.h.b16 %v485
        %v729 = vunpack.c.l.b16 %v486
        %v730 = vunpack.c.h.b16 %v486
        %v731 = vunpack.c.l.b16 %v487
        %v732 = vunpack.c.h.b16 %v487
        %v733 = vunpack.c.l.b16 %v488
        %v734 = vunpack.c.h.b16 %v488
        %v735 = vunpack.c.l.b16 %v489
        %v736 = vunpack.c.h.b16 %v489
        %v737 = vunpack.c.l.b16 %v490
        %v738 = vunpack.c.h.b16 %v490
        %v739 = vunpack.c.l.b16 %v491
        %v740 = vunpack.c.h.b16 %v491
        %v741 = vunpack.c.l.b16 %v492
        %v742 = vunpack.c.h.b16 %v492
        %v743 = vunpack.c.l.b16 %v493
        %v744 = vunpack.c.h.b16 %v493
        %v745 = vunpack.c.l.b16 %v494
        %v746 = vunpack.c.h.b16 %v494
        %v747 = vunpack.c.l.b16 %v495
        %v748 = vunpack.c.h.b16 %v495
        %v749 = vunpack.c.l.b16 %v496
        %v750 = vunpack.c.h.b16 %v496
        %v751 = vunpack.c.l.b16 %v497
        %v752 = vunpack.c.h.b16 %v497
        %v753 = vunpack.c.l.b16 %v498
        %v754 = vunpack.c.h.b16 %v498
        %v755 = vunpack.c.l.b16 %v499
        %v756 = vunpack.c.h.b16 %v499
        %v757 = vunpack.c.l.b16 %v500
        %v758 = vunpack.c.h.b16 %v500
        %v759 = vunpack.c.l.b16 %v501
        %v760 = vunpack.c.h.b16 %v501
        %v761 = vunpack.c.l.b16 %v502
        %v762 = vunpack.c.h.b16 %v502
        %v763 = vunpack.c.l.b16 %v503
        %v764 = vunpack.c.h.b16 %v503
        %v765 = vunpack.c.l.b16 %v504
        %v766 = vunpack.c.h.b16 %v504
        %v767 = vunpack.c.l.b16 %v505
        %v768 = vunpack.c.h.b16 %v505
        %v769 = vunpack.c.l.b16 %v506
        %v770 = vunpack.c.h.b16 %v506
        %v771 = vunpack.c.l.b16 %v507
        %v772 = vunpack.c.h.b16 %v507
        %v773 = vunpack.c.l.b16 %v508
        %v774 = vunpack.c.h.b16 %v508
        %v775 = vunpack.c.l.b16 %v509
        %v776 = vunpack.c.h.b16 %v509
        %v777 = vunpack.c.l.b16 %v510
        %v778 = vunpack.c.h.b16 %v510
        %v779 = vunpack.c.l.b16 %v511
        %v780 = vunpack.c.h.b16 %v511
        %v781 = vunpack.c.l.b16 %v512
        %v782 = vunpack.c.h.b16 %v512
        %v783 = vunpack.c.l.b16 %v513
        %v784 = vunpack.c.h.b16 %v513
        %v785 = vunpack.c.l.b16 %v514
        %v786 = vunpack.c.h.b16 %v514
        %v787 = vunpack.c.l.b16 %v515
        %v788 = vunpack.c.h.b16 %v515
        %v789 = vunpack.c.l.b16 %v516
        %v790 = vunpack.c.h.b16 %v516
        %v791 = vunpack.c.l.b16 %v517
        %v792 = vunpack.c.h.b16 %v517
        %v793 = vunpack.c.l.b16 %v518
        %v794 = vunpack.c.h.b16 %v518
        %v795 = vunpack.c.l.b16 %v519
        %v796 = vunpack.c.h.b16 %v519
        %v797 = vunpack.c.l.b16 %v520
        %v798 = vunpack.c.h.b16 %v520
        %v799 = vunpack.c.l.b16 %v521
        %v800 = vunpack.c.h.b16 %v521
        %v801 = vunpack.c.l.b16 %v522
        %v802 = vunpack.c.h.b16 %v522
        %v803 = vunpack.c.l.b16 %v523
        %v804 = vunpack.c.h.b16 %v523
        %v805 = vunpack.c.l.b16 %v524
        %v806 = vunpack.c.h.b16 %v524
        %v807 = vpack.c.b16 %v683, %v679
        %v808 = vpack.c.b16 %v684, %v680
        %v809 = vpack.c.b16 %v685, %v681
        %v810 = vpack.c.b16 %v686, %v682
        %v811 = vpack.c.b16 %v691, %v687
        %v812 = vpack.c.b16 %v692, %v688
        %v813 = vpack.c.b16 %v693, %v689
        %v814 = vpack.c.b16 %v694, %v690
        %v815 = vpack.c.b16 %v699, %v695
        %v816 = vpack.c.b16 %v700, %v696
        %v817 = vpack.c.b16 %v701, %v697
        %v818 = vpack.c.b16 %v702, %v698
        %v819 = vpack.c.b16 %v707, %v703
        %v820 = vpack.c.b16 %v708, %v704
        %v821 = vpack.c.b16 %v709, %v705
        %v822 = vpack.c.b16 %v710, %v706
        %v823 = vpack.c.b16 %v715, %v711
        %v824 = vpack.c.b16 %v716, %v712
        %v825 = vpack.c.b16 %v717, %v713
        %v826 = vpack.c.b16 %v718, %v714
        %v827 = vpack.c.b16 %v723, %v719
        %v828 = vpack.c.b16 %v724, %v720
        %v829 = vpack.c.b16 %v725, %v721
        %v830 = vpack.c.b16 %v726, %v722
        %v831 = vpack.c.b16 %v731, %v727
        %v832 = vpack.c.b16 %v732, %v728
        %v833 = vpack.c.b16 %v733, %v729
        %v834 = vpack.c.b16 %v734, %v730
        %v835 = vpack.c.b16 %v739, %v735
        %v836 = vpack.c.b16 %v740, %v736
        %v837 = vpack.c.b16 %v741, %v737
        %v838 = vpack.c.b16 %v742, %v738
        %v839 = vpack.c.b16 %v747, %v743
        %v840 = vpack.c.b16 %v748, %v744
        %v841 = vpack.c.b16 %v749, %v745
        %v842 = vpack.c.b16 %v750, %v746
        %v843 = vpack.c.b16 %v755, %v751
        %v844 = vpack.c.b16 %v756, %v752
        %v845 = vpack.c.b16 %v757, %v753
        %v846 = vpack.c.b16 %v758, %v754
        %v847 = vpack.c.b16 %v763, %v759
        %v848 = vpack.c.b16 %v764, %v760
        %v849 = vpack.c.b16 %v765, %v761
        %v850 = vpack.c.b16 %v766, %v762
        %v851 = vpack.c.b16 %v771, %v767
        %v852 = vpack.c.b16 %v772, %v768
        %v853 = vpack.c.b16 %v773, %v769
        %v854 = vpack.c.b16 %v774, %v770
        %v855 = vpack.c.b16 %v779, %v775
        %v856 = vpack.c.b16 %v780, %v776
        %v857 = vpack.c.b16 %v781, %v777
        %v858 = vpack.c.b16 %v782, %v778
        %v859 = vpack.c.b16 %v787, %v783
        %v860 = vpack.c.b16 %v788, %v784
        %v861 = vpack.c.b16 %v789, %v785
        %v862 = vpack.c.b16 %v790, %v786
        %v863 = vpack.c.b16 %v795, %v791
        %v864 = vpack.c.b16 %v796, %v792
        %v865 = vpack.c.b16 %v797, %v793
        %v866 = vpack.c.b16 %v798, %v794
        %v867 = vpack.c.b16 %v803, %v799
        %v868 = vpack.c.b16 %v804, %v800
        %v869 = vpack.c.b16 %v805, %v801
        %v870 = vpack.c.b16 %v806, %v802
        %935 = vmatpush.bf16.msra.mxu0 %v835
        %936 = vmatpush.bf16.msra.mxu0 %v831
        %937 = vmatpush.bf16.msra.mxu0 %v827
        %938 = vmatpush.bf16.msra.mxu0 %v823
        %939 = vmatpush.bf16.msra.mxu0 %v819
        %940 = vmatpush.bf16.msra.mxu0 %v815
        %941 = vmatpush.bf16.msra.mxu0 %v811
        %942 = vmatpush.bf16.msra.mxu0 %v807
        %943 = vmatmul.bf16.gmra.mxu0 %v583
        %v944 = vpop.f32.mrf.mxu0
        %v945 = vadd.f32 %v527, %v944
        %v946 = vpop.f32.mrf.mxu0
        %v947 = vadd.f32 %v527, %v946
        %948 = vmatmul.bf16.gmra.mxu0 %v585
        %v949 = vpop.f32.mrf.mxu0
        %v950 = vadd.f32 %v527, %v949
        %v951 = vpop.f32.mrf.mxu0
        %v952 = vadd.f32 %v527, %v951
        %953 = vmatmul.bf16.gmra.mxu0 %v587
        %v954 = vpop.f32.mrf.mxu0
        %v955 = vadd.f32 %v527, %v954
        %v956 = vpop.f32.mrf.mxu0
        %v957 = vadd.f32 %v527, %v956
        %958 = vmatmul.bf16.gmra.mxu0 %v589
        %v959 = vpop.f32.mrf.mxu0
        %v960 = vadd.f32 %v527, %v959
        %v961 = vpop.f32.mrf.mxu0
        %v962 = vadd.f32 %v527, %v961
        %963 = vmatmul.bf16.gmra.mxu0 %v591
        %v964 = vpop.f32.mrf.mxu0
        %v965 = vadd.f32 %v527, %v964
        %v966 = vpop.f32.mrf.mxu0
        %v967 = vadd.f32 %v527, %v966
        %968 = vmatmul.bf16.gmra.mxu0 %v593
        %v969 = vpop.f32.mrf.mxu0
        %v970 = vadd.f32 %v527, %v969
        %v971 = vpop.f32.mrf.mxu0
        %v972 = vadd.f32 %v527, %v971
        %973 = vmatmul.bf16.gmra.mxu0 %v595
        %v974 = vpop.f32.mrf.mxu0
        %v975 = vadd.f32 %v527, %v974
        %v976 = vpop.f32.mrf.mxu0
        %v977 = vadd.f32 %v527, %v976
        %978 = vmatmul.bf16.gmra.mxu0 %v597
        %v979 = vpop.f32.mrf.mxu0
        %v980 = vadd.f32 %v527, %v979
        %v981 = vpop.f32.mrf.mxu0
        %v982 = vadd.f32 %v527, %v981
        %983 = vdwg.mxu0
        %984 = vmatpush.bf16.msra.mxu0 %v867
        %985 = vmatpush.bf16.msra.mxu0 %v863
        %986 = vmatpush.bf16.msra.mxu0 %v859
        %987 = vmatpush.bf16.msra.mxu0 %v855
        %988 = vmatpush.bf16.msra.mxu0 %v851
        %989 = vmatpush.bf16.msra.mxu0 %v847
        %990 = vmatpush.bf16.msra.mxu0 %v843
        %991 = vmatpush.bf16.msra.mxu0 %v839
        %992 = vmatmul.bf16.gmra.mxu0 %v584
        %v993 = vpop.f32.mrf.mxu0
        %v994 = vadd.f32 %v945, %v993
        %v995 = vpop.f32.mrf.mxu0
        %v996 = vadd.f32 %v947, %v995
        %997 = vmatmul.bf16.gmra.mxu0 %v586
        %v998 = vpop.f32.mrf.mxu0
        %v999 = vadd.f32 %v950, %v998
        %v1000 = vpop.f32.mrf.mxu0
        %v1001 = vadd.f32 %v952, %v1000
        %1002 = vmatmul.bf16.gmra.mxu0 %v588
        %v1003 = vpop.f32.mrf.mxu0
        %v1004 = vadd.f32 %v955, %v1003
        %v1005 = vpop.f32.mrf.mxu0
        %v1006 = vadd.f32 %v957, %v1005
        %1007 = vmatmul.bf16.gmra.mxu0 %v590
        %v1008 = vpop.f32.mrf.mxu0
        %v1009 = vadd.f32 %v960, %v1008
        %v1010 = vpop.f32.mrf.mxu0
        %v1011 = vadd.f32 %v962, %v1010
        %1012 = vmatmul.bf16.gmra.mxu0 %v592
        %v1013 = vpop.f32.mrf.mxu0
        %v1014 = vadd.f32 %v965, %v1013
        %v1015 = vpop.f32.mrf.mxu0
        %v1016 = vadd.f32 %v967, %v1015
        %1017 = vmatmul.bf16.gmra.mxu0 %v594
        %v1018 = vpop.f32.mrf.mxu0
        %v1019 = vadd.f32 %v970, %v1018
        %v1020 = vpop.f32.mrf.mxu0
        %v1021 = vadd.f32 %v972, %v1020
        %1022 = vmatmul.bf16.gmra.mxu0 %v596
        %v1023 = vpop.f32.mrf.mxu0
        %v1024 = vadd.f32 %v975, %v1023
        %v1025 = vpop.f32.mrf.mxu0
        %v1026 = vadd.f32 %v977, %v1025
        %1027 = vmatmul.bf16.gmra.mxu0 %v598
        %v1028 = vpop.f32.mrf.mxu0
        %v1029 = vadd.f32 %v980, %v1028
        %v1030 = vpop.f32.mrf.mxu0
        %v1031 = vadd.f32 %v982, %v1030
        %1032 = vdwg.mxu0
        %1033 = vmatpush.bf16.msra.mxu0 %v836
        %1034 = vmatpush.bf16.msra.mxu0 %v832
        %1035 = vmatpush.bf16.msra.mxu0 %v828
        %1036 = vmatpush.bf16.msra.mxu0 %v824
        %1037 = vmatpush.bf16.msra.mxu0 %v820
        %1038 = vmatpush.bf16.msra.mxu0 %v816
        %1039 = vmatpush.bf16.msra.mxu0 %v812
        %1040 = vmatpush.bf16.msra.mxu0 %v808
        %1041 = vmatmul.bf16.gmra.mxu0 %v583
        %v1042 = vpop.f32.mrf.mxu0
        %v1043 = vadd.f32 %v528, %v1042
        %v1044 = vpop.f32.mrf.mxu0
        %v1045 = vadd.f32 %v528, %v1044
        %1046 = vmatmul.bf16.gmra.mxu0 %v585
        %v1047 = vpop.f32.mrf.mxu0
        %v1048 = vadd.f32 %v528, %v1047
        %v1049 = vpop.f32.mrf.mxu0
        %v1050 = vadd.f32 %v528, %v1049
        %1051 = vmatmul.bf16.gmra.mxu0 %v587
        %v1052 = vpop.f32.mrf.mxu0
        %v1053 = vadd.f32 %v528, %v1052
        %v1054 = vpop.f32.mrf.mxu0
        %v1055 = vadd.f32 %v528, %v1054
        %1056 = vmatmul.bf16.gmra.mxu0 %v589
        %v1057 = vpop.f32.mrf.mxu0
        %v1058 = vadd.f32 %v528, %v1057
        %v1059 = vpop.f32.mrf.mxu0
        %v1060 = vadd.f32 %v528, %v1059
        %1061 = vmatmul.bf16.gmra.mxu0 %v591
        %v1062 = vpop.f32.mrf.mxu0
        %v1063 = vadd.f32 %v528, %v1062
        %v1064 = vpop.f32.mrf.mxu0
        %v1065 = vadd.f32 %v528, %v1064
        %1066 = vmatmul.bf16.gmra.mxu0 %v593
        %v1067 = vpop.f32.mrf.mxu0
        %v1068 = vadd.f32 %v528, %v1067
        %v1069 = vpop.f32.mrf.mxu0
        %v1070 = vadd.f32 %v528, %v1069
        %1071 = vmatmul.bf16.gmra.mxu0 %v595
        %v1072 = vpop.f32.mrf.mxu0
        %v1073 = vadd.f32 %v528, %v1072
        %v1074 = vpop.f32.mrf.mxu0
        %v1075 = vadd.f32 %v528, %v1074
        %1076 = vmatmul.bf16.gmra.mxu0 %v597
        %v1077 = vpop.f32.mrf.mxu0
        %v1078 = vadd.f32 %v528, %v1077
        %v1079 = vpop.f32.mrf.mxu0
        %v1080 = vadd.f32 %v528, %v1079
        %1081 = vdwg.mxu0
        %1082 = vmatpush.bf16.msra.mxu0 %v868
        %1083 = vmatpush.bf16.msra.mxu0 %v864
        %1084 = vmatpush.bf16.msra.mxu0 %v860
        %1085 = vmatpush.bf16.msra.mxu0 %v856
        %1086 = vmatpush.bf16.msra.mxu0 %v852
        %1087 = vmatpush.bf16.msra.mxu0 %v848
        %1088 = vmatpush.bf16.msra.mxu0 %v844
        %1089 = vmatpush.bf16.msra.mxu0 %v840
        %1090 = vmatmul.bf16.gmra.mxu0 %v584
        %v1091 = vpop.f32.mrf.mxu0
        %v1092 = vadd.f32 %v1043, %v1091
        %v1093 = vpop.f32.mrf.mxu0
        %v1094 = vadd.f32 %v1045, %v1093
        %1095 = vmatmul.bf16.gmra.mxu0 %v586
        %v1096 = vpop.f32.mrf.mxu0
        %v1097 = vadd.f32 %v1048, %v1096
        %v1098 = vpop.f32.mrf.mxu0
        %v1099 = vadd.f32 %v1050, %v1098
        %1100 = vmatmul.bf16.gmra.mxu0 %v588
        %v1101 = vpop.f32.mrf.mxu0
        %v1102 = vadd.f32 %v1053, %v1101
        %v1103 = vpop.f32.mrf.mxu0
        %v1104 = vadd.f32 %v1055, %v1103
        %1105 = vmatmul.bf16.gmra.mxu0 %v590
        %v1106 = vpop.f32.mrf.mxu0
        %v1107 = vadd.f32 %v1058, %v1106
        %v1108 = vpop.f32.mrf.mxu0
        %v1109 = vadd.f32 %v1060, %v1108
        %1110 = vmatmul.bf16.gmra.mxu0 %v592
        %v1111 = vpop.f32.mrf.mxu0
        %v1112 = vadd.f32 %v1063, %v1111
        %v1113 = vpop.f32.mrf.mxu0
        %v1114 = vadd.f32 %v1065, %v1113
        %1115 = vmatmul.bf16.gmra.mxu0 %v594
        %v1116 = vpop.f32.mrf.mxu0
        %v1117 = vadd.f32 %v1068, %v1116
        %v1118 = vpop.f32.mrf.mxu0
        %v1119 = vadd.f32 %v1070, %v1118
        %1120 = vmatmul.bf16.gmra.mxu0 %v596
        %v1121 = vpop.f32.mrf.mxu0
        %v1122 = vadd.f32 %v1073, %v1121
        %v1123 = vpop.f32.mrf.mxu0
        %v1124 = vadd.f32 %v1075, %v1123
        %1125 = vmatmul.bf16.gmra.mxu0 %v598
        %v1126 = vpop.f32.mrf.mxu0
        %v1127 = vadd.f32 %v1078, %v1126
        %v1128 = vpop.f32.mrf.mxu0
        %v1129 = vadd.f32 %v1080, %v1128
        %1130 = vdwg.mxu0
        %1131 = vmatpush.bf16.msra.mxu0 %v837
        %1132 = vmatpush.bf16.msra.mxu0 %v833
        %1133 = vmatpush.bf16.msra.mxu0 %v829
        %1134 = vmatpush.bf16.msra.mxu0 %v825
        %1135 = vmatpush.bf16.msra.mxu0 %v821
        %1136 = vmatpush.bf16.msra.mxu0 %v817
        %1137 = vmatpush.bf16.msra.mxu0 %v813
        %1138 = vmatpush.bf16.msra.mxu0 %v809
        %1139 = vmatmul.bf16.gmra.mxu0 %v583
        %v1140 = vpop.f32.mrf.mxu0
        %v1141 = vadd.f32 %v529, %v1140
        %v1142 = vpop.f32.mrf.mxu0
        %v1143 = vadd.f32 %v529, %v1142
        %1144 = vmatmul.bf16.gmra.mxu0 %v585
        %v1145 = vpop.f32.mrf.mxu0
        %v1146 = vadd.f32 %v529, %v1145
        %v1147 = vpop.f32.mrf.mxu0
        %v1148 = vadd.f32 %v529, %v1147
        %1149 = vmatmul.bf16.gmra.mxu0 %v587
        %v1150 = vpop.f32.mrf.mxu0
        %v1151 = vadd.f32 %v529, %v1150
        %v1152 = vpop.f32.mrf.mxu0
        %v1153 = vadd.f32 %v529, %v1152
        %1154 = vmatmul.bf16.gmra.mxu0 %v589
        %v1155 = vpop.f32.mrf.mxu0
        %v1156 = vadd.f32 %v529, %v1155
        %v1157 = vpop.f32.mrf.mxu0
        %v1158 = vadd.f32 %v529, %v1157
        %1159 = vmatmul.bf16.gmra.mxu0 %v591
        %v1160 = vpop.f32.mrf.mxu0
        %v1161 = vadd.f32 %v529, %v1160
        %v1162 = vpop.f32.mrf.mxu0
        %v1163 = vadd.f32 %v529, %v1162
        %1164 = vmatmul.bf16.gmra.mxu0 %v593
        %v1165 = vpop.f32.mrf.mxu0
        %v1166 = vadd.f32 %v529, %v1165
        %v1167 = vpop.f32.mrf.mxu0
        %v1168 = vadd.f32 %v529, %v1167
        %1169 = vmatmul.bf16.gmra.mxu0 %v595
        %v1170 = vpop.f32.mrf.mxu0
        %v1171 = vadd.f32 %v529, %v1170
        %v1172 = vpop.f32.mrf.mxu0
        %v1173 = vadd.f32 %v529, %v1172
        %1174 = vmatmul.bf16.gmra.mxu0 %v597
        %v1175 = vpop.f32.mrf.mxu0
        %v1176 = vadd.f32 %v529, %v1175
        %v1177 = vpop.f32.mrf.mxu0
        %v1178 = vadd.f32 %v529, %v1177
        %1179 = vdwg.mxu0
        %1180 = vmatpush.bf16.msra.mxu0 %v869
        %1181 = vmatpush.bf16.msra.mxu0 %v865
        %1182 = vmatpush.bf16.msra.mxu0 %v861
        %1183 = vmatpush.bf16.msra.mxu0 %v857
        %1184 = vmatpush.bf16.msra.mxu0 %v853
        %1185 = vmatpush.bf16.msra.mxu0 %v849
        %1186 = vmatpush.bf16.msra.mxu0 %v845
        %1187 = vmatpush.bf16.msra.mxu0 %v841
        %1188 = vmatmul.bf16.gmra.mxu0 %v584
        %v1189 = vpop.f32.mrf.mxu0
        %v1190 = vadd.f32 %v1141, %v1189
        %v1191 = vpop.f32.mrf.mxu0
        %v1192 = vadd.f32 %v1143, %v1191
        %1193 = vmatmul.bf16.gmra.mxu0 %v586
        %v1194 = vpop.f32.mrf.mxu0
        %v1195 = vadd.f32 %v1146, %v1194
        %v1196 = vpop.f32.mrf.mxu0
        %v1197 = vadd.f32 %v1148, %v1196
        %1198 = vmatmul.bf16.gmra.mxu0 %v588
        %v1199 = vpop.f32.mrf.mxu0
        %v1200 = vadd.f32 %v1151, %v1199
        %v1201 = vpop.f32.mrf.mxu0
        %v1202 = vadd.f32 %v1153, %v1201
        %1203 = vmatmul.bf16.gmra.mxu0 %v590
        %v1204 = vpop.f32.mrf.mxu0
        %v1205 = vadd.f32 %v1156, %v1204
        %v1206 = vpop.f32.mrf.mxu0
        %v1207 = vadd.f32 %v1158, %v1206
        %1208 = vmatmul.bf16.gmra.mxu0 %v592
        %v1209 = vpop.f32.mrf.mxu0
        %v1210 = vadd.f32 %v1161, %v1209
        %v1211 = vpop.f32.mrf.mxu0
        %v1212 = vadd.f32 %v1163, %v1211
        %1213 = vmatmul.bf16.gmra.mxu0 %v594
        %v1214 = vpop.f32.mrf.mxu0
        %v1215 = vadd.f32 %v1166, %v1214
        %v1216 = vpop.f32.mrf.mxu0
        %v1217 = vadd.f32 %v1168, %v1216
        %1218 = vmatmul.bf16.gmra.mxu0 %v596
        %v1219 = vpop.f32.mrf.mxu0
        %v1220 = vadd.f32 %v1171, %v1219
        %v1221 = vpop.f32.mrf.mxu0
        %v1222 = vadd.f32 %v1173, %v1221
        %1223 = vmatmul.bf16.gmra.mxu0 %v598
        %v1224 = vpop.f32.mrf.mxu0
        %v1225 = vadd.f32 %v1176, %v1224
        %v1226 = vpop.f32.mrf.mxu0
        %v1227 = vadd.f32 %v1178, %v1226
        %1228 = vdwg.mxu0
        %1229 = vmatpush.bf16.msra.mxu0 %v838
        %1230 = vmatpush.bf16.msra.mxu0 %v834
        %1231 = vmatpush.bf16.msra.mxu0 %v830
        %1232 = vmatpush.bf16.msra.mxu0 %v826
        %1233 = vmatpush.bf16.msra.mxu0 %v822
        %1234 = vmatpush.bf16.msra.mxu0 %v818
        %1235 = vmatpush.bf16.msra.mxu0 %v814
        %1236 = vmatpush.bf16.msra.mxu0 %v810
        %1237 = vmatmul.bf16.gmra.mxu0 %v583
        %v1238 = vpop.f32.mrf.mxu0
        %v1239 = vadd.f32 %v530, %v1238
        %v1240 = vpop.f32.mrf.mxu0
        %v1241 = vadd.f32 %v530, %v1240
        %1242 = vmatmul.bf16.gmra.mxu0 %v585
        %v1243 = vpop.f32.mrf.mxu0
        %v1244 = vadd.f32 %v530, %v1243
        %v1245 = vpop.f32.mrf.mxu0
        %v1246 = vadd.f32 %v530, %v1245
        %1247 = vmatmul.bf16.gmra.mxu0 %v587
        %v1248 = vpop.f32.mrf.mxu0
        %v1249 = vadd.f32 %v530, %v1248
        %v1250 = vpop.f32.mrf.mxu0
        %v1251 = vadd.f32 %v530, %v1250
        %1252 = vmatmul.bf16.gmra.mxu0 %v589
        %v1253 = vpop.f32.mrf.mxu0
        %v1254 = vadd.f32 %v530, %v1253
        %v1255 = vpop.f32.mrf.mxu0
        %v1256 = vadd.f32 %v530, %v1255
        %1257 = vmatmul.bf16.gmra.mxu0 %v591
        %v1258 = vpop.f32.mrf.mxu0
        %v1259 = vadd.f32 %v530, %v1258
        %v1260 = vpop.f32.mrf.mxu0
        %v1261 = vadd.f32 %v530, %v1260
        %1262 = vmatmul.bf16.gmra.mxu0 %v593
        %v1263 = vpop.f32.mrf.mxu0
        %v1264 = vadd.f32 %v530, %v1263
        %v1265 = vpop.f32.mrf.mxu0
        %v1266 = vadd.f32 %v530, %v1265
        %1267 = vmatmul.bf16.gmra.mxu0 %v595
        %v1268 = vpop.f32.mrf.mxu0
        %v1269 = vadd.f32 %v530, %v1268
        %v1270 = vpop.f32.mrf.mxu0
        %v1271 = vadd.f32 %v530, %v1270
        %1272 = vmatmul.bf16.gmra.mxu0 %v597
        %v1273 = vpop.f32.mrf.mxu0
        %v1274 = vadd.f32 %v530, %v1273
        %v1275 = vpop.f32.mrf.mxu0
        %v1276 = vadd.f32 %v530, %v1275
        %1277 = vdwg.mxu0
        %1278 = vmatpush.bf16.msra.mxu0 %v870
        %1279 = vmatpush.bf16.msra.mxu0 %v866
        %1280 = vmatpush.bf16.msra.mxu0 %v862
        %1281 = vmatpush.bf16.msra.mxu0 %v858
        %1282 = vmatpush.bf16.msra.mxu0 %v854
        %1283 = vmatpush.bf16.msra.mxu0 %v850
        %1284 = vmatpush.bf16.msra.mxu0 %v846
        %1285 = vmatpush.bf16.msra.mxu0 %v842
        %1286 = vmatmul.bf16.gmra.mxu0 %v584
        %v1287 = vpop.f32.mrf.mxu0
        %v1288 = vadd.f32 %v1239, %v1287
        %v1289 = vpop.f32.mrf.mxu0
        %v1290 = vadd.f32 %v1241, %v1289
        %1291 = vmatmul.bf16.gmra.mxu0 %v586
        %v1292 = vpop.f32.mrf.mxu0
        %v1293 = vadd.f32 %v1244, %v1292
        %v1294 = vpop.f32.mrf.mxu0
        %v1295 = vadd.f32 %v1246, %v1294
        %1296 = vmatmul.bf16.gmra.mxu0 %v588
        %v1297 = vpop.f32.mrf.mxu0
        %v1298 = vadd.f32 %v1249, %v1297
        %v1299 = vpop.f32.mrf.mxu0
        %v1300 = vadd.f32 %v1251, %v1299
        %1301 = vmatmul.bf16.gmra.mxu0 %v590
        %v1302 = vpop.f32.mrf.mxu0
        %v1303 = vadd.f32 %v1254, %v1302
        %v1304 = vpop.f32.mrf.mxu0
        %v1305 = vadd.f32 %v1256, %v1304
        %1306 = vmatmul.bf16.gmra.mxu0 %v592
        %v1307 = vpop.f32.mrf.mxu0
        %v1308 = vadd.f32 %v1259, %v1307
        %v1309 = vpop.f32.mrf.mxu0
        %v1310 = vadd.f32 %v1261, %v1309
        %1311 = vmatmul.bf16.gmra.mxu0 %v594
        %v1312 = vpop.f32.mrf.mxu0
        %v1313 = vadd.f32 %v1264, %v1312
        %v1314 = vpop.f32.mrf.mxu0
        %v1315 = vadd.f32 %v1266, %v1314
        %1316 = vmatmul.bf16.gmra.mxu0 %v596
        %v1317 = vpop.f32.mrf.mxu0
        %v1318 = vadd.f32 %v1269, %v1317
        %v1319 = vpop.f32.mrf.mxu0
        %v1320 = vadd.f32 %v1271, %v1319
        %1321 = vmatmul.bf16.gmra.mxu0 %v598
        %v1322 = vpop.f32.mrf.mxu0
        %v1323 = vadd.f32 %v1274, %v1322
        %v1324 = vpop.f32.mrf.mxu0
        %v1325 = vadd.f32 %v1276, %v1324
        %1326 = vdwg.mxu0
        %v1327 = vld [vmem:[#allocation7] sm:$0xff]
        %v1328 = vld [vmem:[#allocation7 + $0x8] sm:$0xff]
        %v1329 = vld [vmem:[#allocation7 + $0x10] sm:$0xff]
        %v1330 = vld [vmem:[#allocation7 + $0x18] sm:$0xff]
        %v1331 = vld [vmem:[#allocation7 + $0x20] sm:$0xff]
        %v1332 = vld [vmem:[#allocation7 + $0x28] sm:$0xff]
        %v1333 = vld [vmem:[#allocation7 + $0x30] sm:$0xff]
        %v1334 = vld [vmem:[#allocation7 + $0x38] sm:$0xff]
        %v1335 = vld [vmem:[#allocation7 + $0x40] sm:$0xff]
        %v1336 = vld [vmem:[#allocation7 + $0x48] sm:$0xff]
        %v1337 = vld [vmem:[#allocation7 + $0x50] sm:$0xff]
        %v1338 = vld [vmem:[#allocation7 + $0x58] sm:$0xff]
        %v1339 = vld [vmem:[#allocation7 + $0x60] sm:$0xff]
        %v1340 = vld [vmem:[#allocation7 + $0x68] sm:$0xff]
        %v1341 = vld [vmem:[#allocation7 + $0x70] sm:$0xff]
        %v1342 = vld [vmem:[#allocation7 + $0x78] sm:$0xff]
        %v1343 = vld [vmem:[#allocation7 + $0x80] sm:$0xff]
        %v1344 = vld [vmem:[#allocation7 + $0x88] sm:$0xff]
        %v1345 = vld [vmem:[#allocation7 + $0x90] sm:$0xff]
        %v1346 = vld [vmem:[#allocation7 + $0x98] sm:$0xff]
        %v1347 = vld [vmem:[#allocation7 + $0xa0] sm:$0xff]
        %v1348 = vld [vmem:[#allocation7 + $0xa8] sm:$0xff]
        %v1349 = vld [vmem:[#allocation7 + $0xb0] sm:$0xff]
        %v1350 = vld [vmem:[#allocation7 + $0xb8] sm:$0xff]
        %v1351 = vld [vmem:[#allocation7 + $0xc0] sm:$0xff]
        %v1352 = vld [vmem:[#allocation7 + $0xc8] sm:$0xff]
        %v1353 = vld [vmem:[#allocation7 + $0xd0] sm:$0xff]
        %v1354 = vld [vmem:[#allocation7 + $0xd8] sm:$0xff]
        %v1355 = vld [vmem:[#allocation7 + $0xe0] sm:$0xff]
        %v1356 = vld [vmem:[#allocation7 + $0xe8] sm:$0xff]
        %v1357 = vld [vmem:[#allocation7 + $0xf0] sm:$0xff]
        %v1358 = vld [vmem:[#allocation7 + $0xf8] sm:$0xff]
        %v1359 = vld [vmem:[#allocation7 + $0x100] sm:$0xff]
        %v1360 = vld [vmem:[#allocation7 + $0x108] sm:$0xff]
        %v1361 = vld [vmem:[#allocation7 + $0x110] sm:$0xff]
        %v1362 = vld [vmem:[#allocation7 + $0x118] sm:$0xff]
        %v1363 = vld [vmem:[#allocation7 + $0x120] sm:$0xff]
        %v1364 = vld [vmem:[#allocation7 + $0x128] sm:$0xff]
        %v1365 = vld [vmem:[#allocation7 + $0x130] sm:$0xff]
        %v1366 = vld [vmem:[#allocation7 + $0x138] sm:$0xff]
        %v1367 = vld [vmem:[#allocation7 + $0x140] sm:$0xff]
        %v1368 = vld [vmem:[#allocation7 + $0x148] sm:$0xff]
        %v1369 = vld [vmem:[#allocation7 + $0x150] sm:$0xff]
        %v1370 = vld [vmem:[#allocation7 + $0x158] sm:$0xff]
        %v1371 = vld [vmem:[#allocation7 + $0x160] sm:$0xff]
        %v1372 = vld [vmem:[#allocation7 + $0x168] sm:$0xff]
        %v1373 = vld [vmem:[#allocation7 + $0x170] sm:$0xff]
        %v1374 = vld [vmem:[#allocation7 + $0x178] sm:$0xff]
        %v1375 = vld [vmem:[#allocation7 + $0x180] sm:$0xff]
        %v1376 = vld [vmem:[#allocation7 + $0x188] sm:$0xff]
        %v1377 = vld [vmem:[#allocation7 + $0x190] sm:$0xff]
        %v1378 = vld [vmem:[#allocation7 + $0x198] sm:$0xff]
        %v1379 = vld [vmem:[#allocation7 + $0x1a0] sm:$0xff]
        %v1380 = vld [vmem:[#allocation7 + $0x1a8] sm:$0xff]
        %v1381 = vld [vmem:[#allocation7 + $0x1b0] sm:$0xff]
        %v1382 = vld [vmem:[#allocation7 + $0x1b8] sm:$0xff]
        %v1383 = vld [vmem:[#allocation7 + $0x1c0] sm:$0xff]
        %v1384 = vld [vmem:[#allocation7 + $0x1c8] sm:$0xff]
        %v1385 = vld [vmem:[#allocation7 + $0x1d0] sm:$0xff]
        %v1386 = vld [vmem:[#allocation7 + $0x1d8] sm:$0xff]
        %v1387 = vld [vmem:[#allocation7 + $0x1e0] sm:$0xff]
        %v1388 = vld [vmem:[#allocation7 + $0x1e8] sm:$0xff]
        %v1389 = vld [vmem:[#allocation7 + $0x1f0] sm:$0xff]
        %v1390 = vld [vmem:[#allocation7 + $0x1f8] sm:$0xff]
        %v1391 = vld [vmem:[#allocation10] sm:$0xf]
        %v1393 = vperm.slane %v1391, 0
        %v1394 = vperm.slane %v1391, 1
        %v1395 = vperm.slane %v1391, 2
        %v1396 = vperm.slane %v1391, 3
        %v1465 = vunpack.c.l.b16 %v1327
        %v1466 = vunpack.c.h.b16 %v1327
        %v1467 = vunpack.c.l.b16 %v1328
        %v1468 = vunpack.c.h.b16 %v1328
        %v1469 = vunpack.c.l.b16 %v1329
        %v1470 = vunpack.c.h.b16 %v1329
        %v1471 = vunpack.c.l.b16 %v1330
        %v1472 = vunpack.c.h.b16 %v1330
        %v1473 = vunpack.c.l.b16 %v1331
        %v1474 = vunpack.c.h.b16 %v1331
        %v1475 = vunpack.c.l.b16 %v1332
        %v1476 = vunpack.c.h.b16 %v1332
        %v1477 = vunpack.c.l.b16 %v1333
        %v1478 = vunpack.c.h.b16 %v1333
        %v1479 = vunpack.c.l.b16 %v1334
        %v1480 = vunpack.c.h.b16 %v1334
        %v1481 = vunpack.c.l.b16 %v1335
        %v1482 = vunpack.c.h.b16 %v1335
        %v1483 = vunpack.c.l.b16 %v1336
        %v1484 = vunpack.c.h.b16 %v1336
        %v1485 = vunpack.c.l.b16 %v1337
        %v1486 = vunpack.c.h.b16 %v1337
        %v1487 = vunpack.c.l.b16 %v1338
        %v1488 = vunpack.c.h.b16 %v1338
        %v1489 = vunpack.c.l.b16 %v1339
        %v1490 = vunpack.c.h.b16 %v1339
        %v1491 = vunpack.c.l.b16 %v1340
        %v1492 = vunpack.c.h.b16 %v1340
        %v1493 = vunpack.c.l.b16 %v1341
        %v1494 = vunpack.c.h.b16 %v1341
        %v1495 = vunpack.c.l.b16 %v1342
        %v1496 = vunpack.c.h.b16 %v1342
        %v1497 = vunpack.c.l.b16 %v1343
        %v1498 = vunpack.c.h.b16 %v1343
        %v1499 = vunpack.c.l.b16 %v1344
        %v1500 = vunpack.c.h.b16 %v1344
        %v1501 = vunpack.c.l.b16 %v1345
        %v1502 = vunpack.c.h.b16 %v1345
        %v1503 = vunpack.c.l.b16 %v1346
        %v1504 = vunpack.c.h.b16 %v1346
        %v1505 = vunpack.c.l.b16 %v1347
        %v1506 = vunpack.c.h.b16 %v1347
        %v1507 = vunpack.c.l.b16 %v1348
        %v1508 = vunpack.c.h.b16 %v1348
        %v1509 = vunpack.c.l.b16 %v1349
        %v1510 = vunpack.c.h.b16 %v1349
        %v1511 = vunpack.c.l.b16 %v1350
        %v1512 = vunpack.c.h.b16 %v1350
        %v1513 = vunpack.c.l.b16 %v1351
        %v1514 = vunpack.c.h.b16 %v1351
        %v1515 = vunpack.c.l.b16 %v1352
        %v1516 = vunpack.c.h.b16 %v1352
        %v1517 = vunpack.c.l.b16 %v1353
        %v1518 = vunpack.c.h.b16 %v1353
        %v1519 = vunpack.c.l.b16 %v1354
        %v1520 = vunpack.c.h.b16 %v1354
        %v1521 = vunpack.c.l.b16 %v1355
        %v1522 = vunpack.c.h.b16 %v1355
        %v1523 = vunpack.c.l.b16 %v1356
        %v1524 = vunpack.c.h.b16 %v1356
        %v1525 = vunpack.c.l.b16 %v1357
        %v1526 = vunpack.c.h.b16 %v1357
        %v1527 = vunpack.c.l.b16 %v1358
        %v1528 = vunpack.c.h.b16 %v1358
        %v1529 = vunpack.c.l.b16 %v1359
        %v1530 = vunpack.c.h.b16 %v1359
        %v1531 = vunpack.c.l.b16 %v1360
        %v1532 = vunpack.c.h.b16 %v1360
        %v1533 = vunpack.c.l.b16 %v1361
        %v1534 = vunpack.c.h.b16 %v1361
        %v1535 = vunpack.c.l.b16 %v1362
        %v1536 = vunpack.c.h.b16 %v1362
        %v1537 = vunpack.c.l.b16 %v1363
        %v1538 = vunpack.c.h.b16 %v1363
        %v1539 = vunpack.c.l.b16 %v1364
        %v1540 = vunpack.c.h.b16 %v1364
        %v1541 = vunpack.c.l.b16 %v1365
        %v1542 = vunpack.c.h.b16 %v1365
        %v1543 = vunpack.c.l.b16 %v1366
        %v1544 = vunpack.c.h.b16 %v1366
        %v1545 = vunpack.c.l.b16 %v1367
        %v1546 = vunpack.c.h.b16 %v1367
        %v1547 = vunpack.c.l.b16 %v1368
        %v1548 = vunpack.c.h.b16 %v1368
        %v1549 = vunpack.c.l.b16 %v1369
        %v1550 = vunpack.c.h.b16 %v1369
        %v1551 = vunpack.c.l.b16 %v1370
        %v1552 = vunpack.c.h.b16 %v1370
        %v1553 = vunpack.c.l.b16 %v1371
        %v1554 = vunpack.c.h.b16 %v1371
        %v1555 = vunpack.c.l.b16 %v1372
        %v1556 = vunpack.c.h.b16 %v1372
        %v1557 = vunpack.c.l.b16 %v1373
        %v1558 = vunpack.c.h.b16 %v1373
        %v1559 = vunpack.c.l.b16 %v1374
        %v1560 = vunpack.c.h.b16 %v1374
        %v1561 = vunpack.c.l.b16 %v1375
        %v1562 = vunpack.c.h.b16 %v1375
        %v1563 = vunpack.c.l.b16 %v1376
        %v1564 = vunpack.c.h.b16 %v1376
        %v1565 = vunpack.c.l.b16 %v1377
        %v1566 = vunpack.c.h.b16 %v1377
        %v1567 = vunpack.c.l.b16 %v1378
        %v1568 = vunpack.c.h.b16 %v1378
        %v1569 = vunpack.c.l.b16 %v1379
        %v1570 = vunpack.c.h.b16 %v1379
        %v1571 = vunpack.c.l.b16 %v1380
        %v1572 = vunpack.c.h.b16 %v1380
        %v1573 = vunpack.c.l.b16 %v1381
        %v1574 = vunpack.c.h.b16 %v1381
        %v1575 = vunpack.c.l.b16 %v1382
        %v1576 = vunpack.c.h.b16 %v1382
        %v1577 = vunpack.c.l.b16 %v1383
        %v1578 = vunpack.c.h.b16 %v1383
        %v1579 = vunpack.c.l.b16 %v1384
        %v1580 = vunpack.c.h.b16 %v1384
        %v1581 = vunpack.c.l.b16 %v1385
        %v1582 = vunpack.c.h.b16 %v1385
        %v1583 = vunpack.c.l.b16 %v1386
        %v1584 = vunpack.c.h.b16 %v1386
        %v1585 = vunpack.c.l.b16 %v1387
        %v1586 = vunpack.c.h.b16 %v1387
        %v1587 = vunpack.c.l.b16 %v1388
        %v1588 = vunpack.c.h.b16 %v1388
        %v1589 = vunpack.c.l.b16 %v1389
        %v1590 = vunpack.c.h.b16 %v1389
        %v1591 = vunpack.c.l.b16 %v1390
        %v1592 = vunpack.c.h.b16 %v1390
        %v1593 = vpack.c.b16 %v1469, %v1465
        %v1594 = vpack.c.b16 %v1470, %v1466
        %v1595 = vpack.c.b16 %v1471, %v1467
        %v1596 = vpack.c.b16 %v1472, %v1468
        %v1597 = vpack.c.b16 %v1477, %v1473
        %v1598 = vpack.c.b16 %v1478, %v1474
        %v1599 = vpack.c.b16 %v1479, %v1475
        %v1600 = vpack.c.b16 %v1480, %v1476
        %v1601 = vpack.c.b16 %v1485, %v1481
        %v1602 = vpack.c.b16 %v1486, %v1482
        %v1603 = vpack.c.b16 %v1487, %v1483
        %v1604 = vpack.c.b16 %v1488, %v1484
        %v1605 = vpack.c.b16 %v1493, %v1489
        %v1606 = vpack.c.b16 %v1494, %v1490
        %v1607 = vpack.c.b16 %v1495, %v1491
        %v1608 = vpack.c.b16 %v1496, %v1492
        %v1609 = vpack.c.b16 %v1501, %v1497
        %v1610 = vpack.c.b16 %v1502, %v1498
        %v1611 = vpack.c.b16 %v1503, %v1499
        %v1612 = vpack.c.b16 %v1504, %v1500
        %v1613 = vpack.c.b16 %v1509, %v1505
        %v1614 = vpack.c.b16 %v1510, %v1506
        %v1615 = vpack.c.b16 %v1511, %v1507
        %v1616 = vpack.c.b16 %v1512, %v1508
        %v1617 = vpack.c.b16 %v1517, %v1513
        %v1618 = vpack.c.b16 %v1518, %v1514
        %v1619 = vpack.c.b16 %v1519, %v1515
        %v1620 = vpack.c.b16 %v1520, %v1516
        %v1621 = vpack.c.b16 %v1525, %v1521
        %v1622 = vpack.c.b16 %v1526, %v1522
        %v1623 = vpack.c.b16 %v1527, %v1523
        %v1624 = vpack.c.b16 %v1528, %v1524
        %v1625 = vpack.c.b16 %v1533, %v1529
        %v1626 = vpack.c.b16 %v1534, %v1530
        %v1627 = vpack.c.b16 %v1535, %v1531
        %v1628 = vpack.c.b16 %v1536, %v1532
        %v1629 = vpack.c.b16 %v1541, %v1537
        %v1630 = vpack.c.b16 %v1542, %v1538
        %v1631 = vpack.c.b16 %v1543, %v1539
        %v1632 = vpack.c.b16 %v1544, %v1540
        %v1633 = vpack.c.b16 %v1549, %v1545
        %v1634 = vpack.c.b16 %v1550, %v1546
        %v1635 = vpack.c.b16 %v1551, %v1547
        %v1636 = vpack.c.b16 %v1552, %v1548
        %v1637 = vpack.c.b16 %v1557, %v1553
        %v1638 = vpack.c.b16 %v1558, %v1554
        %v1639 = vpack.c.b16 %v1559, %v1555
        %v1640 = vpack.c.b16 %v1560, %v1556
        %v1641 = vpack.c.b16 %v1565, %v1561
        %v1642 = vpack.c.b16 %v1566, %v1562
        %v1643 = vpack.c.b16 %v1567, %v1563
        %v1644 = vpack.c.b16 %v1568, %v1564
        %v1645 = vpack.c.b16 %v1573, %v1569
        %v1646 = vpack.c.b16 %v1574, %v1570
        %v1647 = vpack.c.b16 %v1575, %v1571
        %v1648 = vpack.c.b16 %v1576, %v1572
        %v1649 = vpack.c.b16 %v1581, %v1577
        %v1650 = vpack.c.b16 %v1582, %v1578
        %v1651 = vpack.c.b16 %v1583, %v1579
        %v1652 = vpack.c.b16 %v1584, %v1580
        %v1653 = vpack.c.b16 %v1589, %v1585
        %v1654 = vpack.c.b16 %v1590, %v1586
        %v1655 = vpack.c.b16 %v1591, %v1587
        %v1656 = vpack.c.b16 %v1592, %v1588
        %1721 = vmatpush.bf16.msra.mxu0 %v1621
        %1722 = vmatpush.bf16.msra.mxu0 %v1617
        %1723 = vmatpush.bf16.msra.mxu0 %v1613
        %1724 = vmatpush.bf16.msra.mxu0 %v1609
        %1725 = vmatpush.bf16.msra.mxu0 %v1605
        %1726 = vmatpush.bf16.msra.mxu0 %v1601
        %1727 = vmatpush.bf16.msra.mxu0 %v1597
        %1728 = vmatpush.bf16.msra.mxu0 %v1593
        %1729 = vmatmul.bf16.gmra.mxu0 %v583
        %v1730 = vpop.f32.mrf.mxu0
        %v1731 = vadd.f32 %v1393, %v1730
        %v1732 = vpop.f32.mrf.mxu0
        %v1733 = vadd.f32 %v1393, %v1732
        %1734 = vmatmul.bf16.gmra.mxu0 %v585
        %v1735 = vpop.f32.mrf.mxu0
        %v1736 = vadd.f32 %v1393, %v1735
        %v1737 = vpop.f32.mrf.mxu0
        %v1738 = vadd.f32 %v1393, %v1737
        %1739 = vmatmul.bf16.gmra.mxu0 %v587
        %v1740 = vpop.f32.mrf.mxu0
        %v1741 = vadd.f32 %v1393, %v1740
        %v1742 = vpop.f32.mrf.mxu0
        %v1743 = vadd.f32 %v1393, %v1742
        %1744 = vmatmul.bf16.gmra.mxu0 %v589
        %v1745 = vpop.f32.mrf.mxu0
        %v1746 = vadd.f32 %v1393, %v1745
        %v1747 = vpop.f32.mrf.mxu0
        %v1748 = vadd.f32 %v1393, %v1747
        %1749 = vmatmul.bf16.gmra.mxu0 %v591
        %v1750 = vpop.f32.mrf.mxu0
        %v1751 = vadd.f32 %v1393, %v1750
        %v1752 = vpop.f32.mrf.mxu0
        %v1753 = vadd.f32 %v1393, %v1752
        %1754 = vmatmul.bf16.gmra.mxu0 %v593
        %v1755 = vpop.f32.mrf.mxu0
        %v1756 = vadd.f32 %v1393, %v1755
        %v1757 = vpop.f32.mrf.mxu0
        %v1758 = vadd.f32 %v1393, %v1757
        %1759 = vmatmul.bf16.gmra.mxu0 %v595
        %v1760 = vpop.f32.mrf.mxu0
        %v1761 = vadd.f32 %v1393, %v1760
        %v1762 = vpop.f32.mrf.mxu0
        %v1763 = vadd.f32 %v1393, %v1762
        %1764 = vmatmul.bf16.gmra.mxu0 %v597
        %v1765 = vpop.f32.mrf.mxu0
        %v1766 = vadd.f32 %v1393, %v1765
        %v1767 = vpop.f32.mrf.mxu0
        %v1768 = vadd.f32 %v1393, %v1767
        %1769 = vdwg.mxu0
        %1770 = vmatpush.bf16.msra.mxu0 %v1653
        %1771 = vmatpush.bf16.msra.mxu0 %v1649
        %1772 = vmatpush.bf16.msra.mxu0 %v1645
        %1773 = vmatpush.bf16.msra.mxu0 %v1641
        %1774 = vmatpush.bf16.msra.mxu0 %v1637
        %1775 = vmatpush.bf16.msra.mxu0 %v1633
        %1776 = vmatpush.bf16.msra.mxu0 %v1629
        %1777 = vmatpush.bf16.msra.mxu0 %v1625
        %1778 = vmatmul.bf16.gmra.mxu0 %v584
        %v1779 = vpop.f32.mrf.mxu0
        %v1780 = vadd.f32 %v1731, %v1779
        %v1781 = vpop.f32.mrf.mxu0
        %v1782 = vadd.f32 %v1733, %v1781
        %1783 = vmatmul.bf16.gmra.mxu0 %v586
        %v1784 = vpop.f32.mrf.mxu0
        %v1785 = vadd.f32 %v1736, %v1784
        %v1786 = vpop.f32.mrf.mxu0
        %v1787 = vadd.f32 %v1738, %v1786
        %1788 = vmatmul.bf16.gmra.mxu0 %v588
        %v1789 = vpop.f32.mrf.mxu0
        %v1790 = vadd.f32 %v1741, %v1789
        %v1791 = vpop.f32.mrf.mxu0
        %v1792 = vadd.f32 %v1743, %v1791
        %1793 = vmatmul.bf16.gmra.mxu0 %v590
        %v1794 = vpop.f32.mrf.mxu0
        %v1795 = vadd.f32 %v1746, %v1794
        %v1796 = vpop.f32.mrf.mxu0
        %v1797 = vadd.f32 %v1748, %v1796
        %1798 = vmatmul.bf16.gmra.mxu0 %v592
        %v1799 = vpop.f32.mrf.mxu0
        %v1800 = vadd.f32 %v1751, %v1799
        %v1801 = vpop.f32.mrf.mxu0
        %v1802 = vadd.f32 %v1753, %v1801
        %1803 = vmatmul.bf16.gmra.mxu0 %v594
        %v1804 = vpop.f32.mrf.mxu0
        %v1805 = vadd.f32 %v1756, %v1804
        %v1806 = vpop.f32.mrf.mxu0
        %v1807 = vadd.f32 %v1758, %v1806
        %1808 = vmatmul.bf16.gmra.mxu0 %v596
        %v1809 = vpop.f32.mrf.mxu0
        %v1810 = vadd.f32 %v1761, %v1809
        %v1811 = vpop.f32.mrf.mxu0
        %v1812 = vadd.f32 %v1763, %v1811
        %1813 = vmatmul.bf16.gmra.mxu0 %v598
        %v1814 = vpop.f32.mrf.mxu0
        %v1815 = vadd.f32 %v1766, %v1814
        %v1816 = vpop.f32.mrf.mxu0
        %v1817 = vadd.f32 %v1768, %v1816
        %1818 = vdwg.mxu0
        %1819 = vmatpush.bf16.msra.mxu0 %v1622
        %1820 = vmatpush.bf16.msra.mxu0 %v1618
        %1821 = vmatpush.bf16.msra.mxu0 %v1614
        %1822 = vmatpush.bf16.msra.mxu0 %v1610
        %1823 = vmatpush.bf16.msra.mxu0 %v1606
        %1824 = vmatpush.bf16.msra.mxu0 %v1602
        %1825 = vmatpush.bf16.msra.mxu0 %v1598
        %1826 = vmatpush.bf16.msra.mxu0 %v1594
        %1827 = vmatmul.bf16.gmra.mxu0 %v583
        %v1828 = vpop.f32.mrf.mxu0
        %v1829 = vadd.f32 %v1394, %v1828
        %v1830 = vpop.f32.mrf.mxu0
        %v1831 = vadd.f32 %v1394, %v1830
        %1832 = vmatmul.bf16.gmra.mxu0 %v585
        %v1833 = vpop.f32.mrf.mxu0
        %v1834 = vadd.f32 %v1394, %v1833
        %v1835 = vpop.f32.mrf.mxu0
        %v1836 = vadd.f32 %v1394, %v1835
        %1837 = vmatmul.bf16.gmra.mxu0 %v587
        %v1838 = vpop.f32.mrf.mxu0
        %v1839 = vadd.f32 %v1394, %v1838
        %v1840 = vpop.f32.mrf.mxu0
        %v1841 = vadd.f32 %v1394, %v1840
        %1842 = vmatmul.bf16.gmra.mxu0 %v589
        %v1843 = vpop.f32.mrf.mxu0
        %v1844 = vadd.f32 %v1394, %v1843
        %v1845 = vpop.f32.mrf.mxu0
        %v1846 = vadd.f32 %v1394, %v1845
        %1847 = vmatmul.bf16.gmra.mxu0 %v591
        %v1848 = vpop.f32.mrf.mxu0
        %v1849 = vadd.f32 %v1394, %v1848
        %v1850 = vpop.f32.mrf.mxu0
        %v1851 = vadd.f32 %v1394, %v1850
        %1852 = vmatmul.bf16.gmra.mxu0 %v593
        %v1853 = vpop.f32.mrf.mxu0
        %v1854 = vadd.f32 %v1394, %v1853
        %v1855 = vpop.f32.mrf.mxu0
        %v1856 = vadd.f32 %v1394, %v1855
        %1857 = vmatmul.bf16.gmra.mxu0 %v595
        %v1858 = vpop.f32.mrf.mxu0
        %v1859 = vadd.f32 %v1394, %v1858
        %v1860 = vpop.f32.mrf.mxu0
        %v1861 = vadd.f32 %v1394, %v1860
        %1862 = vmatmul.bf16.gmra.mxu0 %v597
        %v1863 = vpop.f32.mrf.mxu0
        %v1864 = vadd.f32 %v1394, %v1863
        %v1865 = vpop.f32.mrf.mxu0
        %v1866 = vadd.f32 %v1394, %v1865
        %1867 = vdwg.mxu0
        %1868 = vmatpush.bf16.msra.mxu0 %v1654
        %1869 = vmatpush.bf16.msra.mxu0 %v1650
        %1870 = vmatpush.bf16.msra.mxu0 %v1646
        %1871 = vmatpush.bf16.msra.mxu0 %v1642
        %1872 = vmatpush.bf16.msra.mxu0 %v1638
        %1873 = vmatpush.bf16.msra.mxu0 %v1634
        %1874 = vmatpush.bf16.msra.mxu0 %v1630
        %1875 = vmatpush.bf16.msra.mxu0 %v1626
        %1876 = vmatmul.bf16.gmra.mxu0 %v584
        %v1877 = vpop.f32.mrf.mxu0
        %v1878 = vadd.f32 %v1829, %v1877
        %v1879 = vpop.f32.mrf.mxu0
        %v1880 = vadd.f32 %v1831, %v1879
        %1881 = vmatmul.bf16.gmra.mxu0 %v586
        %v1882 = vpop.f32.mrf.mxu0
        %v1883 = vadd.f32 %v1834, %v1882
        %v1884 = vpop.f32.mrf.mxu0
        %v1885 = vadd.f32 %v1836, %v1884
        %1886 = vmatmul.bf16.gmra.mxu0 %v588
        %v1887 = vpop.f32.mrf.mxu0
        %v1888 = vadd.f32 %v1839, %v1887
        %v1889 = vpop.f32.mrf.mxu0
        %v1890 = vadd.f32 %v1841, %v1889
        %1891 = vmatmul.bf16.gmra.mxu0 %v590
        %v1892 = vpop.f32.mrf.mxu0
        %v1893 = vadd.f32 %v1844, %v1892
        %v1894 = vpop.f32.mrf.mxu0
        %v1895 = vadd.f32 %v1846, %v1894
        %1896 = vmatmul.bf16.gmra.mxu0 %v592
        %v1897 = vpop.f32.mrf.mxu0
        %v1898 = vadd.f32 %v1849, %v1897
        %v1899 = vpop.f32.mrf.mxu0
        %v1900 = vadd.f32 %v1851, %v1899
        %1901 = vmatmul.bf16.gmra.mxu0 %v594
        %v1902 = vpop.f32.mrf.mxu0
        %v1903 = vadd.f32 %v1854, %v1902
        %v1904 = vpop.f32.mrf.mxu0
        %v1905 = vadd.f32 %v1856, %v1904
        %1906 = vmatmul.bf16.gmra.mxu0 %v596
        %v1907 = vpop.f32.mrf.mxu0
        %v1908 = vadd.f32 %v1859, %v1907
        %v1909 = vpop.f32.mrf.mxu0
        %v1910 = vadd.f32 %v1861, %v1909
        %1911 = vmatmul.bf16.gmra.mxu0 %v598
        %v1912 = vpop.f32.mrf.mxu0
        %v1913 = vadd.f32 %v1864, %v1912
        %v1914 = vpop.f32.mrf.mxu0
        %v1915 = vadd.f32 %v1866, %v1914
        %1916 = vdwg.mxu0
        %1917 = vmatpush.bf16.msra.mxu0 %v1623
        %1918 = vmatpush.bf16.msra.mxu0 %v1619
        %1919 = vmatpush.bf16.msra.mxu0 %v1615
        %1920 = vmatpush.bf16.msra.mxu0 %v1611
        %1921 = vmatpush.bf16.msra.mxu0 %v1607
        %1922 = vmatpush.bf16.msra.mxu0 %v1603
        %1923 = vmatpush.bf16.msra.mxu0 %v1599
        %1924 = vmatpush.bf16.msra.mxu0 %v1595
        %1925 = vmatmul.bf16.gmra.mxu0 %v583
        %v1926 = vpop.f32.mrf.mxu0
        %v1927 = vadd.f32 %v1395, %v1926
        %v1928 = vpop.f32.mrf.mxu0
        %v1929 = vadd.f32 %v1395, %v1928
        %1930 = vmatmul.bf16.gmra.mxu0 %v585
        %v1931 = vpop.f32.mrf.mxu0
        %v1932 = vadd.f32 %v1395, %v1931
        %v1933 = vpop.f32.mrf.mxu0
        %v1934 = vadd.f32 %v1395, %v1933
        %1935 = vmatmul.bf16.gmra.mxu0 %v587
        %v1936 = vpop.f32.mrf.mxu0
        %v1937 = vadd.f32 %v1395, %v1936
        %v1938 = vpop.f32.mrf.mxu0
        %v1939 = vadd.f32 %v1395, %v1938
        %1940 = vmatmul.bf16.gmra.mxu0 %v589
        %v1941 = vpop.f32.mrf.mxu0
        %v1942 = vadd.f32 %v1395, %v1941
        %v1943 = vpop.f32.mrf.mxu0
        %v1944 = vadd.f32 %v1395, %v1943
        %1945 = vmatmul.bf16.gmra.mxu0 %v591
        %v1946 = vpop.f32.mrf.mxu0
        %v1947 = vadd.f32 %v1395, %v1946
        %v1948 = vpop.f32.mrf.mxu0
        %v1949 = vadd.f32 %v1395, %v1948
        %1950 = vmatmul.bf16.gmra.mxu0 %v593
        %v1951 = vpop.f32.mrf.mxu0
        %v1952 = vadd.f32 %v1395, %v1951
        %v1953 = vpop.f32.mrf.mxu0
        %v1954 = vadd.f32 %v1395, %v1953
        %1955 = vmatmul.bf16.gmra.mxu0 %v595
        %v1956 = vpop.f32.mrf.mxu0
        %v1957 = vadd.f32 %v1395, %v1956
        %v1958 = vpop.f32.mrf.mxu0
        %v1959 = vadd.f32 %v1395, %v1958
        %1960 = vmatmul.bf16.gmra.mxu0 %v597
        %v1961 = vpop.f32.mrf.mxu0
        %v1962 = vadd.f32 %v1395, %v1961
        %v1963 = vpop.f32.mrf.mxu0
        %v1964 = vadd.f32 %v1395, %v1963
        %1965 = vdwg.mxu0
        %1966 = vmatpush.bf16.msra.mxu0 %v1655
        %1967 = vmatpush.bf16.msra.mxu0 %v1651
        %1968 = vmatpush.bf16.msra.mxu0 %v1647
        %1969 = vmatpush.bf16.msra.mxu0 %v1643
        %1970 = vmatpush.bf16.msra.mxu0 %v1639
        %1971 = vmatpush.bf16.msra.mxu0 %v1635
        %1972 = vmatpush.bf16.msra.mxu0 %v1631
        %1973 = vmatpush.bf16.msra.mxu0 %v1627
        %1974 = vmatmul.bf16.gmra.mxu0 %v584
        %v1975 = vpop.f32.mrf.mxu0
        %v1976 = vadd.f32 %v1927, %v1975
        %v1977 = vpop.f32.mrf.mxu0
        %v1978 = vadd.f32 %v1929, %v1977
        %1979 = vmatmul.bf16.gmra.mxu0 %v586
        %v1980 = vpop.f32.mrf.mxu0
        %v1981 = vadd.f32 %v1932, %v1980
        %v1982 = vpop.f32.mrf.mxu0
        %v1983 = vadd.f32 %v1934, %v1982
        %1984 = vmatmul.bf16.gmra.mxu0 %v588
        %v1985 = vpop.f32.mrf.mxu0
        %v1986 = vadd.f32 %v1937, %v1985
        %v1987 = vpop.f32.mrf.mxu0
        %v1988 = vadd.f32 %v1939, %v1987
        %1989 = vmatmul.bf16.gmra.mxu0 %v590
        %v1990 = vpop.f32.mrf.mxu0
        %v1991 = vadd.f32 %v1942, %v1990
        %v1992 = vpop.f32.mrf.mxu0
        %v1993 = vadd.f32 %v1944, %v1992
        %1994 = vmatmul.bf16.gmra.mxu0 %v592
        %v1995 = vpop.f32.mrf.mxu0
        %v1996 = vadd.f32 %v1947, %v1995
        %v1997 = vpop.f32.mrf.mxu0
        %v1998 = vadd.f32 %v1949, %v1997
        %1999 = vmatmul.bf16.gmra.mxu0 %v594
        %v2000 = vpop.f32.mrf.mxu0
        %v2001 = vadd.f32 %v1952, %v2000
        %v2002 = vpop.f32.mrf.mxu0
        %v2003 = vadd.f32 %v1954, %v2002
        %2004 = vmatmul.bf16.gmra.mxu0 %v596
        %v2005 = vpop.f32.mrf.mxu0
        %v2006 = vadd.f32 %v1957, %v2005
        %v2007 = vpop.f32.mrf.mxu0
        %v2008 = vadd.f32 %v1959, %v2007
        %2009 = vmatmul.bf16.gmra.mxu0 %v598
        %v2010 = vpop.f32.mrf.mxu0
        %v2011 = vadd.f32 %v1962, %v2010
        %v2012 = vpop.f32.mrf.mxu0
        %v2013 = vadd.f32 %v1964, %v2012
        %2014 = vdwg.mxu0
        %2015 = vmatpush.bf16.msra.mxu0 %v1624
        %2016 = vmatpush.bf16.msra.mxu0 %v1620
        %2017 = vmatpush.bf16.msra.mxu0 %v1616
        %2018 = vmatpush.bf16.msra.mxu0 %v1612
        %2019 = vmatpush.bf16.msra.mxu0 %v1608
        %2020 = vmatpush.bf16.msra.mxu0 %v1604
        %2021 = vmatpush.bf16.msra.mxu0 %v1600
        %2022 = vmatpush.bf16.msra.mxu0 %v1596
        %2023 = vmatmul.bf16.gmra.mxu0 %v583
        %v2024 = vpop.f32.mrf.mxu0
        %v2025 = vadd.f32 %v1396, %v2024
        %v2026 = vpop.f32.mrf.mxu0
        %v2027 = vadd.f32 %v1396, %v2026
        %2028 = vmatmul.bf16.gmra.mxu0 %v585
        %v2029 = vpop.f32.mrf.mxu0
        %v2030 = vadd.f32 %v1396, %v2029
        %v2031 = vpop.f32.mrf.mxu0
        %v2032 = vadd.f32 %v1396, %v2031
        %2033 = vmatmul.bf16.gmra.mxu0 %v587
        %v2034 = vpop.f32.mrf.mxu0
        %v2035 = vadd.f32 %v1396, %v2034
        %v2036 = vpop.f32.mrf.mxu0
        %v2037 = vadd.f32 %v1396, %v2036
        %2038 = vmatmul.bf16.gmra.mxu0 %v589
        %v2039 = vpop.f32.mrf.mxu0
        %v2040 = vadd.f32 %v1396, %v2039
        %v2041 = vpop.f32.mrf.mxu0
        %v2042 = vadd.f32 %v1396, %v2041
        %2043 = vmatmul.bf16.gmra.mxu0 %v591
        %v2044 = vpop.f32.mrf.mxu0
        %v2045 = vadd.f32 %v1396, %v2044
        %v2046 = vpop.f32.mrf.mxu0
        %v2047 = vadd.f32 %v1396, %v2046
        %2048 = vmatmul.bf16.gmra.mxu0 %v593
        %v2049 = vpop.f32.mrf.mxu0
        %v2050 = vadd.f32 %v1396, %v2049
        %v2051 = vpop.f32.mrf.mxu0
        %v2052 = vadd.f32 %v1396, %v2051
        %2053 = vmatmul.bf16.gmra.mxu0 %v595
        %v2054 = vpop.f32.mrf.mxu0
        %v2055 = vadd.f32 %v1396, %v2054
        %v2056 = vpop.f32.mrf.mxu0
        %v2057 = vadd.f32 %v1396, %v2056
        %2058 = vmatmul.bf16.gmra.mxu0 %v597
        %v2059 = vpop.f32.mrf.mxu0
        %v2060 = vadd.f32 %v1396, %v2059
        %v2061 = vpop.f32.mrf.mxu0
        %v2062 = vadd.f32 %v1396, %v2061
        %2063 = vdwg.mxu0
        %2064 = vmatpush.bf16.msra.mxu0 %v1656
        %2065 = vmatpush.bf16.msra.mxu0 %v1652
        %2066 = vmatpush.bf16.msra.mxu0 %v1648
        %2067 = vmatpush.bf16.msra.mxu0 %v1644
        %2068 = vmatpush.bf16.msra.mxu0 %v1640
        %2069 = vmatpush.bf16.msra.mxu0 %v1636
        %2070 = vmatpush.bf16.msra.mxu0 %v1632
        %2071 = vmatpush.bf16.msra.mxu0 %v1628
        %2072 = vmatmul.bf16.gmra.mxu0 %v584
        %v2073 = vpop.f32.mrf.mxu0
        %v2074 = vadd.f32 %v2025, %v2073
        %v2075 = vpop.f32.mrf.mxu0
        %v2076 = vadd.f32 %v2027, %v2075
        %2077 = vmatmul.bf16.gmra.mxu0 %v586
        %v2078 = vpop.f32.mrf.mxu0
        %v2079 = vadd.f32 %v2030, %v2078
        %v2080 = vpop.f32.mrf.mxu0
        %v2081 = vadd.f32 %v2032, %v2080
        %2082 = vmatmul.bf16.gmra.mxu0 %v588
        %v2083 = vpop.f32.mrf.mxu0
        %v2084 = vadd.f32 %v2035, %v2083
        %v2085 = vpop.f32.mrf.mxu0
        %v2086 = vadd.f32 %v2037, %v2085
        %2087 = vmatmul.bf16.gmra.mxu0 %v590
        %v2088 = vpop.f32.mrf.mxu0
        %v2089 = vadd.f32 %v2040, %v2088
        %v2090 = vpop.f32.mrf.mxu0
        %v2091 = vadd.f32 %v2042, %v2090
        %2092 = vmatmul.bf16.gmra.mxu0 %v592
        %v2093 = vpop.f32.mrf.mxu0
        %v2094 = vadd.f32 %v2045, %v2093
        %v2095 = vpop.f32.mrf.mxu0
        %v2096 = vadd.f32 %v2047, %v2095
        %2097 = vmatmul.bf16.gmra.mxu0 %v594
        %v2098 = vpop.f32.mrf.mxu0
        %v2099 = vadd.f32 %v2050, %v2098
        %v2100 = vpop.f32.mrf.mxu0
        %v2101 = vadd.f32 %v2052, %v2100
        %2102 = vmatmul.bf16.gmra.mxu0 %v596
        %v2103 = vpop.f32.mrf.mxu0
        %v2104 = vadd.f32 %v2055, %v2103
        %v2105 = vpop.f32.mrf.mxu0
        %v2106 = vadd.f32 %v2057, %v2105
        %2107 = vmatmul.bf16.gmra.mxu0 %v598
        %v2108 = vpop.f32.mrf.mxu0
        %v2109 = vadd.f32 %v2060, %v2108
        %v2110 = vpop.f32.mrf.mxu0
        %v2111 = vadd.f32 %v2062, %v2110
        %2112 = vdwg.mxu0
        %v2113 = vxor.u32 %v994, 2147483648
        %v2114 = vxor.u32 %v1092, 2147483648
        %v2115 = vxor.u32 %v1190, 2147483648
        %v2116 = vxor.u32 %v1288, 2147483648
        %v2117 = vxor.u32 %v996, 2147483648
        %v2118 = vxor.u32 %v1094, 2147483648
        %v2119 = vxor.u32 %v1192, 2147483648
        %v2120 = vxor.u32 %v1290, 2147483648
        %v2121 = vxor.u32 %v999, 2147483648
        %v2122 = vxor.u32 %v1097, 2147483648
        %v2123 = vxor.u32 %v1195, 2147483648
        %v2124 = vxor.u32 %v1293, 2147483648
        %v2125 = vxor.u32 %v1001, 2147483648
        %v2126 = vxor.u32 %v1099, 2147483648
        %v2127 = vxor.u32 %v1197, 2147483648
        %v2128 = vxor.u32 %v1295, 2147483648
        %v2129 = vxor.u32 %v1004, 2147483648
        %v2130 = vxor.u32 %v1102, 2147483648
        %v2131 = vxor.u32 %v1200, 2147483648
        %v2132 = vxor.u32 %v1298, 2147483648
        %v2133 = vxor.u32 %v1006, 2147483648
        %v2134 = vxor.u32 %v1104, 2147483648
        %v2135 = vxor.u32 %v1202, 2147483648
        %v2136 = vxor.u32 %v1300, 2147483648
        %v2137 = vxor.u32 %v1009, 2147483648
        %v2138 = vxor.u32 %v1107, 2147483648
        %v2139 = vxor.u32 %v1205, 2147483648
        %v2140 = vxor.u32 %v1303, 2147483648
        %v2141 = vxor.u32 %v1011, 2147483648
        %v2142 = vxor.u32 %v1109, 2147483648
        %v2143 = vxor.u32 %v1207, 2147483648
        %v2144 = vxor.u32 %v1305, 2147483648
        %v2145 = vxor.u32 %v1014, 2147483648
        %v2146 = vxor.u32 %v1112, 2147483648
        %v2147 = vxor.u32 %v1210, 2147483648
        %v2148 = vxor.u32 %v1308, 2147483648
        %v2149 = vxor.u32 %v1016, 2147483648
        %v2150 = vxor.u32 %v1114, 2147483648
        %v2151 = vxor.u32 %v1212, 2147483648
        %v2152 = vxor.u32 %v1310, 2147483648
        %v2153 = vxor.u32 %v1019, 2147483648
        %v2154 = vxor.u32 %v1117, 2147483648
        %v2155 = vxor.u32 %v1215, 2147483648
        %v2156 = vxor.u32 %v1313, 2147483648
        %v2157 = vxor.u32 %v1021, 2147483648
        %v2158 = vxor.u32 %v1119, 2147483648
        %v2159 = vxor.u32 %v1217, 2147483648
        %v2160 = vxor.u32 %v1315, 2147483648
        %v2161 = vxor.u32 %v1024, 2147483648
        %v2162 = vxor.u32 %v1122, 2147483648
        %v2163 = vxor.u32 %v1220, 2147483648
        %v2164 = vxor.u32 %v1318, 2147483648
        %v2165 = vxor.u32 %v1026, 2147483648
        %v2166 = vxor.u32 %v1124, 2147483648
        %v2167 = vxor.u32 %v1222, 2147483648
        %v2168 = vxor.u32 %v1320, 2147483648
        %v2169 = vxor.u32 %v1029, 2147483648
        %v2170 = vxor.u32 %v1127, 2147483648
        %v2171 = vxor.u32 %v1225, 2147483648
        %v2172 = vxor.u32 %v1323, 2147483648
        %v2173 = vxor.u32 %v1031, 2147483648
        %v2174 = vxor.u32 %v1129, 2147483648
        %v2175 = vxor.u32 %v1227, 2147483648
        %v2176 = vxor.u32 %v1325, 2147483648
        %v2177 = vmul.f32 %v2113, 1.442695
        %v2178 = vpow.pop %v2177
        %v2179 = vmul.f32 %v2114, 1.442695
        %v2180 = vpow.pop %v2179
        %v2181 = vmul.f32 %v2115, 1.442695
        %v2182 = vpow.pop %v2181
        %v2183 = vmul.f32 %v2116, 1.442695
        %v2184 = vpow.pop %v2183
        %v2185 = vmul.f32 %v2117, 1.442695
        %v2186 = vpow.pop %v2185
        %v2187 = vmul.f32 %v2118, 1.442695
        %v2188 = vpow.pop %v2187
        %v2189 = vmul.f32 %v2119, 1.442695
        %v2190 = vpow.pop %v2189
        %v2191 = vmul.f32 %v2120, 1.442695
        %v2192 = vpow.pop %v2191
        %v2193 = vmul.f32 %v2121, 1.442695
        %v2194 = vpow.pop %v2193
        %v2195 = vmul.f32 %v2122, 1.442695
        %v2196 = vpow.pop %v2195
        %v2197 = vmul.f32 %v2123, 1.442695
        %v2198 = vpow.pop %v2197
        %v2199 = vmul.f32 %v2124, 1.442695
        %v2200 = vpow.pop %v2199
        %v2201 = vmul.f32 %v2125, 1.442695
        %v2202 = vpow.pop %v2201
        %v2203 = vmul.f32 %v2126, 1.442695
        %v2204 = vpow.pop %v2203
        %v2205 = vmul.f32 %v2127, 1.442695
        %v2206 = vpow.pop %v2205
        %v2207 = vmul.f32 %v2128, 1.442695
        %v2208 = vpow.pop %v2207
        %v2209 = vmul.f32 %v2129, 1.442695
        %v2210 = vpow.pop %v2209
        %v2211 = vmul.f32 %v2130, 1.442695
        %v2212 = vpow.pop %v2211
        %v2213 = vmul.f32 %v2131, 1.442695
        %v2214 = vpow.pop %v2213
        %v2215 = vmul.f32 %v2132, 1.442695
        %v2216 = vpow.pop %v2215
        %v2217 = vmul.f32 %v2133, 1.442695
        %v2218 = vpow.pop %v2217
        %v2219 = vmul.f32 %v2134, 1.442695
        %v2220 = vpow.pop %v2219
        %v2221 = vmul.f32 %v2135, 1.442695
        %v2222 = vpow.pop %v2221
        %v2223 = vmul.f32 %v2136, 1.442695
        %v2224 = vpow.pop %v2223
        %v2225 = vmul.f32 %v2137, 1.442695
        %v2226 = vpow.pop %v2225
        %v2227 = vmul.f32 %v2138, 1.442695
        %v2228 = vpow.pop %v2227
        %v2229 = vmul.f32 %v2139, 1.442695
        %v2230 = vpow.pop %v2229
        %v2231 = vmul.f32 %v2140, 1.442695
        %v2232 = vpow.pop %v2231
        %v2233 = vmul.f32 %v2141, 1.442695
        %v2234 = vpow.pop %v2233
        %v2235 = vmul.f32 %v2142, 1.442695
        %v2236 = vpow.pop %v2235
        %v2237 = vmul.f32 %v2143, 1.442695
        %v2238 = vpow.pop %v2237
        %v2239 = vmul.f32 %v2144, 1.442695
        %v2240 = vpow.pop %v2239
        %v2241 = vmul.f32 %v2145, 1.442695
        %v2242 = vpow.pop %v2241
        %v2243 = vmul.f32 %v2146, 1.442695
        %v2244 = vpow.pop %v2243
        %v2245 = vmul.f32 %v2147, 1.442695
        %v2246 = vpow.pop %v2245
        %v2247 = vmul.f32 %v2148, 1.442695
        %v2248 = vpow.pop %v2247
        %v2249 = vmul.f32 %v2149, 1.442695
        %v2250 = vpow.pop %v2249
        %v2251 = vmul.f32 %v2150, 1.442695
        %v2252 = vpow.pop %v2251
        %v2253 = vmul.f32 %v2151, 1.442695
        %v2254 = vpow.pop %v2253
        %v2255 = vmul.f32 %v2152, 1.442695
        %v2256 = vpow.pop %v2255
        %v2257 = vmul.f32 %v2153, 1.442695
        %v2258 = vpow.pop %v2257
        %v2259 = vmul.f32 %v2154, 1.442695
        %v2260 = vpow.pop %v2259
        %v2261 = vmul.f32 %v2155, 1.442695
        %v2262 = vpow.pop %v2261
        %v2263 = vmul.f32 %v2156, 1.442695
        %v2264 = vpow.pop %v2263
        %v2265 = vmul.f32 %v2157, 1.442695
        %v2266 = vpow.pop %v2265
        %v2267 = vmul.f32 %v2158, 1.442695
        %v2268 = vpow.pop %v2267
        %v2269 = vmul.f32 %v2159, 1.442695
        %v2270 = vpow.pop %v2269
        %v2271 = vmul.f32 %v2160, 1.442695
        %v2272 = vpow.pop %v2271
        %v2273 = vmul.f32 %v2161, 1.442695
        %v2274 = vpow.pop %v2273
        %v2275 = vmul.f32 %v2162, 1.442695
        %v2276 = vpow.pop %v2275
        %v2277 = vmul.f32 %v2163, 1.442695
        %v2278 = vpow.pop %v2277
        %v2279 = vmul.f32 %v2164, 1.442695
        %v2280 = vpow.pop %v2279
        %v2281 = vmul.f32 %v2165, 1.442695
        %v2282 = vpow.pop %v2281
        %v2283 = vmul.f32 %v2166, 1.442695
        %v2284 = vpow.pop %v2283
        %v2285 = vmul.f32 %v2167, 1.442695
        %v2286 = vpow.pop %v2285
        %v2287 = vmul.f32 %v2168, 1.442695
        %v2288 = vpow.pop %v2287
        %v2289 = vmul.f32 %v2169, 1.442695
        %v2290 = vpow.pop %v2289
        %v2291 = vmul.f32 %v2170, 1.442695
        %v2292 = vpow.pop %v2291
        %v2293 = vmul.f32 %v2171, 1.442695
        %v2294 = vpow.pop %v2293
        %v2295 = vmul.f32 %v2172, 1.442695
        %v2296 = vpow.pop %v2295
        %v2297 = vmul.f32 %v2173, 1.442695
        %v2298 = vpow.pop %v2297
        %v2299 = vmul.f32 %v2174, 1.442695
        %v2300 = vpow.pop %v2299
        %v2301 = vmul.f32 %v2175, 1.442695
        %v2302 = vpow.pop %v2301
        %v2303 = vmul.f32 %v2176, 1.442695
        %v2304 = vpow.pop %v2303
        %v2305 = vadd.f32 %v2178, 1.0
        %v2306 = vadd.f32 %v2180, 1.0
        %v2307 = vadd.f32 %v2182, 1.0
        %v2308 = vadd.f32 %v2184, 1.0
        %v2309 = vadd.f32 %v2186, 1.0
        %v2310 = vadd.f32 %v2188, 1.0
        %v2311 = vadd.f32 %v2190, 1.0
        %v2312 = vadd.f32 %v2192, 1.0
        %v2313 = vadd.f32 %v2194, 1.0
        %v2314 = vadd.f32 %v2196, 1.0
        %v2315 = vadd.f32 %v2198, 1.0
        %v2316 = vadd.f32 %v2200, 1.0
        %v2317 = vadd.f32 %v2202, 1.0
        %v2318 = vadd.f32 %v2204, 1.0
        %v2319 = vadd.f32 %v2206, 1.0
        %v2320 = vadd.f32 %v2208, 1.0
        %v2321 = vadd.f32 %v2210, 1.0
        %v2322 = vadd.f32 %v2212, 1.0
        %v2323 = vadd.f32 %v2214, 1.0
        %v2324 = vadd.f32 %v2216, 1.0
        %v2325 = vadd.f32 %v2218, 1.0
        %v2326 = vadd.f32 %v2220, 1.0
        %v2327 = vadd.f32 %v2222, 1.0
        %v2328 = vadd.f32 %v2224, 1.0
        %v2329 = vadd.f32 %v2226, 1.0
        %v2330 = vadd.f32 %v2228, 1.0
        %v2331 = vadd.f32 %v2230, 1.0
        %v2332 = vadd.f32 %v2232, 1.0
        %v2333 = vadd.f32 %v2234, 1.0
        %v2334 = vadd.f32 %v2236, 1.0
        %v2335 = vadd.f32 %v2238, 1.0
        %v2336 = vadd.f32 %v2240, 1.0
        %v2337 = vadd.f32 %v2242, 1.0
        %v2338 = vadd.f32 %v2244, 1.0
        %v2339 = vadd.f32 %v2246, 1.0
        %v2340 = vadd.f32 %v2248, 1.0
        %v2341 = vadd.f32 %v2250, 1.0
        %v2342 = vadd.f32 %v2252, 1.0
        %v2343 = vadd.f32 %v2254, 1.0
        %v2344 = vadd.f32 %v2256, 1.0
        %v2345 = vadd.f32 %v2258, 1.0
        %v2346 = vadd.f32 %v2260, 1.0
        %v2347 = vadd.f32 %v2262, 1.0
        %v2348 = vadd.f32 %v2264, 1.0
        %v2349 = vadd.f32 %v2266, 1.0
        %v2350 = vadd.f32 %v2268, 1.0
        %v2351 = vadd.f32 %v2270, 1.0
        %v2352 = vadd.f32 %v2272, 1.0
        %v2353 = vadd.f32 %v2274, 1.0
        %v2354 = vadd.f32 %v2276, 1.0
        %v2355 = vadd.f32 %v2278, 1.0
        %v2356 = vadd.f32 %v2280, 1.0
        %v2357 = vadd.f32 %v2282, 1.0
        %v2358 = vadd.f32 %v2284, 1.0
        %v2359 = vadd.f32 %v2286, 1.0
        %v2360 = vadd.f32 %v2288, 1.0
        %v2361 = vadd.f32 %v2290, 1.0
        %v2362 = vadd.f32 %v2292, 1.0
        %v2363 = vadd.f32 %v2294, 1.0
        %v2364 = vadd.f32 %v2296, 1.0
        %v2365 = vadd.f32 %v2298, 1.0
        %v2366 = vadd.f32 %v2300, 1.0
        %v2367 = vadd.f32 %v2302, 1.0
        %v2368 = vadd.f32 %v2304, 1.0
        %v2369 = vrcp.pop %v2305
        %v2370 = vmul.f32 %v2305, %v2369
        %v2371 = vsub.f32 1.0, %v2370
        %v2372 = vmul.f32 %v2369, %v2371
        %v2373 = vadd.f32 %v2369, %v2372
        %vm2374 = vweird.f32 %v2305
        %vm2375 = vweird.f32 %v2369
        %vm2376 = vmor %vm2374, %vm2375
        %v2377 = vsel %vm2376, %v2369, %v2373
        %v2378 = vand.u32 2147483647, %v2305
        %vm2379 = vcmp.eq.f32.partialorder %v2378, 8.507059e+37
        %v2380 = vand.u32 %v2305, 2147483648
        %v2381 = vor.u32 1.1754944e-38, %v2380
        %v2382 = vsel %vm2379, %v2381, %v2377
        %v2383 = vmul.f32 1.0, %v2382
        %v2384 = vrcp.pop %v2306
        %v2385 = vmul.f32 %v2306, %v2384
        %v2386 = vsub.f32 1.0, %v2385
        %v2387 = vmul.f32 %v2384, %v2386
        %v2388 = vadd.f32 %v2384, %v2387
        %vm2389 = vweird.f32 %v2306
        %vm2390 = vweird.f32 %v2384
        %vm2391 = vmor %vm2389, %vm2390
        %v2392 = vsel %vm2391, %v2384, %v2388
        %v2393 = vand.u32 2147483647, %v2306
        %vm2394 = vcmp.eq.f32.partialorder %v2393, 8.507059e+37
        %v2395 = vand.u32 %v2306, 2147483648
        %v2396 = vor.u32 1.1754944e-38, %v2395
        %v2397 = vsel %vm2394, %v2396, %v2392
        %v2398 = vmul.f32 1.0, %v2397
        %v2399 = vrcp.pop %v2307
        %v2400 = vmul.f32 %v2307, %v2399
        %v2401 = vsub.f32 1.0, %v2400
        %v2402 = vmul.f32 %v2399, %v2401
        %v2403 = vadd.f32 %v2399, %v2402
        %vm2404 = vweird.f32 %v2307
        %vm2405 = vweird.f32 %v2399
        %vm2406 = vmor %vm2404, %vm2405
        %v2407 = vsel %vm2406, %v2399, %v2403
        %v2408 = vand.u32 2147483647, %v2307
        %vm2409 = vcmp.eq.f32.partialorder %v2408, 8.507059e+37
        %v2410 = vand.u32 %v2307, 2147483648
        %v2411 = vor.u32 1.1754944e-38, %v2410
        %v2412 = vsel %vm2409, %v2411, %v2407
        %v2413 = vmul.f32 1.0, %v2412
        %v2414 = vrcp.pop %v2308
        %v2415 = vmul.f32 %v2308, %v2414
        %v2416 = vsub.f32 1.0, %v2415
        %v2417 = vmul.f32 %v2414, %v2416
        %v2418 = vadd.f32 %v2414, %v2417
        %vm2419 = vweird.f32 %v2308
        %vm2420 = vweird.f32 %v2414
        %vm2421 = vmor %vm2419, %vm2420
        %v2422 = vsel %vm2421, %v2414, %v2418
        %v2423 = vand.u32 2147483647, %v2308
        %vm2424 = vcmp.eq.f32.partialorder %v2423, 8.507059e+37
        %v2425 = vand.u32 %v2308, 2147483648
        %v2426 = vor.u32 1.1754944e-38, %v2425
        %v2427 = vsel %vm2424, %v2426, %v2422
        %v2428 = vmul.f32 1.0, %v2427
        %v2429 = vrcp.pop %v2309
        %v2430 = vmul.f32 %v2309, %v2429
        %v2431 = vsub.f32 1.0, %v2430
        %v2432 = vmul.f32 %v2429, %v2431
        %v2433 = vadd.f32 %v2429, %v2432
        %vm2434 = vweird.f32 %v2309
        %vm2435 = vweird.f32 %v2429
        %vm2436 = vmor %vm2434, %vm2435
        %v2437 = vsel %vm2436, %v2429, %v2433
        %v2438 = vand.u32 2147483647, %v2309
        %vm2439 = vcmp.eq.f32.partialorder %v2438, 8.507059e+37
        %v2440 = vand.u32 %v2309, 2147483648
        %v2441 = vor.u32 1.1754944e-38, %v2440
        %v2442 = vsel %vm2439, %v2441, %v2437
        %v2443 = vmul.f32 1.0, %v2442
        %v2444 = vrcp.pop %v2310
        %v2445 = vmul.f32 %v2310, %v2444
        %v2446 = vsub.f32 1.0, %v2445
        %v2447 = vmul.f32 %v2444, %v2446
        %v2448 = vadd.f32 %v2444, %v2447
        %vm2449 = vweird.f32 %v2310
        %vm2450 = vweird.f32 %v2444
        %vm2451 = vmor %vm2449, %vm2450
        %v2452 = vsel %vm2451, %v2444, %v2448
        %v2453 = vand.u32 2147483647, %v2310
        %vm2454 = vcmp.eq.f32.partialorder %v2453, 8.507059e+37
        %v2455 = vand.u32 %v2310, 2147483648
        %v2456 = vor.u32 1.1754944e-38, %v2455
        %v2457 = vsel %vm2454, %v2456, %v2452
        %v2458 = vmul.f32 1.0, %v2457
        %v2459 = vrcp.pop %v2311
        %v2460 = vmul.f32 %v2311, %v2459
        %v2461 = vsub.f32 1.0, %v2460
        %v2462 = vmul.f32 %v2459, %v2461
        %v2463 = vadd.f32 %v2459, %v2462
        %vm2464 = vweird.f32 %v2311
        %vm2465 = vweird.f32 %v2459
        %vm2466 = vmor %vm2464, %vm2465
        %v2467 = vsel %vm2466, %v2459, %v2463
        %v2468 = vand.u32 2147483647, %v2311
        %vm2469 = vcmp.eq.f32.partialorder %v2468, 8.507059e+37
        %v2470 = vand.u32 %v2311, 2147483648
        %v2471 = vor.u32 1.1754944e-38, %v2470
        %v2472 = vsel %vm2469, %v2471, %v2467
        %v2473 = vmul.f32 1.0, %v2472
        %v2474 = vrcp.pop %v2312
        %v2475 = vmul.f32 %v2312, %v2474
        %v2476 = vsub.f32 1.0, %v2475
        %v2477 = vmul.f32 %v2474, %v2476
        %v2478 = vadd.f32 %v2474, %v2477
        %vm2479 = vweird.f32 %v2312
        %vm2480 = vweird.f32 %v2474
        %vm2481 = vmor %vm2479, %vm2480
        %v2482 = vsel %vm2481, %v2474, %v2478
        %v2483 = vand.u32 2147483647, %v2312
        %vm2484 = vcmp.eq.f32.partialorder %v2483, 8.507059e+37
        %v2485 = vand.u32 %v2312, 2147483648
        %v2486 = vor.u32 1.1754944e-38, %v2485
        %v2487 = vsel %vm2484, %v2486, %v2482
        %v2488 = vmul.f32 1.0, %v2487
        %v2489 = vrcp.pop %v2313
        %v2490 = vmul.f32 %v2313, %v2489
        %v2491 = vsub.f32 1.0, %v2490
        %v2492 = vmul.f32 %v2489, %v2491
        %v2493 = vadd.f32 %v2489, %v2492
        %vm2494 = vweird.f32 %v2313
        %vm2495 = vweird.f32 %v2489
        %vm2496 = vmor %vm2494, %vm2495
        %v2497 = vsel %vm2496, %v2489, %v2493
        %v2498 = vand.u32 2147483647, %v2313
        %vm2499 = vcmp.eq.f32.partialorder %v2498, 8.507059e+37
        %v2500 = vand.u32 %v2313, 2147483648
        %v2501 = vor.u32 1.1754944e-38, %v2500
        %v2502 = vsel %vm2499, %v2501, %v2497
        %v2503 = vmul.f32 1.0, %v2502
        %v2504 = vrcp.pop %v2314
        %v2505 = vmul.f32 %v2314, %v2504
        %v2506 = vsub.f32 1.0, %v2505
        %v2507 = vmul.f32 %v2504, %v2506
        %v2508 = vadd.f32 %v2504, %v2507
        %vm2509 = vweird.f32 %v2314
        %vm2510 = vweird.f32 %v2504
        %vm2511 = vmor %vm2509, %vm2510
        %v2512 = vsel %vm2511, %v2504, %v2508
        %v2513 = vand.u32 2147483647, %v2314
        %vm2514 = vcmp.eq.f32.partialorder %v2513, 8.507059e+37
        %v2515 = vand.u32 %v2314, 2147483648
        %v2516 = vor.u32 1.1754944e-38, %v2515
        %v2517 = vsel %vm2514, %v2516, %v2512
        %v2518 = vmul.f32 1.0, %v2517
        %v2519 = vrcp.pop %v2315
        %v2520 = vmul.f32 %v2315, %v2519
        %v2521 = vsub.f32 1.0, %v2520
        %v2522 = vmul.f32 %v2519, %v2521
        %v2523 = vadd.f32 %v2519, %v2522
        %vm2524 = vweird.f32 %v2315
        %vm2525 = vweird.f32 %v2519
        %vm2526 = vmor %vm2524, %vm2525
        %v2527 = vsel %vm2526, %v2519, %v2523
        %v2528 = vand.u32 2147483647, %v2315
        %vm2529 = vcmp.eq.f32.partialorder %v2528, 8.507059e+37
        %v2530 = vand.u32 %v2315, 2147483648
        %v2531 = vor.u32 1.1754944e-38, %v2530
        %v2532 = vsel %vm2529, %v2531, %v2527
        %v2533 = vmul.f32 1.0, %v2532
        %v2534 = vrcp.pop %v2316
        %v2535 = vmul.f32 %v2316, %v2534
        %v2536 = vsub.f32 1.0, %v2535
        %v2537 = vmul.f32 %v2534, %v2536
        %v2538 = vadd.f32 %v2534, %v2537
        %vm2539 = vweird.f32 %v2316
        %vm2540 = vweird.f32 %v2534
        %vm2541 = vmor %vm2539, %vm2540
        %v2542 = vsel %vm2541, %v2534, %v2538
        %v2543 = vand.u32 2147483647, %v2316
        %vm2544 = vcmp.eq.f32.partialorder %v2543, 8.507059e+37
        %v2545 = vand.u32 %v2316, 2147483648
        %v2546 = vor.u32 1.1754944e-38, %v2545
        %v2547 = vsel %vm2544, %v2546, %v2542
        %v2548 = vmul.f32 1.0, %v2547
        %v2549 = vrcp.pop %v2317
        %v2550 = vmul.f32 %v2317, %v2549
        %v2551 = vsub.f32 1.0, %v2550
        %v2552 = vmul.f32 %v2549, %v2551
        %v2553 = vadd.f32 %v2549, %v2552
        %vm2554 = vweird.f32 %v2317
        %vm2555 = vweird.f32 %v2549
        %vm2556 = vmor %vm2554, %vm2555
        %v2557 = vsel %vm2556, %v2549, %v2553
        %v2558 = vand.u32 2147483647, %v2317
        %vm2559 = vcmp.eq.f32.partialorder %v2558, 8.507059e+37
        %v2560 = vand.u32 %v2317, 2147483648
        %v2561 = vor.u32 1.1754944e-38, %v2560
        %v2562 = vsel %vm2559, %v2561, %v2557
        %v2563 = vmul.f32 1.0, %v2562
        %v2564 = vrcp.pop %v2318
        %v2565 = vmul.f32 %v2318, %v2564
        %v2566 = vsub.f32 1.0, %v2565
        %v2567 = vmul.f32 %v2564, %v2566
        %v2568 = vadd.f32 %v2564, %v2567
        %vm2569 = vweird.f32 %v2318
        %vm2570 = vweird.f32 %v2564
        %vm2571 = vmor %vm2569, %vm2570
        %v2572 = vsel %vm2571, %v2564, %v2568
        %v2573 = vand.u32 2147483647, %v2318
        %vm2574 = vcmp.eq.f32.partialorder %v2573, 8.507059e+37
        %v2575 = vand.u32 %v2318, 2147483648
        %v2576 = vor.u32 1.1754944e-38, %v2575
        %v2577 = vsel %vm2574, %v2576, %v2572
        %v2578 = vmul.f32 1.0, %v2577
        %v2579 = vrcp.pop %v2319
        %v2580 = vmul.f32 %v2319, %v2579
        %v2581 = vsub.f32 1.0, %v2580
        %v2582 = vmul.f32 %v2579, %v2581
        %v2583 = vadd.f32 %v2579, %v2582
        %vm2584 = vweird.f32 %v2319
        %vm2585 = vweird.f32 %v2579
        %vm2586 = vmor %vm2584, %vm2585
        %v2587 = vsel %vm2586, %v2579, %v2583
        %v2588 = vand.u32 2147483647, %v2319
        %vm2589 = vcmp.eq.f32.partialorder %v2588, 8.507059e+37
        %v2590 = vand.u32 %v2319, 2147483648
        %v2591 = vor.u32 1.1754944e-38, %v2590
        %v2592 = vsel %vm2589, %v2591, %v2587
        %v2593 = vmul.f32 1.0, %v2592
        %v2594 = vrcp.pop %v2320
        %v2595 = vmul.f32 %v2320, %v2594
        %v2596 = vsub.f32 1.0, %v2595
        %v2597 = vmul.f32 %v2594, %v2596
        %v2598 = vadd.f32 %v2594, %v2597
        %vm2599 = vweird.f32 %v2320
        %vm2600 = vweird.f32 %v2594
        %vm2601 = vmor %vm2599, %vm2600
        %v2602 = vsel %vm2601, %v2594, %v2598
        %v2603 = vand.u32 2147483647, %v2320
        %vm2604 = vcmp.eq.f32.partialorder %v2603, 8.507059e+37
        %v2605 = vand.u32 %v2320, 2147483648
        %v2606 = vor.u32 1.1754944e-38, %v2605
        %v2607 = vsel %vm2604, %v2606, %v2602
        %v2608 = vmul.f32 1.0, %v2607
        %v2609 = vrcp.pop %v2321
        %v2610 = vmul.f32 %v2321, %v2609
        %v2611 = vsub.f32 1.0, %v2610
        %v2612 = vmul.f32 %v2609, %v2611
        %v2613 = vadd.f32 %v2609, %v2612
        %vm2614 = vweird.f32 %v2321
        %vm2615 = vweird.f32 %v2609
        %vm2616 = vmor %vm2614, %vm2615
        %v2617 = vsel %vm2616, %v2609, %v2613
        %v2618 = vand.u32 2147483647, %v2321
        %vm2619 = vcmp.eq.f32.partialorder %v2618, 8.507059e+37
        %v2620 = vand.u32 %v2321, 2147483648
        %v2621 = vor.u32 1.1754944e-38, %v2620
        %v2622 = vsel %vm2619, %v2621, %v2617
        %v2623 = vmul.f32 1.0, %v2622
        %v2624 = vrcp.pop %v2322
        %v2625 = vmul.f32 %v2322, %v2624
        %v2626 = vsub.f32 1.0, %v2625
        %v2627 = vmul.f32 %v2624, %v2626
        %v2628 = vadd.f32 %v2624, %v2627
        %vm2629 = vweird.f32 %v2322
        %vm2630 = vweird.f32 %v2624
        %vm2631 = vmor %vm2629, %vm2630
        %v2632 = vsel %vm2631, %v2624, %v2628
        %v2633 = vand.u32 2147483647, %v2322
        %vm2634 = vcmp.eq.f32.partialorder %v2633, 8.507059e+37
        %v2635 = vand.u32 %v2322, 2147483648
        %v2636 = vor.u32 1.1754944e-38, %v2635
        %v2637 = vsel %vm2634, %v2636, %v2632
        %v2638 = vmul.f32 1.0, %v2637
        %v2639 = vrcp.pop %v2323
        %v2640 = vmul.f32 %v2323, %v2639
        %v2641 = vsub.f32 1.0, %v2640
        %v2642 = vmul.f32 %v2639, %v2641
        %v2643 = vadd.f32 %v2639, %v2642
        %vm2644 = vweird.f32 %v2323
        %vm2645 = vweird.f32 %v2639
        %vm2646 = vmor %vm2644, %vm2645
        %v2647 = vsel %vm2646, %v2639, %v2643
        %v2648 = vand.u32 2147483647, %v2323
        %vm2649 = vcmp.eq.f32.partialorder %v2648, 8.507059e+37
        %v2650 = vand.u32 %v2323, 2147483648
        %v2651 = vor.u32 1.1754944e-38, %v2650
        %v2652 = vsel %vm2649, %v2651, %v2647
        %v2653 = vmul.f32 1.0, %v2652
        %v2654 = vrcp.pop %v2324
        %v2655 = vmul.f32 %v2324, %v2654
        %v2656 = vsub.f32 1.0, %v2655
        %v2657 = vmul.f32 %v2654, %v2656
        %v2658 = vadd.f32 %v2654, %v2657
        %vm2659 = vweird.f32 %v2324
        %vm2660 = vweird.f32 %v2654
        %vm2661 = vmor %vm2659, %vm2660
        %v2662 = vsel %vm2661, %v2654, %v2658
        %v2663 = vand.u32 2147483647, %v2324
        %vm2664 = vcmp.eq.f32.partialorder %v2663, 8.507059e+37
        %v2665 = vand.u32 %v2324, 2147483648
        %v2666 = vor.u32 1.1754944e-38, %v2665
        %v2667 = vsel %vm2664, %v2666, %v2662
        %v2668 = vmul.f32 1.0, %v2667
        %v2669 = vrcp.pop %v2325
        %v2670 = vmul.f32 %v2325, %v2669
        %v2671 = vsub.f32 1.0, %v2670
        %v2672 = vmul.f32 %v2669, %v2671
        %v2673 = vadd.f32 %v2669, %v2672
        %vm2674 = vweird.f32 %v2325
        %vm2675 = vweird.f32 %v2669
        %vm2676 = vmor %vm2674, %vm2675
        %v2677 = vsel %vm2676, %v2669, %v2673
        %v2678 = vand.u32 2147483647, %v2325
        %vm2679 = vcmp.eq.f32.partialorder %v2678, 8.507059e+37
        %v2680 = vand.u32 %v2325, 2147483648
        %v2681 = vor.u32 1.1754944e-38, %v2680
        %v2682 = vsel %vm2679, %v2681, %v2677
        %v2683 = vmul.f32 1.0, %v2682
        %v2684 = vrcp.pop %v2326
        %v2685 = vmul.f32 %v2326, %v2684
        %v2686 = vsub.f32 1.0, %v2685
        %v2687 = vmul.f32 %v2684, %v2686
        %v2688 = vadd.f32 %v2684, %v2687
        %vm2689 = vweird.f32 %v2326
        %vm2690 = vweird.f32 %v2684
        %vm2691 = vmor %vm2689, %vm2690
        %v2692 = vsel %vm2691, %v2684, %v2688
        %v2693 = vand.u32 2147483647, %v2326
        %vm2694 = vcmp.eq.f32.partialorder %v2693, 8.507059e+37
        %v2695 = vand.u32 %v2326, 2147483648
        %v2696 = vor.u32 1.1754944e-38, %v2695
        %v2697 = vsel %vm2694, %v2696, %v2692
        %v2698 = vmul.f32 1.0, %v2697
        %v2699 = vrcp.pop %v2327
        %v2700 = vmul.f32 %v2327, %v2699
        %v2701 = vsub.f32 1.0, %v2700
        %v2702 = vmul.f32 %v2699, %v2701
        %v2703 = vadd.f32 %v2699, %v2702
        %vm2704 = vweird.f32 %v2327
        %vm2705 = vweird.f32 %v2699
        %vm2706 = vmor %vm2704, %vm2705
        %v2707 = vsel %vm2706, %v2699, %v2703
        %v2708 = vand.u32 2147483647, %v2327
        %vm2709 = vcmp.eq.f32.partialorder %v2708, 8.507059e+37
        %v2710 = vand.u32 %v2327, 2147483648
        %v2711 = vor.u32 1.1754944e-38, %v2710
        %v2712 = vsel %vm2709, %v2711, %v2707
        %v2713 = vmul.f32 1.0, %v2712
        %v2714 = vrcp.pop %v2328
        %v2715 = vmul.f32 %v2328, %v2714
        %v2716 = vsub.f32 1.0, %v2715
        %v2717 = vmul.f32 %v2714, %v2716
        %v2718 = vadd.f32 %v2714, %v2717
        %vm2719 = vweird.f32 %v2328
        %vm2720 = vweird.f32 %v2714
        %vm2721 = vmor %vm2719, %vm2720
        %v2722 = vsel %vm2721, %v2714, %v2718
        %v2723 = vand.u32 2147483647, %v2328
        %vm2724 = vcmp.eq.f32.partialorder %v2723, 8.507059e+37
        %v2725 = vand.u32 %v2328, 2147483648
        %v2726 = vor.u32 1.1754944e-38, %v2725
        %v2727 = vsel %vm2724, %v2726, %v2722
        %v2728 = vmul.f32 1.0, %v2727
        %v2729 = vrcp.pop %v2329
        %v2730 = vmul.f32 %v2329, %v2729
        %v2731 = vsub.f32 1.0, %v2730
        %v2732 = vmul.f32 %v2729, %v2731
        %v2733 = vadd.f32 %v2729, %v2732
        %vm2734 = vweird.f32 %v2329
        %vm2735 = vweird.f32 %v2729
        %vm2736 = vmor %vm2734, %vm2735
        %v2737 = vsel %vm2736, %v2729, %v2733
        %v2738 = vand.u32 2147483647, %v2329
        %vm2739 = vcmp.eq.f32.partialorder %v2738, 8.507059e+37
        %v2740 = vand.u32 %v2329, 2147483648
        %v2741 = vor.u32 1.1754944e-38, %v2740
        %v2742 = vsel %vm2739, %v2741, %v2737
        %v2743 = vmul.f32 1.0, %v2742
        %v2744 = vrcp.pop %v2330
        %v2745 = vmul.f32 %v2330, %v2744
        %v2746 = vsub.f32 1.0, %v2745
        %v2747 = vmul.f32 %v2744, %v2746
        %v2748 = vadd.f32 %v2744, %v2747
        %vm2749 = vweird.f32 %v2330
        %vm2750 = vweird.f32 %v2744
        %vm2751 = vmor %vm2749, %vm2750
        %v2752 = vsel %vm2751, %v2744, %v2748
        %v2753 = vand.u32 2147483647, %v2330
        %vm2754 = vcmp.eq.f32.partialorder %v2753, 8.507059e+37
        %v2755 = vand.u32 %v2330, 2147483648
        %v2756 = vor.u32 1.1754944e-38, %v2755
        %v2757 = vsel %vm2754, %v2756, %v2752
        %v2758 = vmul.f32 1.0, %v2757
        %v2759 = vrcp.pop %v2331
        %v2760 = vmul.f32 %v2331, %v2759
        %v2761 = vsub.f32 1.0, %v2760
        %v2762 = vmul.f32 %v2759, %v2761
        %v2763 = vadd.f32 %v2759, %v2762
        %vm2764 = vweird.f32 %v2331
        %vm2765 = vweird.f32 %v2759
        %vm2766 = vmor %vm2764, %vm2765
        %v2767 = vsel %vm2766, %v2759, %v2763
        %v2768 = vand.u32 2147483647, %v2331
        %vm2769 = vcmp.eq.f32.partialorder %v2768, 8.507059e+37
        %v2770 = vand.u32 %v2331, 2147483648
        %v2771 = vor.u32 1.1754944e-38, %v2770
        %v2772 = vsel %vm2769, %v2771, %v2767
        %v2773 = vmul.f32 1.0, %v2772
        %v2774 = vrcp.pop %v2332
        %v2775 = vmul.f32 %v2332, %v2774
        %v2776 = vsub.f32 1.0, %v2775
        %v2777 = vmul.f32 %v2774, %v2776
        %v2778 = vadd.f32 %v2774, %v2777
        %vm2779 = vweird.f32 %v2332
        %vm2780 = vweird.f32 %v2774
        %vm2781 = vmor %vm2779, %vm2780
        %v2782 = vsel %vm2781, %v2774, %v2778
        %v2783 = vand.u32 2147483647, %v2332
        %vm2784 = vcmp.eq.f32.partialorder %v2783, 8.507059e+37
        %v2785 = vand.u32 %v2332, 2147483648
        %v2786 = vor.u32 1.1754944e-38, %v2785
        %v2787 = vsel %vm2784, %v2786, %v2782
        %v2788 = vmul.f32 1.0, %v2787
        %v2789 = vrcp.pop %v2333
        %v2790 = vmul.f32 %v2333, %v2789
        %v2791 = vsub.f32 1.0, %v2790
        %v2792 = vmul.f32 %v2789, %v2791
        %v2793 = vadd.f32 %v2789, %v2792
        %vm2794 = vweird.f32 %v2333
        %vm2795 = vweird.f32 %v2789
        %vm2796 = vmor %vm2794, %vm2795
        %v2797 = vsel %vm2796, %v2789, %v2793
        %v2798 = vand.u32 2147483647, %v2333
        %vm2799 = vcmp.eq.f32.partialorder %v2798, 8.507059e+37
        %v2800 = vand.u32 %v2333, 2147483648
        %v2801 = vor.u32 1.1754944e-38, %v2800
        %v2802 = vsel %vm2799, %v2801, %v2797
        %v2803 = vmul.f32 1.0, %v2802
        %v2804 = vrcp.pop %v2334
        %v2805 = vmul.f32 %v2334, %v2804
        %v2806 = vsub.f32 1.0, %v2805
        %v2807 = vmul.f32 %v2804, %v2806
        %v2808 = vadd.f32 %v2804, %v2807
        %vm2809 = vweird.f32 %v2334
        %vm2810 = vweird.f32 %v2804
        %vm2811 = vmor %vm2809, %vm2810
        %v2812 = vsel %vm2811, %v2804, %v2808
        %v2813 = vand.u32 2147483647, %v2334
        %vm2814 = vcmp.eq.f32.partialorder %v2813, 8.507059e+37
        %v2815 = vand.u32 %v2334, 2147483648
        %v2816 = vor.u32 1.1754944e-38, %v2815
        %v2817 = vsel %vm2814, %v2816, %v2812
        %v2818 = vmul.f32 1.0, %v2817
        %v2819 = vrcp.pop %v2335
        %v2820 = vmul.f32 %v2335, %v2819
        %v2821 = vsub.f32 1.0, %v2820
        %v2822 = vmul.f32 %v2819, %v2821
        %v2823 = vadd.f32 %v2819, %v2822
        %vm2824 = vweird.f32 %v2335
        %vm2825 = vweird.f32 %v2819
        %vm2826 = vmor %vm2824, %vm2825
        %v2827 = vsel %vm2826, %v2819, %v2823
        %v2828 = vand.u32 2147483647, %v2335
        %vm2829 = vcmp.eq.f32.partialorder %v2828, 8.507059e+37
        %v2830 = vand.u32 %v2335, 2147483648
        %v2831 = vor.u32 1.1754944e-38, %v2830
        %v2832 = vsel %vm2829, %v2831, %v2827
        %v2833 = vmul.f32 1.0, %v2832
        %v2834 = vrcp.pop %v2336
        %v2835 = vmul.f32 %v2336, %v2834
        %v2836 = vsub.f32 1.0, %v2835
        %v2837 = vmul.f32 %v2834, %v2836
        %v2838 = vadd.f32 %v2834, %v2837
        %vm2839 = vweird.f32 %v2336
        %vm2840 = vweird.f32 %v2834
        %vm2841 = vmor %vm2839, %vm2840
        %v2842 = vsel %vm2841, %v2834, %v2838
        %v2843 = vand.u32 2147483647, %v2336
        %vm2844 = vcmp.eq.f32.partialorder %v2843, 8.507059e+37
        %v2845 = vand.u32 %v2336, 2147483648
        %v2846 = vor.u32 1.1754944e-38, %v2845
        %v2847 = vsel %vm2844, %v2846, %v2842
        %v2848 = vmul.f32 1.0, %v2847
        %v2849 = vrcp.pop %v2337
        %v2850 = vmul.f32 %v2337, %v2849
        %v2851 = vsub.f32 1.0, %v2850
        %v2852 = vmul.f32 %v2849, %v2851
        %v2853 = vadd.f32 %v2849, %v2852
        %vm2854 = vweird.f32 %v2337
        %vm2855 = vweird.f32 %v2849
        %vm2856 = vmor %vm2854, %vm2855
        %v2857 = vsel %vm2856, %v2849, %v2853
        %v2858 = vand.u32 2147483647, %v2337
        %vm2859 = vcmp.eq.f32.partialorder %v2858, 8.507059e+37
        %v2860 = vand.u32 %v2337, 2147483648
        %v2861 = vor.u32 1.1754944e-38, %v2860
        %v2862 = vsel %vm2859, %v2861, %v2857
        %v2863 = vmul.f32 1.0, %v2862
        %v2864 = vrcp.pop %v2338
        %v2865 = vmul.f32 %v2338, %v2864
        %v2866 = vsub.f32 1.0, %v2865
        %v2867 = vmul.f32 %v2864, %v2866
        %v2868 = vadd.f32 %v2864, %v2867
        %vm2869 = vweird.f32 %v2338
        %vm2870 = vweird.f32 %v2864
        %vm2871 = vmor %vm2869, %vm2870
        %v2872 = vsel %vm2871, %v2864, %v2868
        %v2873 = vand.u32 2147483647, %v2338
        %vm2874 = vcmp.eq.f32.partialorder %v2873, 8.507059e+37
        %v2875 = vand.u32 %v2338, 2147483648
        %v2876 = vor.u32 1.1754944e-38, %v2875
        %v2877 = vsel %vm2874, %v2876, %v2872
        %v2878 = vmul.f32 1.0, %v2877
        %v2879 = vrcp.pop %v2339
        %v2880 = vmul.f32 %v2339, %v2879
        %v2881 = vsub.f32 1.0, %v2880
        %v2882 = vmul.f32 %v2879, %v2881
        %v2883 = vadd.f32 %v2879, %v2882
        %vm2884 = vweird.f32 %v2339
        %vm2885 = vweird.f32 %v2879
        %vm2886 = vmor %vm2884, %vm2885
        %v2887 = vsel %vm2886, %v2879, %v2883
        %v2888 = vand.u32 2147483647, %v2339
        %vm2889 = vcmp.eq.f32.partialorder %v2888, 8.507059e+37
        %v2890 = vand.u32 %v2339, 2147483648
        %v2891 = vor.u32 1.1754944e-38, %v2890
        %v2892 = vsel %vm2889, %v2891, %v2887
        %v2893 = vmul.f32 1.0, %v2892
        %v2894 = vrcp.pop %v2340
        %v2895 = vmul.f32 %v2340, %v2894
        %v2896 = vsub.f32 1.0, %v2895
        %v2897 = vmul.f32 %v2894, %v2896
        %v2898 = vadd.f32 %v2894, %v2897
        %vm2899 = vweird.f32 %v2340
        %vm2900 = vweird.f32 %v2894
        %vm2901 = vmor %vm2899, %vm2900
        %v2902 = vsel %vm2901, %v2894, %v2898
        %v2903 = vand.u32 2147483647, %v2340
        %vm2904 = vcmp.eq.f32.partialorder %v2903, 8.507059e+37
        %v2905 = vand.u32 %v2340, 2147483648
        %v2906 = vor.u32 1.1754944e-38, %v2905
        %v2907 = vsel %vm2904, %v2906, %v2902
        %v2908 = vmul.f32 1.0, %v2907
        %v2909 = vrcp.pop %v2341
        %v2910 = vmul.f32 %v2341, %v2909
        %v2911 = vsub.f32 1.0, %v2910
        %v2912 = vmul.f32 %v2909, %v2911
        %v2913 = vadd.f32 %v2909, %v2912
        %vm2914 = vweird.f32 %v2341
        %vm2915 = vweird.f32 %v2909
        %vm2916 = vmor %vm2914, %vm2915
        %v2917 = vsel %vm2916, %v2909, %v2913
        %v2918 = vand.u32 2147483647, %v2341
        %vm2919 = vcmp.eq.f32.partialorder %v2918, 8.507059e+37
        %v2920 = vand.u32 %v2341, 2147483648
        %v2921 = vor.u32 1.1754944e-38, %v2920
        %v2922 = vsel %vm2919, %v2921, %v2917
        %v2923 = vmul.f32 1.0, %v2922
        %v2924 = vrcp.pop %v2342
        %v2925 = vmul.f32 %v2342, %v2924
        %v2926 = vsub.f32 1.0, %v2925
        %v2927 = vmul.f32 %v2924, %v2926
        %v2928 = vadd.f32 %v2924, %v2927
        %vm2929 = vweird.f32 %v2342
        %vm2930 = vweird.f32 %v2924
        %vm2931 = vmor %vm2929, %vm2930
        %v2932 = vsel %vm2931, %v2924, %v2928
        %v2933 = vand.u32 2147483647, %v2342
        %vm2934 = vcmp.eq.f32.partialorder %v2933, 8.507059e+37
        %v2935 = vand.u32 %v2342, 2147483648
        %v2936 = vor.u32 1.1754944e-38, %v2935
        %v2937 = vsel %vm2934, %v2936, %v2932
        %v2938 = vmul.f32 1.0, %v2937
        %v2939 = vrcp.pop %v2343
        %v2940 = vmul.f32 %v2343, %v2939
        %v2941 = vsub.f32 1.0, %v2940
        %v2942 = vmul.f32 %v2939, %v2941
        %v2943 = vadd.f32 %v2939, %v2942
        %vm2944 = vweird.f32 %v2343
        %vm2945 = vweird.f32 %v2939
        %vm2946 = vmor %vm2944, %vm2945
        %v2947 = vsel %vm2946, %v2939, %v2943
        %v2948 = vand.u32 2147483647, %v2343
        %vm2949 = vcmp.eq.f32.partialorder %v2948, 8.507059e+37
        %v2950 = vand.u32 %v2343, 2147483648
        %v2951 = vor.u32 1.1754944e-38, %v2950
        %v2952 = vsel %vm2949, %v2951, %v2947
        %v2953 = vmul.f32 1.0, %v2952
        %v2954 = vrcp.pop %v2344
        %v2955 = vmul.f32 %v2344, %v2954
        %v2956 = vsub.f32 1.0, %v2955
        %v2957 = vmul.f32 %v2954, %v2956
        %v2958 = vadd.f32 %v2954, %v2957
        %vm2959 = vweird.f32 %v2344
        %vm2960 = vweird.f32 %v2954
        %vm2961 = vmor %vm2959, %vm2960
        %v2962 = vsel %vm2961, %v2954, %v2958
        %v2963 = vand.u32 2147483647, %v2344
        %vm2964 = vcmp.eq.f32.partialorder %v2963, 8.507059e+37
        %v2965 = vand.u32 %v2344, 2147483648
        %v2966 = vor.u32 1.1754944e-38, %v2965
        %v2967 = vsel %vm2964, %v2966, %v2962
        %v2968 = vmul.f32 1.0, %v2967
        %v2969 = vrcp.pop %v2345
        %v2970 = vmul.f32 %v2345, %v2969
        %v2971 = vsub.f32 1.0, %v2970
        %v2972 = vmul.f32 %v2969, %v2971
        %v2973 = vadd.f32 %v2969, %v2972
        %vm2974 = vweird.f32 %v2345
        %vm2975 = vweird.f32 %v2969
        %vm2976 = vmor %vm2974, %vm2975
        %v2977 = vsel %vm2976, %v2969, %v2973
        %v2978 = vand.u32 2147483647, %v2345
        %vm2979 = vcmp.eq.f32.partialorder %v2978, 8.507059e+37
        %v2980 = vand.u32 %v2345, 2147483648
        %v2981 = vor.u32 1.1754944e-38, %v2980
        %v2982 = vsel %vm2979, %v2981, %v2977
        %v2983 = vmul.f32 1.0, %v2982
        %v2984 = vrcp.pop %v2346
        %v2985 = vmul.f32 %v2346, %v2984
        %v2986 = vsub.f32 1.0, %v2985
        %v2987 = vmul.f32 %v2984, %v2986
        %v2988 = vadd.f32 %v2984, %v2987
        %vm2989 = vweird.f32 %v2346
        %vm2990 = vweird.f32 %v2984
        %vm2991 = vmor %vm2989, %vm2990
        %v2992 = vsel %vm2991, %v2984, %v2988
        %v2993 = vand.u32 2147483647, %v2346
        %vm2994 = vcmp.eq.f32.partialorder %v2993, 8.507059e+37
        %v2995 = vand.u32 %v2346, 2147483648
        %v2996 = vor.u32 1.1754944e-38, %v2995
        %v2997 = vsel %vm2994, %v2996, %v2992
        %v2998 = vmul.f32 1.0, %v2997
        %v2999 = vrcp.pop %v2347
        %v3000 = vmul.f32 %v2347, %v2999
        %v3001 = vsub.f32 1.0, %v3000
        %v3002 = vmul.f32 %v2999, %v3001
        %v3003 = vadd.f32 %v2999, %v3002
        %vm3004 = vweird.f32 %v2347
        %vm3005 = vweird.f32 %v2999
        %vm3006 = vmor %vm3004, %vm3005
        %v3007 = vsel %vm3006, %v2999, %v3003
        %v3008 = vand.u32 2147483647, %v2347
        %vm3009 = vcmp.eq.f32.partialorder %v3008, 8.507059e+37
        %v3010 = vand.u32 %v2347, 2147483648
        %v3011 = vor.u32 1.1754944e-38, %v3010
        %v3012 = vsel %vm3009, %v3011, %v3007
        %v3013 = vmul.f32 1.0, %v3012
        %v3014 = vrcp.pop %v2348
        %v3015 = vmul.f32 %v2348, %v3014
        %v3016 = vsub.f32 1.0, %v3015
        %v3017 = vmul.f32 %v3014, %v3016
        %v3018 = vadd.f32 %v3014, %v3017
        %vm3019 = vweird.f32 %v2348
        %vm3020 = vweird.f32 %v3014
        %vm3021 = vmor %vm3019, %vm3020
        %v3022 = vsel %vm3021, %v3014, %v3018
        %v3023 = vand.u32 2147483647, %v2348
        %vm3024 = vcmp.eq.f32.partialorder %v3023, 8.507059e+37
        %v3025 = vand.u32 %v2348, 2147483648
        %v3026 = vor.u32 1.1754944e-38, %v3025
        %v3027 = vsel %vm3024, %v3026, %v3022
        %v3028 = vmul.f32 1.0, %v3027
        %v3029 = vrcp.pop %v2349
        %v3030 = vmul.f32 %v2349, %v3029
        %v3031 = vsub.f32 1.0, %v3030
        %v3032 = vmul.f32 %v3029, %v3031
        %v3033 = vadd.f32 %v3029, %v3032
        %vm3034 = vweird.f32 %v2349
        %vm3035 = vweird.f32 %v3029
        %vm3036 = vmor %vm3034, %vm3035
        %v3037 = vsel %vm3036, %v3029, %v3033
        %v3038 = vand.u32 2147483647, %v2349
        %vm3039 = vcmp.eq.f32.partialorder %v3038, 8.507059e+37
        %v3040 = vand.u32 %v2349, 2147483648
        %v3041 = vor.u32 1.1754944e-38, %v3040
        %v3042 = vsel %vm3039, %v3041, %v3037
        %v3043 = vmul.f32 1.0, %v3042
        %v3044 = vrcp.pop %v2350
        %v3045 = vmul.f32 %v2350, %v3044
        %v3046 = vsub.f32 1.0, %v3045
        %v3047 = vmul.f32 %v3044, %v3046
        %v3048 = vadd.f32 %v3044, %v3047
        %vm3049 = vweird.f32 %v2350
        %vm3050 = vweird.f32 %v3044
        %vm3051 = vmor %vm3049, %vm3050
        %v3052 = vsel %vm3051, %v3044, %v3048
        %v3053 = vand.u32 2147483647, %v2350
        %vm3054 = vcmp.eq.f32.partialorder %v3053, 8.507059e+37
        %v3055 = vand.u32 %v2350, 2147483648
        %v3056 = vor.u32 1.1754944e-38, %v3055
        %v3057 = vsel %vm3054, %v3056, %v3052
        %v3058 = vmul.f32 1.0, %v3057
        %v3059 = vrcp.pop %v2351
        %v3060 = vmul.f32 %v2351, %v3059
        %v3061 = vsub.f32 1.0, %v3060
        %v3062 = vmul.f32 %v3059, %v3061
        %v3063 = vadd.f32 %v3059, %v3062
        %vm3064 = vweird.f32 %v2351
        %vm3065 = vweird.f32 %v3059
        %vm3066 = vmor %vm3064, %vm3065
        %v3067 = vsel %vm3066, %v3059, %v3063
        %v3068 = vand.u32 2147483647, %v2351
        %vm3069 = vcmp.eq.f32.partialorder %v3068, 8.507059e+37
        %v3070 = vand.u32 %v2351, 2147483648
        %v3071 = vor.u32 1.1754944e-38, %v3070
        %v3072 = vsel %vm3069, %v3071, %v3067
        %v3073 = vmul.f32 1.0, %v3072
        %v3074 = vrcp.pop %v2352
        %v3075 = vmul.f32 %v2352, %v3074
        %v3076 = vsub.f32 1.0, %v3075
        %v3077 = vmul.f32 %v3074, %v3076
        %v3078 = vadd.f32 %v3074, %v3077
        %vm3079 = vweird.f32 %v2352
        %vm3080 = vweird.f32 %v3074
        %vm3081 = vmor %vm3079, %vm3080
        %v3082 = vsel %vm3081, %v3074, %v3078
        %v3083 = vand.u32 2147483647, %v2352
        %vm3084 = vcmp.eq.f32.partialorder %v3083, 8.507059e+37
        %v3085 = vand.u32 %v2352, 2147483648
        %v3086 = vor.u32 1.1754944e-38, %v3085
        %v3087 = vsel %vm3084, %v3086, %v3082
        %v3088 = vmul.f32 1.0, %v3087
        %v3089 = vrcp.pop %v2353
        %v3090 = vmul.f32 %v2353, %v3089
        %v3091 = vsub.f32 1.0, %v3090
        %v3092 = vmul.f32 %v3089, %v3091
        %v3093 = vadd.f32 %v3089, %v3092
        %vm3094 = vweird.f32 %v2353
        %vm3095 = vweird.f32 %v3089
        %vm3096 = vmor %vm3094, %vm3095
        %v3097 = vsel %vm3096, %v3089, %v3093
        %v3098 = vand.u32 2147483647, %v2353
        %vm3099 = vcmp.eq.f32.partialorder %v3098, 8.507059e+37
        %v3100 = vand.u32 %v2353, 2147483648
        %v3101 = vor.u32 1.1754944e-38, %v3100
        %v3102 = vsel %vm3099, %v3101, %v3097
        %v3103 = vmul.f32 1.0, %v3102
        %v3104 = vrcp.pop %v2354
        %v3105 = vmul.f32 %v2354, %v3104
        %v3106 = vsub.f32 1.0, %v3105
        %v3107 = vmul.f32 %v3104, %v3106
        %v3108 = vadd.f32 %v3104, %v3107
        %vm3109 = vweird.f32 %v2354
        %vm3110 = vweird.f32 %v3104
        %vm3111 = vmor %vm3109, %vm3110
        %v3112 = vsel %vm3111, %v3104, %v3108
        %v3113 = vand.u32 2147483647, %v2354
        %vm3114 = vcmp.eq.f32.partialorder %v3113, 8.507059e+37
        %v3115 = vand.u32 %v2354, 2147483648
        %v3116 = vor.u32 1.1754944e-38, %v3115
        %v3117 = vsel %vm3114, %v3116, %v3112
        %v3118 = vmul.f32 1.0, %v3117
        %v3119 = vrcp.pop %v2355
        %v3120 = vmul.f32 %v2355, %v3119
        %v3121 = vsub.f32 1.0, %v3120
        %v3122 = vmul.f32 %v3119, %v3121
        %v3123 = vadd.f32 %v3119, %v3122
        %vm3124 = vweird.f32 %v2355
        %vm3125 = vweird.f32 %v3119
        %vm3126 = vmor %vm3124, %vm3125
        %v3127 = vsel %vm3126, %v3119, %v3123
        %v3128 = vand.u32 2147483647, %v2355
        %vm3129 = vcmp.eq.f32.partialorder %v3128, 8.507059e+37
        %v3130 = vand.u32 %v2355, 2147483648
        %v3131 = vor.u32 1.1754944e-38, %v3130
        %v3132 = vsel %vm3129, %v3131, %v3127
        %v3133 = vmul.f32 1.0, %v3132
        %v3134 = vrcp.pop %v2356
        %v3135 = vmul.f32 %v2356, %v3134
        %v3136 = vsub.f32 1.0, %v3135
        %v3137 = vmul.f32 %v3134, %v3136
        %v3138 = vadd.f32 %v3134, %v3137
        %vm3139 = vweird.f32 %v2356
        %vm3140 = vweird.f32 %v3134
        %vm3141 = vmor %vm3139, %vm3140
        %v3142 = vsel %vm3141, %v3134, %v3138
        %v3143 = vand.u32 2147483647, %v2356
        %vm3144 = vcmp.eq.f32.partialorder %v3143, 8.507059e+37
        %v3145 = vand.u32 %v2356, 2147483648
        %v3146 = vor.u32 1.1754944e-38, %v3145
        %v3147 = vsel %vm3144, %v3146, %v3142
        %v3148 = vmul.f32 1.0, %v3147
        %v3149 = vrcp.pop %v2357
        %v3150 = vmul.f32 %v2357, %v3149
        %v3151 = vsub.f32 1.0, %v3150
        %v3152 = vmul.f32 %v3149, %v3151
        %v3153 = vadd.f32 %v3149, %v3152
        %vm3154 = vweird.f32 %v2357
        %vm3155 = vweird.f32 %v3149
        %vm3156 = vmor %vm3154, %vm3155
        %v3157 = vsel %vm3156, %v3149, %v3153
        %v3158 = vand.u32 2147483647, %v2357
        %vm3159 = vcmp.eq.f32.partialorder %v3158, 8.507059e+37
        %v3160 = vand.u32 %v2357, 2147483648
        %v3161 = vor.u32 1.1754944e-38, %v3160
        %v3162 = vsel %vm3159, %v3161, %v3157
        %v3163 = vmul.f32 1.0, %v3162
        %v3164 = vrcp.pop %v2358
        %v3165 = vmul.f32 %v2358, %v3164
        %v3166 = vsub.f32 1.0, %v3165
        %v3167 = vmul.f32 %v3164, %v3166
        %v3168 = vadd.f32 %v3164, %v3167
        %vm3169 = vweird.f32 %v2358
        %vm3170 = vweird.f32 %v3164
        %vm3171 = vmor %vm3169, %vm3170
        %v3172 = vsel %vm3171, %v3164, %v3168
        %v3173 = vand.u32 2147483647, %v2358
        %vm3174 = vcmp.eq.f32.partialorder %v3173, 8.507059e+37
        %v3175 = vand.u32 %v2358, 2147483648
        %v3176 = vor.u32 1.1754944e-38, %v3175
        %v3177 = vsel %vm3174, %v3176, %v3172
        %v3178 = vmul.f32 1.0, %v3177
        %v3179 = vrcp.pop %v2359
        %v3180 = vmul.f32 %v2359, %v3179
        %v3181 = vsub.f32 1.0, %v3180
        %v3182 = vmul.f32 %v3179, %v3181
        %v3183 = vadd.f32 %v3179, %v3182
        %vm3184 = vweird.f32 %v2359
        %vm3185 = vweird.f32 %v3179
        %vm3186 = vmor %vm3184, %vm3185
        %v3187 = vsel %vm3186, %v3179, %v3183
        %v3188 = vand.u32 2147483647, %v2359
        %vm3189 = vcmp.eq.f32.partialorder %v3188, 8.507059e+37
        %v3190 = vand.u32 %v2359, 2147483648
        %v3191 = vor.u32 1.1754944e-38, %v3190
        %v3192 = vsel %vm3189, %v3191, %v3187
        %v3193 = vmul.f32 1.0, %v3192
        %v3194 = vrcp.pop %v2360
        %v3195 = vmul.f32 %v2360, %v3194
        %v3196 = vsub.f32 1.0, %v3195
        %v3197 = vmul.f32 %v3194, %v3196
        %v3198 = vadd.f32 %v3194, %v3197
        %vm3199 = vweird.f32 %v2360
        %vm3200 = vweird.f32 %v3194
        %vm3201 = vmor %vm3199, %vm3200
        %v3202 = vsel %vm3201, %v3194, %v3198
        %v3203 = vand.u32 2147483647, %v2360
        %vm3204 = vcmp.eq.f32.partialorder %v3203, 8.507059e+37
        %v3205 = vand.u32 %v2360, 2147483648
        %v3206 = vor.u32 1.1754944e-38, %v3205
        %v3207 = vsel %vm3204, %v3206, %v3202
        %v3208 = vmul.f32 1.0, %v3207
        %v3209 = vrcp.pop %v2361
        %v3210 = vmul.f32 %v2361, %v3209
        %v3211 = vsub.f32 1.0, %v3210
        %v3212 = vmul.f32 %v3209, %v3211
        %v3213 = vadd.f32 %v3209, %v3212
        %vm3214 = vweird.f32 %v2361
        %vm3215 = vweird.f32 %v3209
        %vm3216 = vmor %vm3214, %vm3215
        %v3217 = vsel %vm3216, %v3209, %v3213
        %v3218 = vand.u32 2147483647, %v2361
        %vm3219 = vcmp.eq.f32.partialorder %v3218, 8.507059e+37
        %v3220 = vand.u32 %v2361, 2147483648
        %v3221 = vor.u32 1.1754944e-38, %v3220
        %v3222 = vsel %vm3219, %v3221, %v3217
        %v3223 = vmul.f32 1.0, %v3222
        %v3224 = vrcp.pop %v2362
        %v3225 = vmul.f32 %v2362, %v3224
        %v3226 = vsub.f32 1.0, %v3225
        %v3227 = vmul.f32 %v3224, %v3226
        %v3228 = vadd.f32 %v3224, %v3227
        %vm3229 = vweird.f32 %v2362
        %vm3230 = vweird.f32 %v3224
        %vm3231 = vmor %vm3229, %vm3230
        %v3232 = vsel %vm3231, %v3224, %v3228
        %v3233 = vand.u32 2147483647, %v2362
        %vm3234 = vcmp.eq.f32.partialorder %v3233, 8.507059e+37
        %v3235 = vand.u32 %v2362, 2147483648
        %v3236 = vor.u32 1.1754944e-38, %v3235
        %v3237 = vsel %vm3234, %v3236, %v3232
        %v3238 = vmul.f32 1.0, %v3237
        %v3239 = vrcp.pop %v2363
        %v3240 = vmul.f32 %v2363, %v3239
        %v3241 = vsub.f32 1.0, %v3240
        %v3242 = vmul.f32 %v3239, %v3241
        %v3243 = vadd.f32 %v3239, %v3242
        %vm3244 = vweird.f32 %v2363
        %vm3245 = vweird.f32 %v3239
        %vm3246 = vmor %vm3244, %vm3245
        %v3247 = vsel %vm3246, %v3239, %v3243
        %v3248 = vand.u32 2147483647, %v2363
        %vm3249 = vcmp.eq.f32.partialorder %v3248, 8.507059e+37
        %v3250 = vand.u32 %v2363, 2147483648
        %v3251 = vor.u32 1.1754944e-38, %v3250
        %v3252 = vsel %vm3249, %v3251, %v3247
        %v3253 = vmul.f32 1.0, %v3252
        %v3254 = vrcp.pop %v2364
        %v3255 = vmul.f32 %v2364, %v3254
        %v3256 = vsub.f32 1.0, %v3255
        %v3257 = vmul.f32 %v3254, %v3256
        %v3258 = vadd.f32 %v3254, %v3257
        %vm3259 = vweird.f32 %v2364
        %vm3260 = vweird.f32 %v3254
        %vm3261 = vmor %vm3259, %vm3260
        %v3262 = vsel %vm3261, %v3254, %v3258
        %v3263 = vand.u32 2147483647, %v2364
        %vm3264 = vcmp.eq.f32.partialorder %v3263, 8.507059e+37
        %v3265 = vand.u32 %v2364, 2147483648
        %v3266 = vor.u32 1.1754944e-38, %v3265
        %v3267 = vsel %vm3264, %v3266, %v3262
        %v3268 = vmul.f32 1.0, %v3267
        %v3269 = vrcp.pop %v2365
        %v3270 = vmul.f32 %v2365, %v3269
        %v3271 = vsub.f32 1.0, %v3270
        %v3272 = vmul.f32 %v3269, %v3271
        %v3273 = vadd.f32 %v3269, %v3272
        %vm3274 = vweird.f32 %v2365
        %vm3275 = vweird.f32 %v3269
        %vm3276 = vmor %vm3274, %vm3275
        %v3277 = vsel %vm3276, %v3269, %v3273
        %v3278 = vand.u32 2147483647, %v2365
        %vm3279 = vcmp.eq.f32.partialorder %v3278, 8.507059e+37
        %v3280 = vand.u32 %v2365, 2147483648
        %v3281 = vor.u32 1.1754944e-38, %v3280
        %v3282 = vsel %vm3279, %v3281, %v3277
        %v3283 = vmul.f32 1.0, %v3282
        %v3284 = vrcp.pop %v2366
        %v3285 = vmul.f32 %v2366, %v3284
        %v3286 = vsub.f32 1.0, %v3285
        %v3287 = vmul.f32 %v3284, %v3286
        %v3288 = vadd.f32 %v3284, %v3287
        %vm3289 = vweird.f32 %v2366
        %vm3290 = vweird.f32 %v3284
        %vm3291 = vmor %vm3289, %vm3290
        %v3292 = vsel %vm3291, %v3284, %v3288
        %v3293 = vand.u32 2147483647, %v2366
        %vm3294 = vcmp.eq.f32.partialorder %v3293, 8.507059e+37
        %v3295 = vand.u32 %v2366, 2147483648
        %v3296 = vor.u32 1.1754944e-38, %v3295
        %v3297 = vsel %vm3294, %v3296, %v3292
        %v3298 = vmul.f32 1.0, %v3297
        %v3299 = vrcp.pop %v2367
        %v3300 = vmul.f32 %v2367, %v3299
        %v3301 = vsub.f32 1.0, %v3300
        %v3302 = vmul.f32 %v3299, %v3301
        %v3303 = vadd.f32 %v3299, %v3302
        %vm3304 = vweird.f32 %v2367
        %vm3305 = vweird.f32 %v3299
        %vm3306 = vmor %vm3304, %vm3305
        %v3307 = vsel %vm3306, %v3299, %v3303
        %v3308 = vand.u32 2147483647, %v2367
        %vm3309 = vcmp.eq.f32.partialorder %v3308, 8.507059e+37
        %v3310 = vand.u32 %v2367, 2147483648
        %v3311 = vor.u32 1.1754944e-38, %v3310
        %v3312 = vsel %vm3309, %v3311, %v3307
        %v3313 = vmul.f32 1.0, %v3312
        %v3314 = vrcp.pop %v2368
        %v3315 = vmul.f32 %v2368, %v3314
        %v3316 = vsub.f32 1.0, %v3315
        %v3317 = vmul.f32 %v3314, %v3316
        %v3318 = vadd.f32 %v3314, %v3317
        %vm3319 = vweird.f32 %v2368
        %vm3320 = vweird.f32 %v3314
        %vm3321 = vmor %vm3319, %vm3320
        %v3322 = vsel %vm3321, %v3314, %v3318
        %v3323 = vand.u32 2147483647, %v2368
        %vm3324 = vcmp.eq.f32.partialorder %v3323, 8.507059e+37
        %v3325 = vand.u32 %v2368, 2147483648
        %v3326 = vor.u32 1.1754944e-38, %v3325
        %v3327 = vsel %vm3324, %v3326, %v3322
        %v3328 = vmul.f32 1.0, %v3327
        %v3329 = vmul.f32 %v994, %v2383
        %v3330 = vmul.f32 %v1092, %v2398
        %v3331 = vmul.f32 %v1190, %v2413
        %v3332 = vmul.f32 %v1288, %v2428
        %v3333 = vmul.f32 %v996, %v2443
        %v3334 = vmul.f32 %v1094, %v2458
        %v3335 = vmul.f32 %v1192, %v2473
        %v3336 = vmul.f32 %v1290, %v2488
        %v3337 = vmul.f32 %v999, %v2503
        %v3338 = vmul.f32 %v1097, %v2518
        %v3339 = vmul.f32 %v1195, %v2533
        %v3340 = vmul.f32 %v1293, %v2548
        %v3341 = vmul.f32 %v1001, %v2563
        %v3342 = vmul.f32 %v1099, %v2578
        %v3343 = vmul.f32 %v1197, %v2593
        %v3344 = vmul.f32 %v1295, %v2608
        %v3345 = vmul.f32 %v1004, %v2623
        %v3346 = vmul.f32 %v1102, %v2638
        %v3347 = vmul.f32 %v1200, %v2653
        %v3348 = vmul.f32 %v1298, %v2668
        %v3349 = vmul.f32 %v1006, %v2683
        %v3350 = vmul.f32 %v1104, %v2698
        %v3351 = vmul.f32 %v1202, %v2713
        %v3352 = vmul.f32 %v1300, %v2728
        %v3353 = vmul.f32 %v1009, %v2743
        %v3354 = vmul.f32 %v1107, %v2758
        %v3355 = vmul.f32 %v1205, %v2773
        %v3356 = vmul.f32 %v1303, %v2788
        %v3357 = vmul.f32 %v1011, %v2803
        %v3358 = vmul.f32 %v1109, %v2818
        %v3359 = vmul.f32 %v1207, %v2833
        %v3360 = vmul.f32 %v1305, %v2848
        %v3361 = vmul.f32 %v1014, %v2863
        %v3362 = vmul.f32 %v1112, %v2878
        %v3363 = vmul.f32 %v1210, %v2893
        %v3364 = vmul.f32 %v1308, %v2908
        %v3365 = vmul.f32 %v1016, %v2923
        %v3366 = vmul.f32 %v1114, %v2938
        %v3367 = vmul.f32 %v1212, %v2953
        %v3368 = vmul.f32 %v1310, %v2968
        %v3369 = vmul.f32 %v1019, %v2983
        %v3370 = vmul.f32 %v1117, %v2998
        %v3371 = vmul.f32 %v1215, %v3013
        %v3372 = vmul.f32 %v1313, %v3028
        %v3373 = vmul.f32 %v1021, %v3043
        %v3374 = vmul.f32 %v1119, %v3058
        %v3375 = vmul.f32 %v1217, %v3073
        %v3376 = vmul.f32 %v1315, %v3088
        %v3377 = vmul.f32 %v1024, %v3103
        %v3378 = vmul.f32 %v1122, %v3118
        %v3379 = vmul.f32 %v1220, %v3133
        %v3380 = vmul.f32 %v1318, %v3148
        %v3381 = vmul.f32 %v1026, %v3163
        %v3382 = vmul.f32 %v1124, %v3178
        %v3383 = vmul.f32 %v1222, %v3193
        %v3384 = vmul.f32 %v1320, %v3208
        %v3385 = vmul.f32 %v1029, %v3223
        %v3386 = vmul.f32 %v1127, %v3238
        %v3387 = vmul.f32 %v1225, %v3253
        %v3388 = vmul.f32 %v1323, %v3268
        %v3389 = vmul.f32 %v1031, %v3283
        %v3390 = vmul.f32 %v1129, %v3298
        %v3391 = vmul.f32 %v1227, %v3313
        %v3392 = vmul.f32 %v1325, %v3328
        %v3393 = vmul.f32 %v3329, %v1780
        %v3394 = vmul.f32 %v3330, %v1878
        %v3395 = vmul.f32 %v3331, %v1976
        %v3396 = vmul.f32 %v3332, %v2074
        %v3397 = vmul.f32 %v3333, %v1782
        %v3398 = vmul.f32 %v3334, %v1880
        %v3399 = vmul.f32 %v3335, %v1978
        %v3400 = vmul.f32 %v3336, %v2076
        %v3401 = vmul.f32 %v3337, %v1785
        %v3402 = vmul.f32 %v3338, %v1883
        %v3403 = vmul.f32 %v3339, %v1981
        %v3404 = vmul.f32 %v3340, %v2079
        %v3405 = vmul.f32 %v3341, %v1787
        %v3406 = vmul.f32 %v3342, %v1885
        %v3407 = vmul.f32 %v3343, %v1983
        %v3408 = vmul.f32 %v3344, %v2081
        %v3409 = vmul.f32 %v3345, %v1790
        %v3410 = vmul.f32 %v3346, %v1888
        %v3411 = vmul.f32 %v3347, %v1986
        %v3412 = vmul.f32 %v3348, %v2084
        %v3413 = vmul.f32 %v3349, %v1792
        %v3414 = vmul.f32 %v3350, %v1890
        %v3415 = vmul.f32 %v3351, %v1988
        %v3416 = vmul.f32 %v3352, %v2086
        %v3417 = vmul.f32 %v3353, %v1795
        %v3418 = vmul.f32 %v3354, %v1893
        %v3419 = vmul.f32 %v3355, %v1991
        %v3420 = vmul.f32 %v3356, %v2089
        %v3421 = vmul.f32 %v3357, %v1797
        %v3422 = vmul.f32 %v3358, %v1895
        %v3423 = vmul.f32 %v3359, %v1993
        %v3424 = vmul.f32 %v3360, %v2091
        %v3425 = vmul.f32 %v3361, %v1800
        %v3426 = vmul.f32 %v3362, %v1898
        %v3427 = vmul.f32 %v3363, %v1996
        %v3428 = vmul.f32 %v3364, %v2094
        %v3429 = vmul.f32 %v3365, %v1802
        %v3430 = vmul.f32 %v3366, %v1900
        %v3431 = vmul.f32 %v3367, %v1998
        %v3432 = vmul.f32 %v3368, %v2096
        %v3433 = vmul.f32 %v3369, %v1805
        %v3434 = vmul.f32 %v3370, %v1903
        %v3435 = vmul.f32 %v3371, %v2001
        %v3436 = vmul.f32 %v3372, %v2099
        %v3437 = vmul.f32 %v3373, %v1807
        %v3438 = vmul.f32 %v3374, %v1905
        %v3439 = vmul.f32 %v3375, %v2003
        %v3440 = vmul.f32 %v3376, %v2101
        %v3441 = vmul.f32 %v3377, %v1810
        %v3442 = vmul.f32 %v3378, %v1908
        %v3443 = vmul.f32 %v3379, %v2006
        %v3444 = vmul.f32 %v3380, %v2104
        %v3445 = vmul.f32 %v3381, %v1812
        %v3446 = vmul.f32 %v3382, %v1910
        %v3447 = vmul.f32 %v3383, %v2008
        %v3448 = vmul.f32 %v3384, %v2106
        %v3449 = vmul.f32 %v3385, %v1815
        %v3450 = vmul.f32 %v3386, %v1913
        %v3451 = vmul.f32 %v3387, %v2011
        %v3452 = vmul.f32 %v3388, %v2109
        %v3453 = vmul.f32 %v3389, %v1817
        %v3454 = vmul.f32 %v3390, %v1915
        %v3455 = vmul.f32 %v3391, %v2013
        %v3456 = vmul.f32 %v3392, %v2111
        %v3457 = vpack.c.bf16 %v3397, %v3393
        %v3458 = vpack.c.bf16 %v3398, %v3394
        %v3459 = vpack.c.bf16 %v3399, %v3395
        %v3460 = vpack.c.bf16 %v3400, %v3396
        %v3461 = vpack.c.bf16 %v3405, %v3401
        %v3462 = vpack.c.bf16 %v3406, %v3402
        %v3463 = vpack.c.bf16 %v3407, %v3403
        %v3464 = vpack.c.bf16 %v3408, %v3404
        %v3465 = vpack.c.bf16 %v3413, %v3409
        %v3466 = vpack.c.bf16 %v3414, %v3410
        %v3467 = vpack.c.bf16 %v3415, %v3411
        %v3468 = vpack.c.bf16 %v3416, %v3412
        %v3469 = vpack.c.bf16 %v3421, %v3417
        %v3470 = vpack.c.bf16 %v3422, %v3418
        %v3471 = vpack.c.bf16 %v3423, %v3419
        %v3472 = vpack.c.bf16 %v3424, %v3420
        %v3473 = vpack.c.bf16 %v3429, %v3425
        %v3474 = vpack.c.bf16 %v3430, %v3426
        %v3475 = vpack.c.bf16 %v3431, %v3427
        %v3476 = vpack.c.bf16 %v3432, %v3428
        %v3477 = vpack.c.bf16 %v3437, %v3433
        %v3478 = vpack.c.bf16 %v3438, %v3434
        %v3479 = vpack.c.bf16 %v3439, %v3435
        %v3480 = vpack.c.bf16 %v3440, %v3436
        %v3481 = vpack.c.bf16 %v3445, %v3441
        %v3482 = vpack.c.bf16 %v3446, %v3442
        %v3483 = vpack.c.bf16 %v3447, %v3443
        %v3484 = vpack.c.bf16 %v3448, %v3444
        %v3485 = vpack.c.bf16 %v3453, %v3449
        %v3486 = vpack.c.bf16 %v3454, %v3450
        %v3487 = vpack.c.bf16 %v3455, %v3451
        %v3488 = vpack.c.bf16 %v3456, %v3452
        %v3489 = vld [vmem:[#allocation11] sm:$0xff]
        %v3490 = vld [vmem:[#allocation11 + $0x8] sm:$0xff]
        %v3491 = vld [vmem:[#allocation11 + $0x10] sm:$0xff]
        %v3492 = vld [vmem:[#allocation11 + $0x18] sm:$0xff]
        %v3493 = vld [vmem:[#allocation11 + $0x20] sm:$0xff]
        %v3494 = vld [vmem:[#allocation11 + $0x28] sm:$0xff]
        %v3495 = vld [vmem:[#allocation11 + $0x30] sm:$0xff]
        %v3496 = vld [vmem:[#allocation11 + $0x38] sm:$0xff]
        %v3497 = vld [vmem:[#allocation11 + $0x40] sm:$0xff]
        %v3498 = vld [vmem:[#allocation11 + $0x48] sm:$0xff]
        %v3499 = vld [vmem:[#allocation11 + $0x50] sm:$0xff]
        %v3500 = vld [vmem:[#allocation11 + $0x58] sm:$0xff]
        %v3501 = vld [vmem:[#allocation11 + $0x60] sm:$0xff]
        %v3502 = vld [vmem:[#allocation11 + $0x68] sm:$0xff]
        %v3503 = vld [vmem:[#allocation11 + $0x70] sm:$0xff]
        %v3504 = vld [vmem:[#allocation11 + $0x78] sm:$0xff]
        %v3505 = vld [vmem:[#allocation11 + $0x80] sm:$0xff]
        %v3506 = vld [vmem:[#allocation11 + $0x88] sm:$0xff]
        %v3507 = vld [vmem:[#allocation11 + $0x90] sm:$0xff]
        %v3508 = vld [vmem:[#allocation11 + $0x98] sm:$0xff]
        %v3509 = vld [vmem:[#allocation11 + $0xa0] sm:$0xff]
        %v3510 = vld [vmem:[#allocation11 + $0xa8] sm:$0xff]
        %v3511 = vld [vmem:[#allocation11 + $0xb0] sm:$0xff]
        %v3512 = vld [vmem:[#allocation11 + $0xb8] sm:$0xff]
        %v3513 = vld [vmem:[#allocation11 + $0xc0] sm:$0xff]
        %v3514 = vld [vmem:[#allocation11 + $0xc8] sm:$0xff]
        %v3515 = vld [vmem:[#allocation11 + $0xd0] sm:$0xff]
        %v3516 = vld [vmem:[#allocation11 + $0xd8] sm:$0xff]
        %v3517 = vld [vmem:[#allocation11 + $0xe0] sm:$0xff]
        %v3518 = vld [vmem:[#allocation11 + $0xe8] sm:$0xff]
        %v3519 = vld [vmem:[#allocation11 + $0xf0] sm:$0xff]
        %v3520 = vld [vmem:[#allocation11 + $0xf8] sm:$0xff]
        %v3521 = vld [vmem:[#allocation11 + $0x100] sm:$0xff]
        %v3522 = vld [vmem:[#allocation11 + $0x108] sm:$0xff]
        %v3523 = vld [vmem:[#allocation11 + $0x110] sm:$0xff]
        %v3524 = vld [vmem:[#allocation11 + $0x118] sm:$0xff]
        %v3525 = vld [vmem:[#allocation11 + $0x120] sm:$0xff]
        %v3526 = vld [vmem:[#allocation11 + $0x128] sm:$0xff]
        %v3527 = vld [vmem:[#allocation11 + $0x130] sm:$0xff]
        %v3528 = vld [vmem:[#allocation11 + $0x138] sm:$0xff]
        %v3529 = vld [vmem:[#allocation11 + $0x140] sm:$0xff]
        %v3530 = vld [vmem:[#allocation11 + $0x148] sm:$0xff]
        %v3531 = vld [vmem:[#allocation11 + $0x150] sm:$0xff]
        %v3532 = vld [vmem:[#allocation11 + $0x158] sm:$0xff]
        %v3533 = vld [vmem:[#allocation11 + $0x160] sm:$0xff]
        %v3534 = vld [vmem:[#allocation11 + $0x168] sm:$0xff]
        %v3535 = vld [vmem:[#allocation11 + $0x170] sm:$0xff]
        %v3536 = vld [vmem:[#allocation11 + $0x178] sm:$0xff]
        %v3537 = vld [vmem:[#allocation11 + $0x180] sm:$0xff]
        %v3538 = vld [vmem:[#allocation11 + $0x188] sm:$0xff]
        %v3539 = vld [vmem:[#allocation11 + $0x190] sm:$0xff]
        %v3540 = vld [vmem:[#allocation11 + $0x198] sm:$0xff]
        %v3541 = vld [vmem:[#allocation11 + $0x1a0] sm:$0xff]
        %v3542 = vld [vmem:[#allocation11 + $0x1a8] sm:$0xff]
        %v3543 = vld [vmem:[#allocation11 + $0x1b0] sm:$0xff]
        %v3544 = vld [vmem:[#allocation11 + $0x1b8] sm:$0xff]
        %v3545 = vld [vmem:[#allocation11 + $0x1c0] sm:$0xff]
        %v3546 = vld [vmem:[#allocation11 + $0x1c8] sm:$0xff]
        %v3547 = vld [vmem:[#allocation11 + $0x1d0] sm:$0xff]
        %v3548 = vld [vmem:[#allocation11 + $0x1d8] sm:$0xff]
        %v3549 = vld [vmem:[#allocation11 + $0x1e0] sm:$0xff]
        %v3550 = vld [vmem:[#allocation11 + $0x1e8] sm:$0xff]
        %v3551 = vld [vmem:[#allocation11 + $0x1f0] sm:$0xff]
        %v3552 = vld [vmem:[#allocation11 + $0x1f8] sm:$0xff]
        %v3553 = vld [vmem:[%s6] sm:$0x3]
        %v3555 = vperm.slane %v3553, 0
        %v3556 = vperm.slane %v3553, 1
        %v3623 = vunpack.c.l.b16 %v3489
        %v3624 = vunpack.c.h.b16 %v3489
        %v3625 = vunpack.c.l.b16 %v3490
        %v3626 = vunpack.c.h.b16 %v3490
        %v3627 = vunpack.c.l.b16 %v3491
        %v3628 = vunpack.c.h.b16 %v3491
        %v3629 = vunpack.c.l.b16 %v3492
        %v3630 = vunpack.c.h.b16 %v3492
        %v3631 = vunpack.c.l.b16 %v3493
        %v3632 = vunpack.c.h.b16 %v3493
        %v3633 = vunpack.c.l.b16 %v3494
        %v3634 = vunpack.c.h.b16 %v3494
        %v3635 = vunpack.c.l.b16 %v3495
        %v3636 = vunpack.c.h.b16 %v3495
        %v3637 = vunpack.c.l.b16 %v3496
        %v3638 = vunpack.c.h.b16 %v3496
        %v3639 = vunpack.c.l.b16 %v3497
        %v3640 = vunpack.c.h.b16 %v3497
        %v3641 = vunpack.c.l.b16 %v3498
        %v3642 = vunpack.c.h.b16 %v3498
        %v3643 = vunpack.c.l.b16 %v3499
        %v3644 = vunpack.c.h.b16 %v3499
        %v3645 = vunpack.c.l.b16 %v3500
        %v3646 = vunpack.c.h.b16 %v3500
        %v3647 = vunpack.c.l.b16 %v3501
        %v3648 = vunpack.c.h.b16 %v3501
        %v3649 = vunpack.c.l.b16 %v3502
        %v3650 = vunpack.c.h.b16 %v3502
        %v3651 = vunpack.c.l.b16 %v3503
        %v3652 = vunpack.c.h.b16 %v3503
        %v3653 = vunpack.c.l.b16 %v3504
        %v3654 = vunpack.c.h.b16 %v3504
        %v3655 = vunpack.c.l.b16 %v3505
        %v3656 = vunpack.c.h.b16 %v3505
        %v3657 = vunpack.c.l.b16 %v3506
        %v3658 = vunpack.c.h.b16 %v3506
        %v3659 = vunpack.c.l.b16 %v3507
        %v3660 = vunpack.c.h.b16 %v3507
        %v3661 = vunpack.c.l.b16 %v3508
        %v3662 = vunpack.c.h.b16 %v3508
        %v3663 = vunpack.c.l.b16 %v3509
        %v3664 = vunpack.c.h.b16 %v3509
        %v3665 = vunpack.c.l.b16 %v3510
        %v3666 = vunpack.c.h.b16 %v3510
        %v3667 = vunpack.c.l.b16 %v3511
        %v3668 = vunpack.c.h.b16 %v3511
        %v3669 = vunpack.c.l.b16 %v3512
        %v3670 = vunpack.c.h.b16 %v3512
        %v3671 = vunpack.c.l.b16 %v3513
        %v3672 = vunpack.c.h.b16 %v3513
        %v3673 = vunpack.c.l.b16 %v3514
        %v3674 = vunpack.c.h.b16 %v3514
        %v3675 = vunpack.c.l.b16 %v3515
        %v3676 = vunpack.c.h.b16 %v3515
        %v3677 = vunpack.c.l.b16 %v3516
        %v3678 = vunpack.c.h.b16 %v3516
        %v3679 = vunpack.c.l.b16 %v3517
        %v3680 = vunpack.c.h.b16 %v3517
        %v3681 = vunpack.c.l.b16 %v3518
        %v3682 = vunpack.c.h.b16 %v3518
        %v3683 = vunpack.c.l.b16 %v3519
        %v3684 = vunpack.c.h.b16 %v3519
        %v3685 = vunpack.c.l.b16 %v3520
        %v3686 = vunpack.c.h.b16 %v3520
        %v3687 = vunpack.c.l.b16 %v3521
        %v3688 = vunpack.c.h.b16 %v3521
        %v3689 = vunpack.c.l.b16 %v3522
        %v3690 = vunpack.c.h.b16 %v3522
        %v3691 = vunpack.c.l.b16 %v3523
        %v3692 = vunpack.c.h.b16 %v3523
        %v3693 = vunpack.c.l.b16 %v3524
        %v3694 = vunpack.c.h.b16 %v3524
        %v3695 = vunpack.c.l.b16 %v3525
        %v3696 = vunpack.c.h.b16 %v3525
        %v3697 = vunpack.c.l.b16 %v3526
        %v3698 = vunpack.c.h.b16 %v3526
        %v3699 = vunpack.c.l.b16 %v3527
        %v3700 = vunpack.c.h.b16 %v3527
        %v3701 = vunpack.c.l.b16 %v3528
        %v3702 = vunpack.c.h.b16 %v3528
        %v3703 = vunpack.c.l.b16 %v3529
        %v3704 = vunpack.c.h.b16 %v3529
        %v3705 = vunpack.c.l.b16 %v3530
        %v3706 = vunpack.c.h.b16 %v3530
        %v3707 = vunpack.c.l.b16 %v3531
        %v3708 = vunpack.c.h.b16 %v3531
        %v3709 = vunpack.c.l.b16 %v3532
        %v3710 = vunpack.c.h.b16 %v3532
        %v3711 = vunpack.c.l.b16 %v3533
        %v3712 = vunpack.c.h.b16 %v3533
        %v3713 = vunpack.c.l.b16 %v3534
        %v3714 = vunpack.c.h.b16 %v3534
        %v3715 = vunpack.c.l.b16 %v3535
        %v3716 = vunpack.c.h.b16 %v3535
        %v3717 = vunpack.c.l.b16 %v3536
        %v3718 = vunpack.c.h.b16 %v3536
        %v3719 = vunpack.c.l.b16 %v3537
        %v3720 = vunpack.c.h.b16 %v3537
        %v3721 = vunpack.c.l.b16 %v3538
        %v3722 = vunpack.c.h.b16 %v3538
        %v3723 = vunpack.c.l.b16 %v3539
        %v3724 = vunpack.c.h.b16 %v3539
        %v3725 = vunpack.c.l.b16 %v3540
        %v3726 = vunpack.c.h.b16 %v3540
        %v3727 = vunpack.c.l.b16 %v3541
        %v3728 = vunpack.c.h.b16 %v3541
        %v3729 = vunpack.c.l.b16 %v3542
        %v3730 = vunpack.c.h.b16 %v3542
        %v3731 = vunpack.c.l.b16 %v3543
        %v3732 = vunpack.c.h.b16 %v3543
        %v3733 = vunpack.c.l.b16 %v3544
        %v3734 = vunpack.c.h.b16 %v3544
        %v3735 = vunpack.c.l.b16 %v3545
        %v3736 = vunpack.c.h.b16 %v3545
        %v3737 = vunpack.c.l.b16 %v3546
        %v3738 = vunpack.c.h.b16 %v3546
        %v3739 = vunpack.c.l.b16 %v3547
        %v3740 = vunpack.c.h.b16 %v3547
        %v3741 = vunpack.c.l.b16 %v3548
        %v3742 = vunpack.c.h.b16 %v3548
        %v3743 = vunpack.c.l.b16 %v3549
        %v3744 = vunpack.c.h.b16 %v3549
        %v3745 = vunpack.c.l.b16 %v3550
        %v3746 = vunpack.c.h.b16 %v3550
        %v3747 = vunpack.c.l.b16 %v3551
        %v3748 = vunpack.c.h.b16 %v3551
        %v3749 = vunpack.c.l.b16 %v3552
        %v3750 = vunpack.c.h.b16 %v3552
        %v3751 = vpack.c.b16 %v3625, %v3623
        %v3752 = vpack.c.b16 %v3626, %v3624
        %v3753 = vpack.c.b16 %v3629, %v3627
        %v3754 = vpack.c.b16 %v3630, %v3628
        %v3755 = vpack.c.b16 %v3633, %v3631
        %v3756 = vpack.c.b16 %v3634, %v3632
        %v3757 = vpack.c.b16 %v3637, %v3635
        %v3758 = vpack.c.b16 %v3638, %v3636
        %v3759 = vpack.c.b16 %v3641, %v3639
        %v3760 = vpack.c.b16 %v3642, %v3640
        %v3761 = vpack.c.b16 %v3645, %v3643
        %v3762 = vpack.c.b16 %v3646, %v3644
        %v3763 = vpack.c.b16 %v3649, %v3647
        %v3764 = vpack.c.b16 %v3650, %v3648
        %v3765 = vpack.c.b16 %v3653, %v3651
        %v3766 = vpack.c.b16 %v3654, %v3652
        %v3767 = vpack.c.b16 %v3657, %v3655
        %v3768 = vpack.c.b16 %v3658, %v3656
        %v3769 = vpack.c.b16 %v3661, %v3659
        %v3770 = vpack.c.b16 %v3662, %v3660
        %v3771 = vpack.c.b16 %v3665, %v3663
        %v3772 = vpack.c.b16 %v3666, %v3664
        %v3773 = vpack.c.b16 %v3669, %v3667
        %v3774 = vpack.c.b16 %v3670, %v3668
        %v3775 = vpack.c.b16 %v3673, %v3671
        %v3776 = vpack.c.b16 %v3674, %v3672
        %v3777 = vpack.c.b16 %v3677, %v3675
        %v3778 = vpack.c.b16 %v3678, %v3676
        %v3779 = vpack.c.b16 %v3681, %v3679
        %v3780 = vpack.c.b16 %v3682, %v3680
        %v3781 = vpack.c.b16 %v3685, %v3683
        %v3782 = vpack.c.b16 %v3686, %v3684
        %v3783 = vpack.c.b16 %v3689, %v3687
        %v3784 = vpack.c.b16 %v3690, %v3688
        %v3785 = vpack.c.b16 %v3693, %v3691
        %v3786 = vpack.c.b16 %v3694, %v3692
        %v3787 = vpack.c.b16 %v3697, %v3695
        %v3788 = vpack.c.b16 %v3698, %v3696
        %v3789 = vpack.c.b16 %v3701, %v3699
        %v3790 = vpack.c.b16 %v3702, %v3700
        %v3791 = vpack.c.b16 %v3705, %v3703
        %v3792 = vpack.c.b16 %v3706, %v3704
        %v3793 = vpack.c.b16 %v3709, %v3707
        %v3794 = vpack.c.b16 %v3710, %v3708
        %v3795 = vpack.c.b16 %v3713, %v3711
        %v3796 = vpack.c.b16 %v3714, %v3712
        %v3797 = vpack.c.b16 %v3717, %v3715
        %v3798 = vpack.c.b16 %v3718, %v3716
        %v3799 = vpack.c.b16 %v3721, %v3719
        %v3800 = vpack.c.b16 %v3722, %v3720
        %v3801 = vpack.c.b16 %v3725, %v3723
        %v3802 = vpack.c.b16 %v3726, %v3724
        %v3803 = vpack.c.b16 %v3729, %v3727
        %v3804 = vpack.c.b16 %v3730, %v3728
        %v3805 = vpack.c.b16 %v3733, %v3731
        %v3806 = vpack.c.b16 %v3734, %v3732
        %v3807 = vpack.c.b16 %v3737, %v3735
        %v3808 = vpack.c.b16 %v3738, %v3736
        %v3809 = vpack.c.b16 %v3741, %v3739
        %v3810 = vpack.c.b16 %v3742, %v3740
        %v3811 = vpack.c.b16 %v3745, %v3743
        %v3812 = vpack.c.b16 %v3746, %v3744
        %v3813 = vpack.c.b16 %v3749, %v3747
        %v3814 = vpack.c.b16 %v3750, %v3748
        %3879 = vmatpush.bf16.msra.mxu0 %v3765
        %3880 = vmatpush.bf16.msra.mxu0 %v3763
        %3881 = vmatpush.bf16.msra.mxu0 %v3761
        %3882 = vmatpush.bf16.msra.mxu0 %v3759
        %3883 = vmatpush.bf16.msra.mxu0 %v3757
        %3884 = vmatpush.bf16.msra.mxu0 %v3755
        %3885 = vmatpush.bf16.msra.mxu0 %v3753
        %3886 = vmatpush.bf16.msra.mxu0 %v3751
        %3887 = vmatmul.bf16.gmra.mxu0 %v3457
        %v3888 = vpop.f32.mrf.mxu0
        %v3889 = vadd.f32 %v3555, %v3888
        %v3890 = vpop.f32.mrf.mxu0
        %v3891 = vadd.f32 %v3555, %v3890
        %3892 = vmatmul.bf16.gmra.mxu0 %v3461
        %v3893 = vpop.f32.mrf.mxu0
        %v3894 = vadd.f32 %v3555, %v3893
        %v3895 = vpop.f32.mrf.mxu0
        %v3896 = vadd.f32 %v3555, %v3895
        %3897 = vmatmul.bf16.gmra.mxu0 %v3465
        %v3898 = vpop.f32.mrf.mxu0
        %v3899 = vadd.f32 %v3555, %v3898
        %v3900 = vpop.f32.mrf.mxu0
        %v3901 = vadd.f32 %v3555, %v3900
        %3902 = vmatmul.bf16.gmra.mxu0 %v3469
        %v3903 = vpop.f32.mrf.mxu0
        %v3904 = vadd.f32 %v3555, %v3903
        %v3905 = vpop.f32.mrf.mxu0
        %v3906 = vadd.f32 %v3555, %v3905
        %3907 = vmatmul.bf16.gmra.mxu0 %v3473
        %v3908 = vpop.f32.mrf.mxu0
        %v3909 = vadd.f32 %v3555, %v3908
        %v3910 = vpop.f32.mrf.mxu0
        %v3911 = vadd.f32 %v3555, %v3910
        %3912 = vmatmul.bf16.gmra.mxu0 %v3477
        %v3913 = vpop.f32.mrf.mxu0
        %v3914 = vadd.f32 %v3555, %v3913
        %v3915 = vpop.f32.mrf.mxu0
        %v3916 = vadd.f32 %v3555, %v3915
        %3917 = vmatmul.bf16.gmra.mxu0 %v3481
        %v3918 = vpop.f32.mrf.mxu0
        %v3919 = vadd.f32 %v3555, %v3918
        %v3920 = vpop.f32.mrf.mxu0
        %v3921 = vadd.f32 %v3555, %v3920
        %3922 = vmatmul.bf16.gmra.mxu0 %v3485
        %v3923 = vpop.f32.mrf.mxu0
        %v3924 = vadd.f32 %v3555, %v3923
        %v3925 = vpop.f32.mrf.mxu0
        %v3926 = vadd.f32 %v3555, %v3925
        %3927 = vdwg.mxu0
        %3928 = vmatpush.bf16.msra.mxu0 %v3781
        %3929 = vmatpush.bf16.msra.mxu0 %v3779
        %3930 = vmatpush.bf16.msra.mxu0 %v3777
        %3931 = vmatpush.bf16.msra.mxu0 %v3775
        %3932 = vmatpush.bf16.msra.mxu0 %v3773
        %3933 = vmatpush.bf16.msra.mxu0 %v3771
        %3934 = vmatpush.bf16.msra.mxu0 %v3769
        %3935 = vmatpush.bf16.msra.mxu0 %v3767
        %3936 = vmatmul.bf16.gmra.mxu0 %v3458
        %v3937 = vpop.f32.mrf.mxu0
        %v3938 = vadd.f32 %v3889, %v3937
        %v3939 = vpop.f32.mrf.mxu0
        %v3940 = vadd.f32 %v3891, %v3939
        %3941 = vmatmul.bf16.gmra.mxu0 %v3462
        %v3942 = vpop.f32.mrf.mxu0
        %v3943 = vadd.f32 %v3894, %v3942
        %v3944 = vpop.f32.mrf.mxu0
        %v3945 = vadd.f32 %v3896, %v3944
        %3946 = vmatmul.bf16.gmra.mxu0 %v3466
        %v3947 = vpop.f32.mrf.mxu0
        %v3948 = vadd.f32 %v3899, %v3947
        %v3949 = vpop.f32.mrf.mxu0
        %v3950 = vadd.f32 %v3901, %v3949
        %3951 = vmatmul.bf16.gmra.mxu0 %v3470
        %v3952 = vpop.f32.mrf.mxu0
        %v3953 = vadd.f32 %v3904, %v3952
        %v3954 = vpop.f32.mrf.mxu0
        %v3955 = vadd.f32 %v3906, %v3954
        %3956 = vmatmul.bf16.gmra.mxu0 %v3474
        %v3957 = vpop.f32.mrf.mxu0
        %v3958 = vadd.f32 %v3909, %v3957
        %v3959 = vpop.f32.mrf.mxu0
        %v3960 = vadd.f32 %v3911, %v3959
        %3961 = vmatmul.bf16.gmra.mxu0 %v3478
        %v3962 = vpop.f32.mrf.mxu0
        %v3963 = vadd.f32 %v3914, %v3962
        %v3964 = vpop.f32.mrf.mxu0
        %v3965 = vadd.f32 %v3916, %v3964
        %3966 = vmatmul.bf16.gmra.mxu0 %v3482
        %v3967 = vpop.f32.mrf.mxu0
        %v3968 = vadd.f32 %v3919, %v3967
        %v3969 = vpop.f32.mrf.mxu0
        %v3970 = vadd.f32 %v3921, %v3969
        %3971 = vmatmul.bf16.gmra.mxu0 %v3486
        %v3972 = vpop.f32.mrf.mxu0
        %v3973 = vadd.f32 %v3924, %v3972
        %v3974 = vpop.f32.mrf.mxu0
        %v3975 = vadd.f32 %v3926, %v3974
        %3976 = vdwg.mxu0
        %3977 = vmatpush.bf16.msra.mxu0 %v3797
        %3978 = vmatpush.bf16.msra.mxu0 %v3795
        %3979 = vmatpush.bf16.msra.mxu0 %v3793
        %3980 = vmatpush.bf16.msra.mxu0 %v3791
        %3981 = vmatpush.bf16.msra.mxu0 %v3789
        %3982 = vmatpush.bf16.msra.mxu0 %v3787
        %3983 = vmatpush.bf16.msra.mxu0 %v3785
        %3984 = vmatpush.bf16.msra.mxu0 %v3783
        %3985 = vmatmul.bf16.gmra.mxu0 %v3459
        %v3986 = vpop.f32.mrf.mxu0
        %v3987 = vadd.f32 %v3938, %v3986
        %v3988 = vpop.f32.mrf.mxu0
        %v3989 = vadd.f32 %v3940, %v3988
        %3990 = vmatmul.bf16.gmra.mxu0 %v3463
        %v3991 = vpop.f32.mrf.mxu0
        %v3992 = vadd.f32 %v3943, %v3991
        %v3993 = vpop.f32.mrf.mxu0
        %v3994 = vadd.f32 %v3945, %v3993
        %3995 = vmatmul.bf16.gmra.mxu0 %v3467
        %v3996 = vpop.f32.mrf.mxu0
        %v3997 = vadd.f32 %v3948, %v3996
        %v3998 = vpop.f32.mrf.mxu0
        %v3999 = vadd.f32 %v3950, %v3998
        %4000 = vmatmul.bf16.gmra.mxu0 %v3471
        %v4001 = vpop.f32.mrf.mxu0
        %v4002 = vadd.f32 %v3953, %v4001
        %v4003 = vpop.f32.mrf.mxu0
        %v4004 = vadd.f32 %v3955, %v4003
        %4005 = vmatmul.bf16.gmra.mxu0 %v3475
        %v4006 = vpop.f32.mrf.mxu0
        %v4007 = vadd.f32 %v3958, %v4006
        %v4008 = vpop.f32.mrf.mxu0
        %v4009 = vadd.f32 %v3960, %v4008
        %4010 = vmatmul.bf16.gmra.mxu0 %v3479
        %v4011 = vpop.f32.mrf.mxu0
        %v4012 = vadd.f32 %v3963, %v4011
        %v4013 = vpop.f32.mrf.mxu0
        %v4014 = vadd.f32 %v3965, %v4013
        %4015 = vmatmul.bf16.gmra.mxu0 %v3483
        %v4016 = vpop.f32.mrf.mxu0
        %v4017 = vadd.f32 %v3968, %v4016
        %v4018 = vpop.f32.mrf.mxu0
        %v4019 = vadd.f32 %v3970, %v4018
        %4020 = vmatmul.bf16.gmra.mxu0 %v3487
        %v4021 = vpop.f32.mrf.mxu0
        %v4022 = vadd.f32 %v3973, %v4021
        %v4023 = vpop.f32.mrf.mxu0
        %v4024 = vadd.f32 %v3975, %v4023
        %4025 = vdwg.mxu0
        %4026 = vmatpush.bf16.msra.mxu0 %v3813
        %4027 = vmatpush.bf16.msra.mxu0 %v3811
        %4028 = vmatpush.bf16.msra.mxu0 %v3809
        %4029 = vmatpush.bf16.msra.mxu0 %v3807
        %4030 = vmatpush.bf16.msra.mxu0 %v3805
        %4031 = vmatpush.bf16.msra.mxu0 %v3803
        %4032 = vmatpush.bf16.msra.mxu0 %v3801
        %4033 = vmatpush.bf16.msra.mxu0 %v3799
        %4034 = vmatmul.bf16.gmra.mxu0 %v3460
        %v4035 = vpop.f32.mrf.mxu0
        %v4036 = vadd.f32 %v3987, %v4035
        %v4037 = vpop.f32.mrf.mxu0
        %v4038 = vadd.f32 %v3989, %v4037
        %4039 = vmatmul.bf16.gmra.mxu0 %v3464
        %v4040 = vpop.f32.mrf.mxu0
        %v4041 = vadd.f32 %v3992, %v4040
        %v4042 = vpop.f32.mrf.mxu0
        %v4043 = vadd.f32 %v3994, %v4042
        %4044 = vmatmul.bf16.gmra.mxu0 %v3468
        %v4045 = vpop.f32.mrf.mxu0
        %v4046 = vadd.f32 %v3997, %v4045
        %v4047 = vpop.f32.mrf.mxu0
        %v4048 = vadd.f32 %v3999, %v4047
        %4049 = vmatmul.bf16.gmra.mxu0 %v3472
        %v4050 = vpop.f32.mrf.mxu0
        %v4051 = vadd.f32 %v4002, %v4050
        %v4052 = vpop.f32.mrf.mxu0
        %v4053 = vadd.f32 %v4004, %v4052
        %4054 = vmatmul.bf16.gmra.mxu0 %v3476
        %v4055 = vpop.f32.mrf.mxu0
        %v4056 = vadd.f32 %v4007, %v4055
        %v4057 = vpop.f32.mrf.mxu0
        %v4058 = vadd.f32 %v4009, %v4057
        %4059 = vmatmul.bf16.gmra.mxu0 %v3480
        %v4060 = vpop.f32.mrf.mxu0
        %v4061 = vadd.f32 %v4012, %v4060
        %v4062 = vpop.f32.mrf.mxu0
        %v4063 = vadd.f32 %v4014, %v4062
        %4064 = vmatmul.bf16.gmra.mxu0 %v3484
        %v4065 = vpop.f32.mrf.mxu0
        %v4066 = vadd.f32 %v4017, %v4065
        %v4067 = vpop.f32.mrf.mxu0
        %v4068 = vadd.f32 %v4019, %v4067
        %4069 = vmatmul.bf16.gmra.mxu0 %v3488
        %v4070 = vpop.f32.mrf.mxu0
        %v4071 = vadd.f32 %v4022, %v4070
        %v4072 = vpop.f32.mrf.mxu0
        %v4073 = vadd.f32 %v4024, %v4072
        %4074 = vdwg.mxu0
        %4075 = vmatpush.bf16.msra.mxu0 %v3766
        %4076 = vmatpush.bf16.msra.mxu0 %v3764
        %4077 = vmatpush.bf16.msra.mxu0 %v3762
        %4078 = vmatpush.bf16.msra.mxu0 %v3760
        %4079 = vmatpush.bf16.msra.mxu0 %v3758
        %4080 = vmatpush.bf16.msra.mxu0 %v3756
        %4081 = vmatpush.bf16.msra.mxu0 %v3754
        %4082 = vmatpush.bf16.msra.mxu0 %v3752
        %4083 = vmatmul.bf16.gmra.mxu0 %v3457
        %v4084 = vpop.f32.mrf.mxu0
        %v4085 = vadd.f32 %v3556, %v4084
        %v4086 = vpop.f32.mrf.mxu0
        %v4087 = vadd.f32 %v3556, %v4086
        %4088 = vmatmul.bf16.gmra.mxu0 %v3461
        %v4089 = vpop.f32.mrf.mxu0
        %v4090 = vadd.f32 %v3556, %v4089
        %v4091 = vpop.f32.mrf.mxu0
        %v4092 = vadd.f32 %v3556, %v4091
        %4093 = vmatmul.bf16.gmra.mxu0 %v3465
        %v4094 = vpop.f32.mrf.mxu0
        %v4095 = vadd.f32 %v3556, %v4094
        %v4096 = vpop.f32.mrf.mxu0
        %v4097 = vadd.f32 %v3556, %v4096
        %4098 = vmatmul.bf16.gmra.mxu0 %v3469
        %v4099 = vpop.f32.mrf.mxu0
        %v4100 = vadd.f32 %v3556, %v4099
        %v4101 = vpop.f32.mrf.mxu0
        %v4102 = vadd.f32 %v3556, %v4101
        %4103 = vmatmul.bf16.gmra.mxu0 %v3473
        %v4104 = vpop.f32.mrf.mxu0
        %v4105 = vadd.f32 %v3556, %v4104
        %v4106 = vpop.f32.mrf.mxu0
        %v4107 = vadd.f32 %v3556, %v4106
        %4108 = vmatmul.bf16.gmra.mxu0 %v3477
        %v4109 = vpop.f32.mrf.mxu0
        %v4110 = vadd.f32 %v3556, %v4109
        %v4111 = vpop.f32.mrf.mxu0
        %v4112 = vadd.f32 %v3556, %v4111
        %4113 = vmatmul.bf16.gmra.mxu0 %v3481
        %v4114 = vpop.f32.mrf.mxu0
        %v4115 = vadd.f32 %v3556, %v4114
        %v4116 = vpop.f32.mrf.mxu0
        %v4117 = vadd.f32 %v3556, %v4116
        %4118 = vmatmul.bf16.gmra.mxu0 %v3485
        %v4119 = vpop.f32.mrf.mxu0
        %v4120 = vadd.f32 %v3556, %v4119
        %v4121 = vpop.f32.mrf.mxu0
        %v4122 = vadd.f32 %v3556, %v4121
        %4123 = vdwg.mxu0
        %4124 = vmatpush.bf16.msra.mxu0 %v3782
        %4125 = vmatpush.bf16.msra.mxu0 %v3780
        %4126 = vmatpush.bf16.msra.mxu0 %v3778
        %4127 = vmatpush.bf16.msra.mxu0 %v3776
        %4128 = vmatpush.bf16.msra.mxu0 %v3774
        %4129 = vmatpush.bf16.msra.mxu0 %v3772
        %4130 = vmatpush.bf16.msra.mxu0 %v3770
        %4131 = vmatpush.bf16.msra.mxu0 %v3768
        %4132 = vmatmul.bf16.gmra.mxu0 %v3458
        %v4133 = vpop.f32.mrf.mxu0
        %v4134 = vadd.f32 %v4085, %v4133
        %v4135 = vpop.f32.mrf.mxu0
        %v4136 = vadd.f32 %v4087, %v4135
        %4137 = vmatmul.bf16.gmra.mxu0 %v3462
        %v4138 = vpop.f32.mrf.mxu0
        %v4139 = vadd.f32 %v4090, %v4138
        %v4140 = vpop.f32.mrf.mxu0
        %v4141 = vadd.f32 %v4092, %v4140
        %4142 = vmatmul.bf16.gmra.mxu0 %v3466
        %v4143 = vpop.f32.mrf.mxu0
        %v4144 = vadd.f32 %v4095, %v4143
        %v4145 = vpop.f32.mrf.mxu0
        %v4146 = vadd.f32 %v4097, %v4145
        %4147 = vmatmul.bf16.gmra.mxu0 %v3470
        %v4148 = vpop.f32.mrf.mxu0
        %v4149 = vadd.f32 %v4100, %v4148
        %v4150 = vpop.f32.mrf.mxu0
        %v4151 = vadd.f32 %v4102, %v4150
        %4152 = vmatmul.bf16.gmra.mxu0 %v3474
        %v4153 = vpop.f32.mrf.mxu0
        %v4154 = vadd.f32 %v4105, %v4153
        %v4155 = vpop.f32.mrf.mxu0
        %v4156 = vadd.f32 %v4107, %v4155
        %4157 = vmatmul.bf16.gmra.mxu0 %v3478
        %v4158 = vpop.f32.mrf.mxu0
        %v4159 = vadd.f32 %v4110, %v4158
        %v4160 = vpop.f32.mrf.mxu0
        %v4161 = vadd.f32 %v4112, %v4160
        %4162 = vmatmul.bf16.gmra.mxu0 %v3482
        %v4163 = vpop.f32.mrf.mxu0
        %v4164 = vadd.f32 %v4115, %v4163
        %v4165 = vpop.f32.mrf.mxu0
        %v4166 = vadd.f32 %v4117, %v4165
        %4167 = vmatmul.bf16.gmra.mxu0 %v3486
        %v4168 = vpop.f32.mrf.mxu0
        %v4169 = vadd.f32 %v4120, %v4168
        %v4170 = vpop.f32.mrf.mxu0
        %v4171 = vadd.f32 %v4122, %v4170
        %4172 = vdwg.mxu0
        %4173 = vmatpush.bf16.msra.mxu0 %v3798
        %4174 = vmatpush.bf16.msra.mxu0 %v3796
        %4175 = vmatpush.bf16.msra.mxu0 %v3794
        %4176 = vmatpush.bf16.msra.mxu0 %v3792
        %4177 = vmatpush.bf16.msra.mxu0 %v3790
        %4178 = vmatpush.bf16.msra.mxu0 %v3788
        %4179 = vmatpush.bf16.msra.mxu0 %v3786
        %4180 = vmatpush.bf16.msra.mxu0 %v3784
        %4181 = vmatmul.bf16.gmra.mxu0 %v3459
        %v4182 = vpop.f32.mrf.mxu0
        %v4183 = vadd.f32 %v4134, %v4182
        %v4184 = vpop.f32.mrf.mxu0
        %v4185 = vadd.f32 %v4136, %v4184
        %4186 = vmatmul.bf16.gmra.mxu0 %v3463
        %v4187 = vpop.f32.mrf.mxu0
        %v4188 = vadd.f32 %v4139, %v4187
        %v4189 = vpop.f32.mrf.mxu0
        %v4190 = vadd.f32 %v4141, %v4189
        %4191 = vmatmul.bf16.gmra.mxu0 %v3467
        %v4192 = vpop.f32.mrf.mxu0
        %v4193 = vadd.f32 %v4144, %v4192
        %v4194 = vpop.f32.mrf.mxu0
        %v4195 = vadd.f32 %v4146, %v4194
        %4196 = vmatmul.bf16.gmra.mxu0 %v3471
        %v4197 = vpop.f32.mrf.mxu0
        %v4198 = vadd.f32 %v4149, %v4197
        %v4199 = vpop.f32.mrf.mxu0
        %v4200 = vadd.f32 %v4151, %v4199
        %4201 = vmatmul.bf16.gmra.mxu0 %v3475
        %v4202 = vpop.f32.mrf.mxu0
        %v4203 = vadd.f32 %v4154, %v4202
        %v4204 = vpop.f32.mrf.mxu0
        %v4205 = vadd.f32 %v4156, %v4204
        %4206 = vmatmul.bf16.gmra.mxu0 %v3479
        %v4207 = vpop.f32.mrf.mxu0
        %v4208 = vadd.f32 %v4159, %v4207
        %v4209 = vpop.f32.mrf.mxu0
        %v4210 = vadd.f32 %v4161, %v4209
        %4211 = vmatmul.bf16.gmra.mxu0 %v3483
        %v4212 = vpop.f32.mrf.mxu0
        %v4213 = vadd.f32 %v4164, %v4212
        %v4214 = vpop.f32.mrf.mxu0
        %v4215 = vadd.f32 %v4166, %v4214
        %4216 = vmatmul.bf16.gmra.mxu0 %v3487
        %v4217 = vpop.f32.mrf.mxu0
        %v4218 = vadd.f32 %v4169, %v4217
        %v4219 = vpop.f32.mrf.mxu0
        %v4220 = vadd.f32 %v4171, %v4219
        %4221 = vdwg.mxu0
        %4222 = vmatpush.bf16.msra.mxu0 %v3814
        %4223 = vmatpush.bf16.msra.mxu0 %v3812
        %4224 = vmatpush.bf16.msra.mxu0 %v3810
        %4225 = vmatpush.bf16.msra.mxu0 %v3808
        %4226 = vmatpush.bf16.msra.mxu0 %v3806
        %4227 = vmatpush.bf16.msra.mxu0 %v3804
        %4228 = vmatpush.bf16.msra.mxu0 %v3802
        %4229 = vmatpush.bf16.msra.mxu0 %v3800
        %4230 = vmatmul.bf16.gmra.mxu0 %v3460
        %v4231 = vpop.f32.mrf.mxu0
        %v4232 = vadd.f32 %v4183, %v4231
        %v4233 = vpop.f32.mrf.mxu0
        %v4234 = vadd.f32 %v4185, %v4233
        %4235 = vmatmul.bf16.gmra.mxu0 %v3464
        %v4236 = vpop.f32.mrf.mxu0
        %v4237 = vadd.f32 %v4188, %v4236
        %v4238 = vpop.f32.mrf.mxu0
        %v4239 = vadd.f32 %v4190, %v4238
        %4240 = vmatmul.bf16.gmra.mxu0 %v3468
        %v4241 = vpop.f32.mrf.mxu0
        %v4242 = vadd.f32 %v4193, %v4241
        %v4243 = vpop.f32.mrf.mxu0
        %v4244 = vadd.f32 %v4195, %v4243
        %4245 = vmatmul.bf16.gmra.mxu0 %v3472
        %v4246 = vpop.f32.mrf.mxu0
        %v4247 = vadd.f32 %v4198, %v4246
        %v4248 = vpop.f32.mrf.mxu0
        %v4249 = vadd.f32 %v4200, %v4248
        %4250 = vmatmul.bf16.gmra.mxu0 %v3476
        %v4251 = vpop.f32.mrf.mxu0
        %v4252 = vadd.f32 %v4203, %v4251
        %v4253 = vpop.f32.mrf.mxu0
        %v4254 = vadd.f32 %v4205, %v4253
        %4255 = vmatmul.bf16.gmra.mxu0 %v3480
        %v4256 = vpop.f32.mrf.mxu0
        %v4257 = vadd.f32 %v4208, %v4256
        %v4258 = vpop.f32.mrf.mxu0
        %v4259 = vadd.f32 %v4210, %v4258
        %4260 = vmatmul.bf16.gmra.mxu0 %v3484
        %v4261 = vpop.f32.mrf.mxu0
        %v4262 = vadd.f32 %v4213, %v4261
        %v4263 = vpop.f32.mrf.mxu0
        %v4264 = vadd.f32 %v4215, %v4263
        %4265 = vmatmul.bf16.gmra.mxu0 %v3488
        %v4266 = vpop.f32.mrf.mxu0
        %v4267 = vadd.f32 %v4218, %v4266
        %v4268 = vpop.f32.mrf.mxu0
        %v4269 = vadd.f32 %v4220, %v4268
        %4270 = vdwg.mxu0
        %v4271 = vpack.c.bf16 %v4232, %v4036
        %v4272 = vpack.c.bf16 %v4234, %v4038
        %v4273 = vpack.c.bf16 %v4237, %v4041
        %v4274 = vpack.c.bf16 %v4239, %v4043
        %v4275 = vpack.c.bf16 %v4242, %v4046
        %v4276 = vpack.c.bf16 %v4244, %v4048
        %v4277 = vpack.c.bf16 %v4247, %v4051
        %v4278 = vpack.c.bf16 %v4249, %v4053
        %v4279 = vpack.c.bf16 %v4252, %v4056
        %v4280 = vpack.c.bf16 %v4254, %v4058
        %v4281 = vpack.c.bf16 %v4257, %v4061
        %v4282 = vpack.c.bf16 %v4259, %v4063
        %v4283 = vpack.c.bf16 %v4262, %v4066
        %v4284 = vpack.c.bf16 %v4264, %v4068
        %v4285 = vpack.c.bf16 %v4267, %v4071
        %v4286 = vpack.c.bf16 %v4269, %v4073
        %4287 = vst [vmem:[%s435] sm:$0xff] %v4271
        %4288 = vst [vmem:[%s435 + $0x8] sm:$0xff] %v4272
        %4289 = vst [vmem:[%s435 + $0x10] sm:$0xff] %v4273
        %4290 = vst [vmem:[%s435 + $0x18] sm:$0xff] %v4274
        %4291 = vst [vmem:[%s435 + $0x20] sm:$0xff] %v4275
        %4292 = vst [vmem:[%s435 + $0x28] sm:$0xff] %v4276
        %4293 = vst [vmem:[%s435 + $0x30] sm:$0xff] %v4277
        %4294 = vst [vmem:[%s435 + $0x38] sm:$0xff] %v4278
        %4295 = vst [vmem:[%s435 + $0x40] sm:$0xff] %v4279
        %4296 = vst [vmem:[%s435 + $0x48] sm:$0xff] %v4280
        %4297 = vst [vmem:[%s435 + $0x50] sm:$0xff] %v4281
        %4298 = vst [vmem:[%s435 + $0x58] sm:$0xff] %v4282
        %4299 = vst [vmem:[%s435 + $0x60] sm:$0xff] %v4283
        %4300 = vst [vmem:[%s435 + $0x68] sm:$0xff] %v4284
        %4301 = vst [vmem:[%s435 + $0x70] sm:$0xff] %v4285
        %4302 = vst [vmem:[%s435 + $0x78] sm:$0xff] %v4286
        %s4303 = sand.u32 %s228, 1
        %s4304 = scalar_lea.sflag [#allocation4], %s4303
        %s4305 = sand.u32 %s228, 1
        %s4306 = smul.addr %s4305, 128
        %s4307 = scalar_lea.vmem [#allocation13], %s4306
        // Predicated region
        $region73: #{_gated_mlp_call.1} parent=47 // pred_check
          %p4308 = pneg %p238
        $region74: #{_gated_mlp_call.1} parent=47 // pred_check_branch
          %4310 = sbr.rel (%p4308) target = $region76
        $region75: #{_gated_mlp_call.1} parent=47 // pred_region
          %s4311 = smul.u32 16, %s31
          %4313 = vsyncadd %s4304, 0
          %s4314 = smul.addr %s4311, 2
          %s4315 = smul.addr %s4314, 4
          %s4316 = scalar_lea.hbm %s7, %s4315
          %s4317 = sshll.u32 %s4307, 4
          %s4318 = int_to_ptr.vmem [resolvable:$true] %s4317
          %s4319 = sshll.u32 %s4316, 4
          %s4320 = int_to_ptr.hbm [resolvable:$true] %s4319
          %4325 = dma.vmem_to_hbm [thread:$0]  %s4318, 2048, %s4320, %s4304, 128, 128, 8
        $region76: #{_gated_mlp_call.1} parent=47 // pred_fallthru
          _
      $region48: #{_gated_mlp_call.1} parent=5 // pred_fallthru
        _
      %p4326 = scmp.le.s32.totalorder 2, %s22
      // Predicated region
      $region77: #{_gated_mlp_call.1} parent=5 // pred_check
        %p4327 = pneg %p4326
      $region78: #{_gated_mlp_call.1} parent=5 // pred_check_branch
        %4329 = sbr.rel (%p4327) target = $region80
      $region79: #{_gated_mlp_call.1} parent=5 // pred_region
        %s4330 = ssub.s32 %s22, 2
        // Predicated region
        $region81: #{_gated_mlp_call.1} parent=79 // pred_check
          %p4331 = pneg %p244
        $region82: #{_gated_mlp_call.1} parent=79 // pred_check_branch
          %4333 = sbr.rel (%p4331) target = $region84
        $region83: #{_gated_mlp_call.1} parent=79 // pred_region
          %s4334 = sand.u32 %s229, 1
          %s4335 = scalar_lea.sflag [#allocation4], %s4334
          %s4336 = sand.u32 %s229, 1
          %s4337 = smul.addr %s4336, 128
          %s4338 = scalar_lea.vmem [#allocation13], %s4337
          %4340 = dma.done %s4335, 2048
        $region84: #{_gated_mlp_call.1} parent=79 // pred_fallthru
          _
      $region80: #{_gated_mlp_call.1} parent=5 // pred_fallthru
        _
    $region6: #{_gated_mlp_call.1} parent=1 // loop_footer
      %s26 = sadd.s32 1, %s22
    $region7: #{_gated_mlp_call.1} parent=1 // loop_footer_branch
      %21 = sbr.rel target = $region3
    $region8: #{_gated_mlp_call.1} parent=1 // loop_exit
      _
    %4341 = vsyncpa [#allocation3], 1
    %s4342 = scalar_lea.sflag [#allocation3], 1
    %4343 = vsyncpa %s4342, 1
    %4344 = vsyncpa [#allocation6], 1
    %4345 = vsyncpa [#allocation9], 1
    %4346 = vsyncpa [#allocation12], 1
    %4347 = vsyncpa [#allocation4], 1
    %s4348 = scalar_lea.sflag [#allocation4], 1
    %4349 = vsyncpa %s4348, 1

</llo_original>
